<compile_context>
chip_gen: v7x
topology: tpu7x:2x2x1
jax: 0.10.0
libtpu: 0.0.40
codegen_flags: <defaults>
</compile_context>

<pallas_src>
import math
import functools

import jax
import jax.numpy as jnp
from jax import lax
from jax.experimental import pallas as pl
from jax.experimental.pallas import tpu as pltpu

_MiB = 1024 * 1024


# ---------------------------------------------------------------------------
# In-kernel helpers
# ---------------------------------------------------------------------------
def _layernorm_f32(z, g, b, eps=1e-5):
    mu = jnp.mean(z, axis=-1, keepdims=True)
    var = jnp.mean((z - mu) ** 2, axis=-1, keepdims=True)
    return (z - mu) * lax.rsqrt(var + eps) * g + b


def _layernorm_padded(z, g, b, inv_d, eps=1e-5):
    """LayerNorm over a zero-padded feature dim.

    Padded columns of `z` are exactly zero and gamma/beta are zero-padded, so
    sum(z)/d_real and sum(z*z)/d_real give the statistics of the real width,
    and padded output columns stay exactly zero."""
    mu = jnp.sum(z, axis=-1, keepdims=True) * inv_d
    ms = jnp.sum(z * z, axis=-1, keepdims=True) * inv_d
    var = ms - mu * mu
    return (z - mu) * lax.rsqrt(var + eps) * g + b


# ---------------------------------------------------------------------------
# Kernel
# ---------------------------------------------------------------------------
def transformer_layer_kernel(
    x_ref, w1_ref, b1_ref, pe_ref,
    wqkv_ref, bqkv_ref, wo_ref, bo_ref,
    g1_ref, be1_ref, w2_ref, b2_ref, g2_ref, be2_ref,
    out_ref,
    q_scr, k_scr, v_scr, vpe_scr, attn_scr,
    *, d_real, q_block, kv_block,
):
    f32, bf16 = jnp.float32, jnp.bfloat16
    Bt, S, _ = x_ref.shape
    Dp = pe_ref.shape[-1]            # padded, lane-dense feature width
    Sk = k_scr.shape[1]              # seq padded up to a multiple of kv_block
    inv_d = f32(1.0 / d_real)

    # ---- linear_1 + tanh (bf16 MXU, f32 accumulate) + positional encoding --
    x = x_ref[...].reshape(Bt * S, x_ref.shape[-1])          # bf16 input slab
    v = jnp.tanh(jnp.dot(x, w1_ref[...], preferred_element_type=f32)
                 + b1_ref[...])
    v = v.reshape(Bt, S, Dp) + pe_ref[...][None]             # (Bt, S, Dp) f32
    vpe_scr[...] = v                                         # residual input

    # ---- fused Q/K/V projection: one (Dp, 3*Dp) matmul + one tanh ----------
    qkv = jnp.tanh(jnp.dot(v.reshape(Bt * S, Dp).astype(bf16), wqkv_ref[...],
                           preferred_element_type=f32) + bqkv_ref[...])
    scale = f32(1.0 / math.sqrt(d_real))      # fold 1/sqrt(dk) into q
    q_scr[...] = (qkv[:, :Dp] * scale).reshape(Bt, S, Dp).astype(bf16)
    k_scr[:, :S, :] = qkv[:, Dp:2 * Dp].reshape(Bt, S, Dp).astype(bf16)
    v_scr[:, :S, :] = qkv[:, 2 * Dp:].reshape(Bt, S, Dp).astype(bf16)
    if Sk > S:
        # Zero the ragged KV tail so masked columns can never inject NaN/Inf.
        k_scr[:, S:, :] = jnp.zeros((Bt, Sk - S, Dp), bf16)
        v_scr[:, S:, :] = jnp.zeros((Bt, Sk - S, Dp), bf16)

    # ---- causal attention: q-tiled, KV-blocked, fixed-max softmax ----------
    # q and k are tanh outputs, so |score| <= sqrt(d_real); exp() cannot
    # overflow, which lets us drop the online running-max/rescale entirely.
    # TODO(synk): restore the online max if the QKV activation ever changes.
    row_base = lax.broadcasted_iota(jnp.int32, (q_block, kv_block), 0)
    col_base = lax.broadcasted_iota(jnp.int32, (q_block, kv_block), 1)
    n_q = S // q_block
    for qi in range(n_q):                      # static; tile-aligned slices
        q_lo = qi * q_block
        q_tile = q_scr[:, q_lo:q_lo + q_block, :]            # (Bt, qb, Dp) bf16
        row_ids = row_base + q_lo
        # causal skip: KV blocks strictly in the future of this q tile
        n_kv_q = (q_lo + q_block - 1) // kv_block + 1

        def kv_body(j, carry, q_tile=q_tile, row_ids=row_ids):
            l_i, acc = carry
            start = pl.multiple_of(j * kv_block, kv_block)
            k_blk = k_scr[:, pl.ds(start, kv_block), :]      # (Bt, kvb, Dp)
            v_blk = v_scr[:, pl.ds(start, kv_block), :]
            # contract feature dims directly -> no K transpose
            s_blk = lax.dot_general(q_tile, k_blk,
                                    (((2,), (2,)), ((0,), (0,))),
                                    preferred_element_type=f32)
            keep = row_ids >= (col_base + start)             # (qb, kvb) history mask
            p = jnp.where(keep[None], jnp.exp(s_blk), f32(0.0))
            l_i = l_i + jnp.sum(p, axis=-1, keepdims=True)
            acc = acc + lax.dot_general(p.astype(bf16), v_blk,
                                        (((2,), (1,)), ((0,), (0,))),
                                        preferred_element_type=f32)
            return l_i, acc

        l_i, acc = lax.fori_loop(
            0, n_kv_q, kv_body,
            (jnp.zeros((Bt, q_block, 1), f32),
             jnp.zeros((Bt, q_block, Dp), f32)),
            unroll=(n_kv_q <= 4))
        # deferred normalization: one EUP reciprocal per q tile
        attn_scr[:, q_lo:q_lo + q_block, :] = (
            acc * pl.reciprocal(l_i, approx=True))

    # ---- attention output projection + tanh --------------------------------
    y = jnp.tanh(jnp.dot(attn_scr[...].reshape(Bt * S, Dp).astype(bf16),
                         wo_ref[...], preferred_element_type=f32) + bo_ref[...])

    # ---- residual + LN1, linear_2 + tanh, residual + LN2 (f32) -------------
    h = _layernorm_padded(y + vpe_scr[...].reshape(Bt * S, Dp),
                          g1_ref[...], be1_ref[...], inv_d)
    h2 = jnp.tanh(jnp.dot(h.astype(bf16), w2_ref[...],
                          preferred_element_type=f32) + b2_ref[...])
    out = _layernorm_padded(h2 + h, g2_ref[...], be2_ref[...], inv_d)
    out_ref[...] = out.reshape(Bt, S, Dp).astype(out_ref.dtype)


# ---------------------------------------------------------------------------
# Wrapper: padding, block selection, pallas_call
# ---------------------------------------------------------------------------
def _round_up(x, m):
    return ((x + m - 1) // m) * m


def _vmem_capacity_bytes():
    try:
        cap = getattr(pltpu.get_tpu_info(), "vmem_capacity_bytes", None)
        if cap:
            return int(cap)
    except Exception:
        pass
    return 64 * _MiB        # v7x per-TensorCore capacity: safe lower bound


def _estimate_vmem_bytes(bb, S, Sk, Din, Dp, q_block, kv_block, weight_bytes):
    # double-buffered bf16 input block + f32 output block
    io = 2 * (bb * S * Din * 2) + 2 * (bb * S * Dp * 4)
    # persistent scratch: q/k/v (bf16) + v_pe/attn (f32)
    scr = (bb * S * Dp + 2 * bb * Sk * Dp) * 2 + 2 * (bb * S * Dp * 4)
    # transient f32 activations (v, qkv, y/h/h2, score tile, acc)
    act = 7 * bb * S * Dp * 4 + bb * q_block * (2 * kv_block + Dp) * 4
    return io + scr + act + 2 * weight_bytes


def _pick_block_b(B, budget, est_one):
    divisors = [d for d in range(1, B + 1) if B % d == 0]
    fits = [d for d in divisors if est_one(d) <= budget]
    if not fits:
        # TODO(synk): shrink kv_block/q_block instead when even block_b=1 overflows.
        return 1
    # Prefer an even grid length so both v7x TensorCores stay busy.
    even = [d for d in fits if (B // d) % 2 == 0]
    return max(even) if even else max(fits)


def _const_spec(shape, use_buffered):
    nd = len(shape)
    index_map = lambda b, _nd=nd: (0,) * _nd
    if use_buffered:
        buffered = getattr(pl, "Buffered", None)
        if buffered is not None:
            # grid-invariant operand -> single buffer (no redundant double-buffering)
            return pl.BlockSpec(shape, index_map, pipeline_mode=buffered(1))
    return pl.BlockSpec(shape, index_map)


def _pack_params(params, d_pad):
    """Kernel-ready params: zero-padded to lane-dense width d_pad, bf16 weight
    matrices, fused QKV weight/bias.  gamma/beta are zero-padded so padded
    feature columns stay exactly zero through both LayerNorms."""
    bf16 = jnp.bfloat16

    def pad_last(a):
        return jnp.pad(a, [(0, 0)] * (a.ndim - 1) + [(0, d_pad - a.shape[-1])])

    def pad_mat(w):
        return jnp.pad(w, [(0, d_pad - w.shape[0]), (0, d_pad - w.shape[1])])

    wqkv = jnp.concatenate([pad_mat(params["wq"]), pad_mat(params["wk"]),
                            pad_mat(params["wv"])], axis=1).astype(bf16)
    bqkv = jnp.concatenate([pad_last(params["bq"]), pad_last(params["bk"]),
                            pad_last(params["bv"])], axis=1)
    return [
        pad_last(params["w1"]).astype(bf16), pad_last(params["b1"]),
        pad_last(params["pe"]),
        wqkv, bqkv,
        pad_mat(params["wo"]).astype(bf16), pad_last(params["bo"]),
        pad_last(params["g1"]), pad_last(params["be1"]),
        pad_mat(params["w2"]).astype(bf16), pad_last(params["b2"]),
        pad_last(params["g2"]), pad_last(params["be2"]),
    ]


@functools.partial(jax.jit,
                   static_argnames=("d_real", "block_b", "q_block", "kv_block",
                                    "vmem_limit", "use_buffered"))
def _forward(x, ordered, *, d_real, block_b, q_block, kv_block, vmem_limit,
             use_buffered):
    B, S, Din = x.shape
    Dp = ordered[0].shape[1]                       # padded feature width
    Sk = pl.cdiv(S, kv_block) * kv_block

    x = x.astype(jnp.bfloat16)                     # bf16 input stream (halves DMA)

    in_specs = [pl.BlockSpec((block_b, S, Din), lambda b: (b, 0, 0))]
    in_specs += [_const_spec(p.shape, use_buffered) for p in ordered]

    kernel = functools.partial(transformer_layer_kernel, d_real=d_real,
                               q_block=q_block, kv_block=kv_block)

    out = pl.pallas_call(
        kernel,
        out_shape=jax.ShapeDtypeStruct((B, S, Dp), jnp.float32),
        grid_spec=pltpu.PrefetchScalarGridSpec(
            num_scalar_prefetch=0,
            grid=(B // block_b,),
            in_specs=in_specs,
            out_specs=pl.BlockSpec((block_b, S, Dp), lambda b: (b, 0, 0)),
            scratch_shapes=[
                pltpu.VMEM((block_b, S, Dp), jnp.bfloat16),    # q (scaled)
                pltpu.VMEM((block_b, Sk, Dp), jnp.bfloat16),   # k
                pltpu.VMEM((block_b, Sk, Dp), jnp.bfloat16),   # v
                pltpu.VMEM((block_b, S, Dp), jnp.float32),     # v + pe (residual)
                pltpu.VMEM((block_b, S, Dp), jnp.float32),     # attention output
            ]),
        compiler_params=pltpu.CompilerParams(
            dimension_semantics=("parallel",),
            vmem_limit_bytes=int(vmem_limit)),
    )(x, *ordered)
    return out[..., :d_real]


def transformer_layer(x, params, block_b=None, q_block=None, kv_block=None):
    B, S, Din = x.shape
    D = params["w1"].shape[1]
    Dp = _round_up(D, 128)                         # lane-dense feature width
    if kv_block is None:
        kv_block = min(_round_up(S, 8), 256)
    if q_block is None:
        # TODO(synk): ragged q tiling; for now fall back to a single q tile.
        q_block = 256 if (S % 256 == 0) else S
    Sk = pl.cdiv(S, kv_block) * kv_block

    ordered = _pack_params(params, Dp)
    weight_bytes = sum(int(a.size) * a.dtype.itemsize for a in ordered)

    budget = (_vmem_capacity_bytes() * 3) // 4     # per-generation VMEM budget
    if block_b is None:
        block_b = _pick_block_b(
            B, budget,
            lambda bb: _estimate_vmem_bytes(bb, S, Sk, Din, Dp, q_block,
                                            kv_block, weight_bytes))
    assert B % block_b == 0

    kwargs = dict(d_real=D, block_b=block_b, q_block=q_block,
                  kv_block=kv_block, vmem_limit=budget)
    try:
        return _forward(x, tuple(ordered), use_buffered=True, **kwargs)
    except Exception:
        # pipeline_mode=Buffered(1) unsupported on this jax version ->
        # fall back to default (double) buffering for the weight operands.
        return _forward(x, tuple(ordered), use_buffered=False, **kwargs)


# ---------------------------------------------------------------------------
# References
# ---------------------------------------------------------------------------
def make_positional_encoding(seq_len, d_model):
    position = jnp.arange(seq_len, dtype=jnp.float32)[:, None]
    div_term = jnp.exp(jnp.arange(0, d_model, 2, dtype=jnp.float32)
                       * (-math.log(10000.0) / d_model))
    pe = jnp.zeros((seq_len, d_model), dtype=jnp.float32)
    pe = pe.at[:, 0::2].set(jnp.sin(position * div_term))
    pe = pe.at[:, 1::2].set(jnp.cos(position * div_term))
    return pe


def reference_matched(x, params):
    """Pure-JAX reference with the same bf16-MXU / f32-accumulate numerics as
    the kernel (tight correctness check)."""
    f32, bf16 = jnp.float32, jnp.bfloat16
    B, S, Din = x.shape
    D = params["w1"].shape[1]
    w1 = params["w1"].astype(bf16)
    wqkv = jnp.concatenate([params["wq"], params["wk"], params["wv"]], 1).astype(bf16)
    bqkv = jnp.concatenate([params["bq"], params["bk"], params["bv"]], 1)
    wo = params["wo"].astype(bf16)
    w2 = params["w2"].astype(bf16)

    x2 = x.reshape(B * S, Din)
    v = jnp.tanh(jnp.dot(x2.astype(bf16), w1, preferred_element_type=f32)
                 + params["b1"])
    v = (v.reshape(B, S, D) + params["pe"][None]).reshape(B * S, D)
    qkv = jnp.tanh(jnp.dot(v.astype(bf16), wqkv, preferred_element_type=f32) + bqkv)
    scale = 1.0 / math.sqrt(D)
    q = (qkv[:, :D] * scale).reshape(B, S, D).astype(bf16)
    k = qkv[:, D:2 * D].reshape(B, S, D).astype(bf16)
    vv = qkv[:, 2 * D:].reshape(B, S, D).astype(bf16)
    s = lax.dot_general(q, k, (((2,), (2,)), ((0,), (0,))),
                        preferred_element_type=f32)
    mask = jnp.tril(jnp.ones((S, S), bool))
    s = jnp.where(mask[None], s, jnp.float32(-1e9))
    m = jnp.max(s, axis=-1, keepdims=True)
    p = jnp.exp(s - m)
    l = jnp.sum(p, axis=-1, keepdims=True)
    acc = lax.dot_general(p.astype(bf16), vv, (((2,), (1,)), ((0,), (0,))),
                          preferred_element_type=f32)
    y = (acc / l).reshape(B * S, D)
    y = jnp.tanh(jnp.dot(y.astype(bf16), wo, preferred_element_type=f32)
                 + params["bo"])
    h = _layernorm_f32(y + v, params["g1"], params["be1"])
    h2 = jnp.tanh(jnp.dot(h.astype(bf16), w2, preferred_element_type=f32)
                  + params["b2"])
    out = _layernorm_f32(h2 + h, params["g2"], params["be2"])
    return out.reshape(B, S, D)


def reference_f32(x, params):
    """Pure-f32 mirror of the PyTorch forward (eval / dropout=0)."""
    def layernorm(z, g, b):
        mu = jnp.mean(z, axis=-1, keepdims=True)
        var = jnp.mean((z - mu) ** 2, axis=-1, keepdims=True)
        return (z - mu) / jnp.sqrt(var + 1e-5) * g + b

    v = jnp.tanh(x @ params["w1"] + params["b1"])
    v = v + params["pe"][None]
    q = jnp.tanh(v @ params["wq"] + params["bq"])
    k = jnp.tanh(v @ params["wk"] + params["bk"])
    vv = jnp.tanh(v @ params["wv"] + params["bv"])
    D = q.shape[-1]
    S = q.shape[-2]
    scores = jnp.einsum("bqd,bkd->bqk", q, k) / math.sqrt(D)
    mask = jnp.tril(jnp.ones((S, S)))[None]
    scores = jnp.where(mask == 0, -1e9, scores)
    attn = jax.nn.softmax(scores, axis=-1)
    y = attn @ vv
    y = jnp.tanh(y @ params["wo"] + params["bo"])
    h = layernorm(y + v, params["g1"], params["be1"])
    h2 = jnp.tanh(h @ params["w2"] + params["b2"])
    return layernorm(h2 + h, params["g2"], params["be2"])


def init_params(key, in_features, out_features, seq_len):
    keys = jax.random.split(key, 12)

    def lin(kw, kb, fan_in, fan_out):
        bound = 1.0 / math.sqrt(fan_in)
        # weights stored already transposed to (in, out) so kernel does x @ W
        w = jax.random.uniform(kw, (fan_in, fan_out), jnp.float32, -bound, bound)
        b = jax.random.uniform(kb, (1, fan_out), jnp.float32, -bound, bound)
        return w, b

    w1, b1 = lin(keys[0], keys[1], in_features, out_features)
    wq, bq = lin(keys[2], keys[3], out_features, out_features)
    wk, bk = lin(keys[4], keys[5], out_features, out_features)
    wv, bv = lin(keys[6], keys[7], out_features, out_features)
    wo, bo = lin(keys[8], keys[9], out_features, out_features)
    w2, b2 = lin(keys[10], keys[11], out_features, out_features)

    return {
        "w1": w1, "b1": b1,
        "pe": make_positional_encoding(seq_len, out_features),
        "wq": wq, "bq": bq, "wk": wk, "bk": bk, "wv": wv, "bv": bv,
        "wo": wo, "bo": bo,
        "g1": jnp.ones((1, out_features), jnp.float32),
        "be1": jnp.zeros((1, out_features), jnp.float32),
        "w2": w2, "b2": b2,
        "g2": jnp.ones((1, out_features), jnp.float32),
        "be2": jnp.zeros((1, out_features), jnp.float32),
    }


if __name__ == "__main__":
    B, S, Din, Dout = 2, 8, 16, 32
    key = jax.random.PRNGKey(0)
    kx, kp = jax.random.split(key)
    x = jax.random.normal(kx, (B, S, Din), jnp.float32)
    params = init_params(kp, Din, Dout, S)

    out = jax.block_until_ready(transformer_layer(x, params))
    assert out.shape == (B, S, Dout)

    # Tight check vs. a numerics-matched (bf16 MXU / f32 accumulate) reference.
    ref_b = reference_matched(x, params)
    assert jnp.allclose(out, ref_b, atol=1e-2, rtol=1e-2), (
        float(jnp.max(jnp.abs(out - ref_b))))

    # Loose sanity check vs. the pure-f32 mirror of the PyTorch module
    # (bf16 MXU inputs shift results by ~1e-2, as expected).
    ref_f = reference_f32(x, params)
    assert jnp.allclose(out, ref_f, atol=5e-2, rtol=5e-2), (
        float(jnp.max(jnp.abs(out - ref_f))))

    print("KERNEL_OK")
</pallas_src>

<mosaic_0001>
module attributes {stable_mosaic.version = 11 : i64} {
  func.func @transformer_layer_kernel(%arg0: i32, %arg1: memref<1x8x16xbf16, #tpu.memory_space<vmem>>, %arg2: memref<16x128xbf16, #tpu.memory_space<vmem>>, %arg3: memref<1x128xf32, #tpu.memory_space<vmem>>, %arg4: memref<8x128xf32, #tpu.memory_space<vmem>>, %arg5: memref<128x384xbf16, #tpu.memory_space<vmem>>, %arg6: memref<1x384xf32, #tpu.memory_space<vmem>>, %arg7: memref<128x128xbf16, #tpu.memory_space<vmem>>, %arg8: memref<1x128xf32, #tpu.memory_space<vmem>>, %arg9: memref<1x128xf32, #tpu.memory_space<vmem>>, %arg10: memref<1x128xf32, #tpu.memory_space<vmem>>, %arg11: memref<128x128xbf16, #tpu.memory_space<vmem>>, %arg12: memref<1x128xf32, #tpu.memory_space<vmem>>, %arg13: memref<1x128xf32, #tpu.memory_space<vmem>>, %arg14: memref<1x128xf32, #tpu.memory_space<vmem>>, %arg15: memref<1x8x128xf32, #tpu.memory_space<vmem>>, %arg16: memref<1x8x128xbf16, #tpu.memory_space<vmem>>, %arg17: memref<1x8x128xbf16, #tpu.memory_space<vmem>>, %arg18: memref<1x8x128xbf16, #tpu.memory_space<vmem>>, %arg19: memref<1x8x128xf32, #tpu.memory_space<vmem>>, %arg20: memref<1x8x128xf32, #tpu.memory_space<vmem>>) attributes {dimension_semantics = [#tpu.dimension_semantics<parallel>], iteration_bounds = array<i64: 2>, scalar_prefetch = 0 : i64, scratch_operands = 5 : i64, tpu.core_type = #tpu.core_type<tc>, window_params = [{transform_indices = @transform_0, window_bounds = array<i64: 1, 8, 16>}, {pipeline_mode = #tpu.pipeline_mode<synchronous>, transform_indices = @transform_1, window_bounds = array<i64: 16, 128>}, {pipeline_mode = #tpu.pipeline_mode<synchronous>, transform_indices = @transform_2, window_bounds = array<i64: 1, 128>}, {pipeline_mode = #tpu.pipeline_mode<synchronous>, transform_indices = @transform_3, window_bounds = array<i64: 8, 128>}, {pipeline_mode = #tpu.pipeline_mode<synchronous>, transform_indices = @transform_4, window_bounds = array<i64: 128, 384>}, {pipeline_mode = #tpu.pipeline_mode<synchronous>, transform_indices = @transform_5, window_bounds = array<i64: 1, 384>}, {pipeline_mode = #tpu.pipeline_mode<synchronous>, transform_indices = @transform_6, window_bounds = array<i64: 128, 128>}, {pipeline_mode = #tpu.pipeline_mode<synchronous>, transform_indices = @transform_7, window_bounds = array<i64: 1, 128>}, {pipeline_mode = #tpu.pipeline_mode<synchronous>, transform_indices = @transform_8, window_bounds = array<i64: 1, 128>}, {pipeline_mode = #tpu.pipeline_mode<synchronous>, transform_indices = @transform_9, window_bounds = array<i64: 1, 128>}, {pipeline_mode = #tpu.pipeline_mode<synchronous>, transform_indices = @transform_10, window_bounds = array<i64: 128, 128>}, {pipeline_mode = #tpu.pipeline_mode<synchronous>, transform_indices = @transform_11, window_bounds = array<i64: 1, 128>}, {pipeline_mode = #tpu.pipeline_mode<synchronous>, transform_indices = @transform_12, window_bounds = array<i64: 1, 128>}, {pipeline_mode = #tpu.pipeline_mode<synchronous>, transform_indices = @transform_13, window_bounds = array<i64: 1, 128>}, {transform_indices = @transform_14, window_bounds = array<i64: 1, 8, 128>}]} {
    %c0 = arith.constant 0 : index
    %c0_0 = arith.constant 0 : index
    %c0_1 = arith.constant 0 : index
    %0 = vector.load %arg1[%c0, %c0_0, %c0_1] : memref<1x8x16xbf16, #tpu.memory_space<vmem>>, vector<1x8x16xbf16>
    %1 = vector.shape_cast %0 : vector<1x8x16xbf16> to vector<8x16xbf16>
    %c0_2 = arith.constant 0 : index
    %c0_3 = arith.constant 0 : index
    %2 = vector.load %arg2[%c0_2, %c0_3] : memref<16x128xbf16, #tpu.memory_space<vmem>>, vector<16x128xbf16>
    %cst = arith.constant dense<0.000000e+00> : vector<8x128xf32>
    %3 = tpu.matmul %1, %2, %cst {dimension_numbers = #tpu.dot_dimension_numbers<[1], [0], [0], [1], [0, 0, 1, 1], [], []>} : vector<8x16xbf16>, vector<16x128xbf16>, vector<8x128xf32> -> vector<8x128xf32>
    %c0_4 = arith.constant 0 : index
    %c0_5 = arith.constant 0 : index
    %4 = vector.load %arg3[%c0_4, %c0_5] : memref<1x128xf32, #tpu.memory_space<vmem>>, vector<1x128xf32>
    %5 = vector.broadcast %4 : vector<1x128xf32> to vector<8x128xf32>
    %6 = arith.addf %3, %5 : vector<8x128xf32>
    %7 = math.tanh %6 : vector<8x128xf32>
    %8 = vector.shape_cast %7 : vector<8x128xf32> to vector<1x8x128xf32>
    %c0_6 = arith.constant 0 : index
    %c0_7 = arith.constant 0 : index
    %9 = vector.load %arg4[%c0_6, %c0_7] : memref<8x128xf32, #tpu.memory_space<vmem>>, vector<8x128xf32>
    %10 = vector.shape_cast %9 : vector<8x128xf32> to vector<1x8x128xf32>
    %11 = arith.addf %8, %10 : vector<1x8x128xf32>
    %c0_8 = arith.constant 0 : index
    %c0_9 = arith.constant 0 : index
    %c0_10 = arith.constant 0 : index
    %12 = vector.load %arg19[%c0_8, %c0_9, %c0_10] : memref<1x8x128xf32, #tpu.memory_space<vmem>>, vector<1x8x128xf32>
    tpu.vector_store %arg19[%c0_8, %c0_9, %c0_10], %11 {strides = array<i32>} : memref<1x8x128xf32, #tpu.memory_space<vmem>>, vector<1x8x128xf32>,
    %13 = vector.shape_cast %11 : vector<1x8x128xf32> to vector<8x128xf32>
    %14 = arith.truncf %13 : vector<8x128xf32> to vector<8x128xbf16>
    %c0_11 = arith.constant 0 : index
    %c0_12 = arith.constant 0 : index
    %15 = vector.load %arg5[%c0_11, %c0_12] : memref<128x384xbf16, #tpu.memory_space<vmem>>, vector<128x384xbf16>
    %cst_13 = arith.constant dense<0.000000e+00> : vector<8x384xf32>
    %16 = tpu.matmul %14, %15, %cst_13 {dimension_numbers = #tpu.dot_dimension_numbers<[1], [0], [0], [1], [0, 0, 1, 1], [], []>} : vector<8x128xbf16>, vector<128x384xbf16>, vector<8x384xf32> -> vector<8x384xf32>
    %c0_14 = arith.constant 0 : index
    %c0_15 = arith.constant 0 : index
    %17 = vector.load %arg6[%c0_14, %c0_15] : memref<1x384xf32, #tpu.memory_space<vmem>>, vector<1x384xf32>
    %18 = vector.broadcast %17 : vector<1x384xf32> to vector<8x384xf32>
    %19 = arith.addf %16, %18 : vector<8x384xf32>
    %20 = math.tanh %19 : vector<8x384xf32>
    %21 = vector.extract_strided_slice %20 {offsets = [0, 0], sizes = [8, 128], strides = [1, 1]} : vector<8x384xf32> to vector<8x128xf32>
    %cst_16 = arith.constant 0.176776692 : f32
    %22 = vector.broadcast %cst_16 : f32 to vector<8x128xf32>
    %23 = arith.mulf %21, %22 : vector<8x128xf32>
    %24 = vector.shape_cast %23 : vector<8x128xf32> to vector<1x8x128xf32>
    %25 = arith.truncf %24 : vector<1x8x128xf32> to vector<1x8x128xbf16>
    %c0_17 = arith.constant 0 : index
    %c0_18 = arith.constant 0 : index
    %c0_19 = arith.constant 0 : index
    %26 = vector.load %arg16[%c0_17, %c0_18, %c0_19] : memref<1x8x128xbf16, #tpu.memory_space<vmem>>, vector<1x8x128xbf16>
    tpu.vector_store %arg16[%c0_17, %c0_18, %c0_19], %25 {strides = array<i32>} : memref<1x8x128xbf16, #tpu.memory_space<vmem>>, vector<1x8x128xbf16>,
    %27 = vector.extract_strided_slice %20 {offsets = [0, 128], sizes = [8, 128], strides = [1, 1]} : vector<8x384xf32> to vector<8x128xf32>
    %28 = vector.shape_cast %27 : vector<8x128xf32> to vector<1x8x128xf32>
    %29 = arith.truncf %28 : vector<1x8x128xf32> to vector<1x8x128xbf16>
    %c0_20 = arith.constant 0 : index
    %c0_21 = arith.constant 0 : index
    %c0_22 = arith.constant 0 : index
    %30 = vector.load %arg17[%c0_20, %c0_21, %c0_22] : memref<1x8x128xbf16, #tpu.memory_space<vmem>>, vector<1x8x128xbf16>
    tpu.vector_store %arg17[%c0_20, %c0_21, %c0_22], %29 {strides = array<i32>} : memref<1x8x128xbf16, #tpu.memory_space<vmem>>, vector<1x8x128xbf16>,
    %31 = vector.extract_strided_slice %20 {offsets = [0, 256], sizes = [8, 128], strides = [1, 1]} : vector<8x384xf32> to vector<8x128xf32>
    %32 = vector.shape_cast %31 : vector<8x128xf32> to vector<1x8x128xf32>
    %33 = arith.truncf %32 : vector<1x8x128xf32> to vector<1x8x128xbf16>
    %c0_23 = arith.constant 0 : index
    %c0_24 = arith.constant 0 : index
    %c0_25 = arith.constant 0 : index
    %34 = vector.load %arg18[%c0_23, %c0_24, %c0_25] : memref<1x8x128xbf16, #tpu.memory_space<vmem>>, vector<1x8x128xbf16>
    tpu.vector_store %arg18[%c0_23, %c0_24, %c0_25], %33 {strides = array<i32>} : memref<1x8x128xbf16, #tpu.memory_space<vmem>>, vector<1x8x128xbf16>,
    %35 = tpu.iota {dimensions = array<i32: 0>} : vector<8x8xi32>
    %36 = tpu.iota {dimensions = array<i32: 1>} : vector<8x8xi32>
    %c0_26 = arith.constant 0 : index
    %c0_27 = arith.constant 0 : index
    %c0_28 = arith.constant 0 : index
    %37 = vector.load %arg16[%c0_26, %c0_27, %c0_28] : memref<1x8x128xbf16, #tpu.memory_space<vmem>>, vector<1x8x128xbf16>
    %c0_i32 = arith.constant 0 : i32
    %38 = vector.broadcast %c0_i32 : i32 to vector<8x8xi32>
    %39 = arith.addi %35, %38 : vector<8x8xi32>
    %cst_29 = arith.constant 0.000000e+00 : f32
    %40 = vector.broadcast %cst_29 : f32 to vector<1x8x1xf32>
    %cst_30 = arith.constant 0.000000e+00 : f32
    %41 = vector.broadcast %cst_30 : f32 to vector<1x8x128xf32>
    %c0_i32_31 = arith.constant 0 : i32
    %c8_i32 = arith.constant 8 : i32
    %42 = arith.muli %c0_i32_31, %c8_i32 : i32
    %43 = tpu.assume_multiple %42, 8 : i32
    %c0_32 = arith.constant 0 : index
    %44 = arith.index_cast %43 : i32 to index
    %c0_33 = arith.constant 0 : index
    %45 = vector.load %arg17[%c0_32, %44, %c0_33] : memref<1x8x128xbf16, #tpu.memory_space<vmem>>, vector<1x8x128xbf16>
    %c0_34 = arith.constant 0 : index
    %46 = arith.index_cast %43 : i32 to index
    %c0_35 = arith.constant 0 : index
    %47 = vector.load %arg18[%c0_34, %46, %c0_35] : memref<1x8x128xbf16, #tpu.memory_space<vmem>>, vector<1x8x128xbf16>
    %cst_36 = arith.constant dense<0.000000e+00> : vector<1x8x8xf32>
    %48 = tpu.matmul %37, %45, %cst_36 {dimension_numbers = #tpu.dot_dimension_numbers<[2], [2], [1], [1], [0, 0, 0, 1, 1, 1], [0], [0]>} : vector<1x8x128xbf16>, vector<1x8x128xbf16>, vector<1x8x8xf32> -> vector<1x8x8xf32>
    %49 = vector.broadcast %43 : i32 to vector<8x8xi32>
    %50 = arith.addi %36, %49 : vector<8x8xi32>
    %51 = arith.cmpi sge, %39, %50 : vector<8x8xi32>
    %52 = vector.shape_cast %51 : vector<8x8xi1> to vector<1x8x8xi1>
    %53 = math.exp %48 : vector<1x8x8xf32>
    %cst_37 = arith.constant 0.000000e+00 : f32
    %54 = vector.broadcast %cst_37 : f32 to vector<1x8x8xf32>
    %55 = arith.select %52, %53, %54 : vector<1x8x8xi1>, vector<1x8x8xf32>
    %cst_38 = arith.constant dense<0.000000e+00> : vector<1x8xf32>
    %56 = vector.multi_reduction <add>, %55, %cst_38 [2] : vector<1x8x8xf32> to vector<1x8xf32>
    %57 = vector.shape_cast %56 : vector<1x8xf32> to vector<1x8x1xf32>
    %58 = arith.addf %40, %57 : vector<1x8x1xf32>
    %59 = arith.truncf %55 : vector<1x8x8xf32> to vector<1x8x8xbf16>
    %cst_39 = arith.constant dense<0.000000e+00> : vector<1x8x128xf32>
    %60 = tpu.matmul %59, %47, %cst_39 {dimension_numbers = #tpu.dot_dimension_numbers<[2], [1], [1], [2], [0, 0, 0, 1, 1, 2], [0], [0]>} : vector<1x8x8xbf16>, vector<1x8x128xbf16>, vector<1x8x128xf32> -> vector<1x8x128xf32>
    %61 = arith.addf %41, %60 : vector<1x8x128xf32>
    %c1_i32 = arith.constant 1 : i32
    %62 = tpu.reciprocal %58 {approx = true} : vector<1x8x1xf32> -> vector<1x8x1xf32>
    %63 = vector.broadcast %62 : vector<1x8x1xf32> to vector<1x8x128xf32>
    %64 = arith.mulf %61, %63 : vector<1x8x128xf32>
    %c0_40 = arith.constant 0 : index
    %c0_41 = arith.constant 0 : index
    %c0_42 = arith.constant 0 : index
    %65 = vector.load %arg20[%c0_40, %c0_41, %c0_42] : memref<1x8x128xf32, #tpu.memory_space<vmem>>, vector<1x8x128xf32>
    tpu.vector_store %arg20[%c0_40, %c0_41, %c0_42], %64 {strides = array<i32>} : memref<1x8x128xf32, #tpu.memory_space<vmem>>, vector<1x8x128xf32>,
    %c0_43 = arith.constant 0 : index
    %c0_44 = arith.constant 0 : index
    %c0_45 = arith.constant 0 : index
    %66 = vector.load %arg20[%c0_43, %c0_44, %c0_45] : memref<1x8x128xf32, #tpu.memory_space<vmem>>, vector<1x8x128xf32>
    %67 = vector.shape_cast %66 : vector<1x8x128xf32> to vector<8x128xf32>
    %68 = arith.truncf %67 : vector<8x128xf32> to vector<8x128xbf16>
    %c0_46 = arith.constant 0 : index
    %c0_47 = arith.constant 0 : index
    %69 = vector.load %arg7[%c0_46, %c0_47] : memref<128x128xbf16, #tpu.memory_space<vmem>>, vector<128x128xbf16>
    %cst_48 = arith.constant dense<0.000000e+00> : vector<8x128xf32>
    %70 = tpu.matmul %68, %69, %cst_48 {dimension_numbers = #tpu.dot_dimension_numbers<[1], [0], [0], [1], [0, 0, 1, 1], [], []>} : vector<8x128xbf16>, vector<128x128xbf16>, vector<8x128xf32> -> vector<8x128xf32>
    %c0_49 = arith.constant 0 : index
    %c0_50 = arith.constant 0 : index
    %71 = vector.load %arg8[%c0_49, %c0_50] : memref<1x128xf32, #tpu.memory_space<vmem>>, vector<1x128xf32>
    %72 = vector.broadcast %71 : vector<1x128xf32> to vector<8x128xf32>
    %73 = arith.addf %70, %72 : vector<8x128xf32>
    %74 = math.tanh %73 : vector<8x128xf32>
    %c0_51 = arith.constant 0 : index
    %c0_52 = arith.constant 0 : index
    %c0_53 = arith.constant 0 : index
    %75 = vector.load %arg19[%c0_51, %c0_52, %c0_53] : memref<1x8x128xf32, #tpu.memory_space<vmem>>, vector<1x8x128xf32>
    %76 = vector.shape_cast %75 : vector<1x8x128xf32> to vector<8x128xf32>
    %77 = arith.addf %74, %76 : vector<8x128xf32>
    %c0_54 = arith.constant 0 : index
    %c0_55 = arith.constant 0 : index
    %78 = vector.load %arg9[%c0_54, %c0_55] : memref<1x128xf32, #tpu.memory_space<vmem>>, vector<1x128xf32>
    %c0_56 = arith.constant 0 : index
    %c0_57 = arith.constant 0 : index
    %79 = vector.load %arg10[%c0_56, %c0_57] : memref<1x128xf32, #tpu.memory_space<vmem>>, vector<1x128xf32>
    %cst_58 = arith.constant dense<0.000000e+00> : vector<8xf32>
    %80 = vector.multi_reduction <add>, %77, %cst_58 [1] : vector<8x128xf32> to vector<8xf32>
    %81 = vector.shape_cast %80 : vector<8xf32> to vector<8x1xf32>
    %cst_59 = arith.constant 3.125000e-02 : f32
    %82 = vector.broadcast %cst_59 : f32 to vector<8x1xf32>
    %83 = arith.mulf %81, %82 : vector<8x1xf32>
    %84 = arith.mulf %77, %77 : vector<8x128xf32>
    %cst_60 = arith.constant dense<0.000000e+00> : vector<8xf32>
    %85 = vector.multi_reduction <add>, %84, %cst_60 [1] : vector<8x128xf32> to vector<8xf32>
    %86 = vector.shape_cast %85 : vector<8xf32> to vector<8x1xf32>
    %cst_61 = arith.constant 3.125000e-02 : f32
    %87 = vector.broadcast %cst_61 : f32 to vector<8x1xf32>
    %88 = arith.mulf %86, %87 : vector<8x1xf32>
    %89 = arith.mulf %83, %83 : vector<8x1xf32>
    %90 = arith.subf %88, %89 : vector<8x1xf32>
    %91 = vector.broadcast %83 : vector<8x1xf32> to vector<8x128xf32>
    %92 = arith.subf %77, %91 : vector<8x128xf32>
    %cst_62 = arith.constant 9.99999974E-6 : f32
    %93 = vector.broadcast %cst_62 : f32 to vector<8x1xf32>
    %94 = arith.addf %90, %93 : vector<8x1xf32>
    %95 = math.rsqrt %94 : vector<8x1xf32>
    %96 = vector.broadcast %95 : vector<8x1xf32> to vector<8x128xf32>
    %97 = arith.mulf %92, %96 : vector<8x128xf32>
    %98 = vector.broadcast %78 : vector<1x128xf32> to vector<8x128xf32>
    %99 = arith.mulf %97, %98 : vector<8x128xf32>
    %100 = vector.broadcast %79 : vector<1x128xf32> to vector<8x128xf32>
    %101 = arith.addf %99, %100 : vector<8x128xf32>
    %102 = arith.truncf %101 : vector<8x128xf32> to vector<8x128xbf16>
    %c0_63 = arith.constant 0 : index
    %c0_64 = arith.constant 0 : index
    %103 = vector.load %arg11[%c0_63, %c0_64] : memref<128x128xbf16, #tpu.memory_space<vmem>>, vector<128x128xbf16>
    %cst_65 = arith.constant dense<0.000000e+00> : vector<8x128xf32>
    %104 = tpu.matmul %102, %103, %cst_65 {dimension_numbers = #tpu.dot_dimension_numbers<[1], [0], [0], [1], [0, 0, 1, 1], [], []>} : vector<8x128xbf16>, vector<128x128xbf16>, vector<8x128xf32> -> vector<8x128xf32>
    %c0_66 = arith.constant 0 : index
    %c0_67 = arith.constant 0 : index
    %105 = vector.load %arg12[%c0_66, %c0_67] : memref<1x128xf32, #tpu.memory_space<vmem>>, vector<1x128xf32>
    %106 = vector.broadcast %105 : vector<1x128xf32> to vector<8x128xf32>
    %107 = arith.addf %104, %106 : vector<8x128xf32>
    %108 = math.tanh %107 : vector<8x128xf32>
    %109 = arith.addf %108, %101 : vector<8x128xf32>
    %c0_68 = arith.constant 0 : index
    %c0_69 = arith.constant 0 : index
    %110 = vector.load %arg13[%c0_68, %c0_69] : memref<1x128xf32, #tpu.memory_space<vmem>>, vector<1x128xf32>
    %c0_70 = arith.constant 0 : index
    %c0_71 = arith.constant 0 : index
    %111 = vector.load %arg14[%c0_70, %c0_71] : memref<1x128xf32, #tpu.memory_space<vmem>>, vector<1x128xf32>
    %cst_72 = arith.constant dense<0.000000e+00> : vector<8xf32>
    %112 = vector.multi_reduction <add>, %109, %cst_72 [1] : vector<8x128xf32> to vector<8xf32>
    %113 = vector.shape_cast %112 : vector<8xf32> to vector<8x1xf32>
    %cst_73 = arith.constant 3.125000e-02 : f32
    %114 = vector.broadcast %cst_73 : f32 to vector<8x1xf32>
    %115 = arith.mulf %113, %114 : vector<8x1xf32>
    %116 = arith.mulf %109, %109 : vector<8x128xf32>
    %cst_74 = arith.constant dense<0.000000e+00> : vector<8xf32>
    %117 = vector.multi_reduction <add>, %116, %cst_74 [1] : vector<8x128xf32> to vector<8xf32>
    %118 = vector.shape_cast %117 : vector<8xf32> to vector<8x1xf32>
    %cst_75 = arith.constant 3.125000e-02 : f32
    %119 = vector.broadcast %cst_75 : f32 to vector<8x1xf32>
    %120 = arith.mulf %118, %119 : vector<8x1xf32>
    %121 = arith.mulf %115, %115 : vector<8x1xf32>
    %122 = arith.subf %120, %121 : vector<8x1xf32>
    %123 = vector.broadcast %115 : vector<8x1xf32> to vector<8x128xf32>
    %124 = arith.subf %109, %123 : vector<8x128xf32>
    %cst_76 = arith.constant 9.99999974E-6 : f32
    %125 = vector.broadcast %cst_76 : f32 to vector<8x1xf32>
    %126 = arith.addf %122, %125 : vector<8x1xf32>
    %127 = math.rsqrt %126 : vector<8x1xf32>
    %128 = vector.broadcast %127 : vector<8x1xf32> to vector<8x128xf32>
    %129 = arith.mulf %124, %128 : vector<8x128xf32>
    %130 = vector.broadcast %110 : vector<1x128xf32> to vector<8x128xf32>
    %131 = arith.mulf %129, %130 : vector<8x128xf32>
    %132 = vector.broadcast %111 : vector<1x128xf32> to vector<8x128xf32>
    %133 = arith.addf %131, %132 : vector<8x128xf32>
    %134 = vector.shape_cast %133 : vector<8x128xf32> to vector<1x8x128xf32>
    %c0_77 = arith.constant 0 : index
    %c0_78 = arith.constant 0 : index
    %c0_79 = arith.constant 0 : index
    %135 = vector.load %arg15[%c0_77, %c0_78, %c0_79] : memref<1x8x128xf32, #tpu.memory_space<vmem>>, vector<1x8x128xf32>
    tpu.vector_store %arg15[%c0_77, %c0_78, %c0_79], %134 {strides = array<i32>} : memref<1x8x128xf32, #tpu.memory_space<vmem>>, vector<1x8x128xf32>,
    return
  }
  func.func @transform_0(%arg0: i32) -> (i32, i32, i32) {
    %c0_i32 = arith.constant 0 : i32
    %c0_i32_0 = arith.constant 0 : i32
    %c0_i32_1 = arith.constant 0 : i32
    return %arg0, %c0_i32, %c0_i32_0 : i32, i32, i32
  }
  func.func @transform_1(%arg0: i32) -> (i32, i32) {
    %c0_i32 = arith.constant 0 : i32
    %c0_i32_0 = arith.constant 0 : i32
    %c0_i32_1 = arith.constant 0 : i32
    return %c0_i32, %c0_i32_0 : i32, i32
  }
  func.func @transform_2(%arg0: i32) -> (i32, i32) {
    %c0_i32 = arith.constant 0 : i32
    %c0_i32_0 = arith.constant 0 : i32
    %c0_i32_1 = arith.constant 0 : i32
    return %c0_i32, %c0_i32_0 : i32, i32
  }
  func.func @transform_3(%arg0: i32) -> (i32, i32) {
    %c0_i32 = arith.constant 0 : i32
    %c0_i32_0 = arith.constant 0 : i32
    %c0_i32_1 = arith.constant 0 : i32
    return %c0_i32, %c0_i32_0 : i32, i32
  }
  func.func @transform_4(%arg0: i32) -> (i32, i32) {
    %c0_i32 = arith.constant 0 : i32
    %c0_i32_0 = arith.constant 0 : i32
    %c0_i32_1 = arith.constant 0 : i32
    return %c0_i32, %c0_i32_0 : i32, i32
  }
  func.func @transform_5(%arg0: i32) -> (i32, i32) {
    %c0_i32 = arith.constant 0 : i32
    %c0_i32_0 = arith.constant 0 : i32
    %c0_i32_1 = arith.constant 0 : i32
    return %c0_i32, %c0_i32_0 : i32, i32
  }
  func.func @transform_6(%arg0: i32) -> (i32, i32) {
    %c0_i32 = arith.constant 0 : i32
    %c0_i32_0 = arith.constant 0 : i32
    %c0_i32_1 = arith.constant 0 : i32
    return %c0_i32, %c0_i32_0 : i32, i32
  }
  func.func @transform_7(%arg0: i32) -> (i32, i32) {
    %c0_i32 = arith.constant 0 : i32
    %c0_i32_0 = arith.constant 0 : i32
    %c0_i32_1 = arith.constant 0 : i32
    return %c0_i32, %c0_i32_0 : i32, i32
  }
  func.func @transform_8(%arg0: i32) -> (i32, i32) {
    %c0_i32 = arith.constant 0 : i32
    %c0_i32_0 = arith.constant 0 : i32
    %c0_i32_1 = arith.constant 0 : i32
    return %c0_i32, %c0_i32_0 : i32, i32
  }
  func.func @transform_9(%arg0: i32) -> (i32, i32) {
    %c0_i32 = arith.constant 0 : i32
    %c0_i32_0 = arith.constant 0 : i32
    %c0_i32_1 = arith.constant 0 : i32
    return %c0_i32, %c0_i32_0 : i32, i32
  }
  func.func @transform_10(%arg0: i32) -> (i32, i32) {
    %c0_i32 = arith.constant 0 : i32
    %c0_i32_0 = arith.constant 0 : i32
    %c0_i32_1 = arith.constant 0 : i32
    return %c0_i32, %c0_i32_0 : i32, i32
  }
  func.func @transform_11(%arg0: i32) -> (i32, i32) {
    %c0_i32 = arith.constant 0 : i32
    %c0_i32_0 = arith.constant 0 : i32
    %c0_i32_1 = arith.constant 0 : i32
    return %c0_i32, %c0_i32_0 : i32, i32
  }
  func.func @transform_12(%arg0: i32) -> (i32, i32) {
    %c0_i32 = arith.constant 0 : i32
    %c0_i32_0 = arith.constant 0 : i32
    %c0_i32_1 = arith.constant 0 : i32
    return %c0_i32, %c0_i32_0 : i32, i32
  }
  func.func @transform_13(%arg0: i32) -> (i32, i32) {
    %c0_i32 = arith.constant 0 : i32
    %c0_i32_0 = arith.constant 0 : i32
    %c0_i32_1 = arith.constant 0 : i32
    return %c0_i32, %c0_i32_0 : i32, i32
  }
  func.func @transform_14(%arg0: i32) -> (i32, i32, i32) {
    %c0_i32 = arith.constant 0 : i32
    %c0_i32_0 = arith.constant 0 : i32
    %c0_i32_1 = arith.constant 0 : i32
    return %arg0, %c0_i32, %c0_i32_0 : i32, i32, i32
  }
}

module attributes {stable_mosaic.version = 11 : i64} {
  func.func @transformer_layer_kernel(%arg0: i32, %arg1: memref<1x8x16xbf16, #tpu.memory_space<vmem>>, %arg2: memref<16x128xbf16, #tpu.memory_space<vmem>>, %arg3: memref<1x128xf32, #tpu.memory_space<vmem>>, %arg4: memref<8x128xf32, #tpu.memory_space<vmem>>, %arg5: memref<128x384xbf16, #tpu.memory_space<vmem>>, %arg6: memref<1x384xf32, #tpu.memory_space<vmem>>, %arg7: memref<128x128xbf16, #tpu.memory_space<vmem>>, %arg8: memref<1x128xf32, #tpu.memory_space<vmem>>, %arg9: memref<1x128xf32, #tpu.memory_space<vmem>>, %arg10: memref<1x128xf32, #tpu.memory_space<vmem>>, %arg11: memref<128x128xbf16, #tpu.memory_space<vmem>>, %arg12: memref<1x128xf32, #tpu.memory_space<vmem>>, %arg13: memref<1x128xf32, #tpu.memory_space<vmem>>, %arg14: memref<1x128xf32, #tpu.memory_space<vmem>>, %arg15: memref<1x8x128xf32, #tpu.memory_space<vmem>>, %arg16: memref<1x8x128xbf16, #tpu.memory_space<vmem>>, %arg17: memref<1x8x128xbf16, #tpu.memory_space<vmem>>, %arg18: memref<1x8x128xbf16, #tpu.memory_space<vmem>>, %arg19: memref<1x8x128xf32, #tpu.memory_space<vmem>>, %arg20: memref<1x8x128xf32, #tpu.memory_space<vmem>>) attributes {dimension_semantics = [#tpu.dimension_semantics<parallel>], iteration_bounds = array<i64: 2>, scalar_prefetch = 0 : i64, scratch_operands = 5 : i64, tpu.core_type = #tpu.core_type<tc>, window_params = [{transform_indices = @transform_0, window_bounds = array<i64: 1, 8, 16>}, {pipeline_mode = #tpu.pipeline_mode<synchronous>, transform_indices = @transform_1, window_bounds = array<i64: 16, 128>}, {pipeline_mode = #tpu.pipeline_mode<synchronous>, transform_indices = @transform_2, window_bounds = array<i64: 1, 128>}, {pipeline_mode = #tpu.pipeline_mode<synchronous>, transform_indices = @transform_3, window_bounds = array<i64: 8, 128>}, {pipeline_mode = #tpu.pipeline_mode<synchronous>, transform_indices = @transform_4, window_bounds = array<i64: 128, 384>}, {pipeline_mode = #tpu.pipeline_mode<synchronous>, transform_indices = @transform_5, window_bounds = array<i64: 1, 384>}, {pipeline_mode = #tpu.pipeline_mode<synchronous>, transform_indices = @transform_6, window_bounds = array<i64: 128, 128>}, {pipeline_mode = #tpu.pipeline_mode<synchronous>, transform_indices = @transform_7, window_bounds = array<i64: 1, 128>}, {pipeline_mode = #tpu.pipeline_mode<synchronous>, transform_indices = @transform_8, window_bounds = array<i64: 1, 128>}, {pipeline_mode = #tpu.pipeline_mode<synchronous>, transform_indices = @transform_9, window_bounds = array<i64: 1, 128>}, {pipeline_mode = #tpu.pipeline_mode<synchronous>, transform_indices = @transform_10, window_bounds = array<i64: 128, 128>}, {pipeline_mode = #tpu.pipeline_mode<synchronous>, transform_indices = @transform_11, window_bounds = array<i64: 1, 128>}, {pipeline_mode = #tpu.pipeline_mode<synchronous>, transform_indices = @transform_12, window_bounds = array<i64: 1, 128>}, {pipeline_mode = #tpu.pipeline_mode<synchronous>, transform_indices = @transform_13, window_bounds = array<i64: 1, 128>}, {transform_indices = @transform_14, window_bounds = array<i64: 1, 8, 128>}]} {
    %c0 = arith.constant 0 : index
    %c0_0 = arith.constant 0 : index
    %c0_1 = arith.constant 0 : index
    %0 = vector.load %arg1[%c0, %c0_0, %c0_1] : memref<1x8x16xbf16, #tpu.memory_space<vmem>>, vector<1x8x16xbf16>
    %1 = vector.shape_cast %0 : vector<1x8x16xbf16> to vector<8x16xbf16>
    %c0_2 = arith.constant 0 : index
    %c0_3 = arith.constant 0 : index
    %2 = vector.load %arg2[%c0_2, %c0_3] : memref<16x128xbf16, #tpu.memory_space<vmem>>, vector<16x128xbf16>
    %cst = arith.constant dense<0.000000e+00> : vector<8x128xf32>
    %3 = tpu.matmul %1, %2, %cst {dimension_numbers = #tpu.dot_dimension_numbers<[1], [0], [0], [1], [0, 0, 1, 1], [], []>} : vector<8x16xbf16>, vector<16x128xbf16>, vector<8x128xf32> -> vector<8x128xf32>
    %c0_4 = arith.constant 0 : index
    %c0_5 = arith.constant 0 : index
    %4 = vector.load %arg3[%c0_4, %c0_5] : memref<1x128xf32, #tpu.memory_space<vmem>>, vector<1x128xf32>
    %5 = vector.broadcast %4 : vector<1x128xf32> to vector<8x128xf32>
    %6 = arith.addf %3, %5 : vector<8x128xf32>
    %7 = math.tanh %6 : vector<8x128xf32>
    %8 = vector.shape_cast %7 : vector<8x128xf32> to vector<1x8x128xf32>
    %c0_6 = arith.constant 0 : index
    %c0_7 = arith.constant 0 : index
    %9 = vector.load %arg4[%c0_6, %c0_7] : memref<8x128xf32, #tpu.memory_space<vmem>>, vector<8x128xf32>
    %10 = vector.shape_cast %9 : vector<8x128xf32> to vector<1x8x128xf32>
    %11 = arith.addf %8, %10 : vector<1x8x128xf32>
    %c0_8 = arith.constant 0 : index
    %c0_9 = arith.constant 0 : index
    %c0_10 = arith.constant 0 : index
    %12 = vector.load %arg19[%c0_8, %c0_9, %c0_10] : memref<1x8x128xf32, #tpu.memory_space<vmem>>, vector<1x8x128xf32>
    tpu.vector_store %arg19[%c0_8, %c0_9, %c0_10], %11 {strides = array<i32>} : memref<1x8x128xf32, #tpu.memory_space<vmem>>, vector<1x8x128xf32>,
    %13 = vector.shape_cast %11 : vector<1x8x128xf32> to vector<8x128xf32>
    %14 = arith.truncf %13 : vector<8x128xf32> to vector<8x128xbf16>
    %c0_11 = arith.constant 0 : index
    %c0_12 = arith.constant 0 : index
    %15 = vector.load %arg5[%c0_11, %c0_12] : memref<128x384xbf16, #tpu.memory_space<vmem>>, vector<128x384xbf16>
    %cst_13 = arith.constant dense<0.000000e+00> : vector<8x384xf32>
    %16 = tpu.matmul %14, %15, %cst_13 {dimension_numbers = #tpu.dot_dimension_numbers<[1], [0], [0], [1], [0, 0, 1, 1], [], []>} : vector<8x128xbf16>, vector<128x384xbf16>, vector<8x384xf32> -> vector<8x384xf32>
    %c0_14 = arith.constant 0 : index
    %c0_15 = arith.constant 0 : index
    %17 = vector.load %arg6[%c0_14, %c0_15] : memref<1x384xf32, #tpu.memory_space<vmem>>, vector<1x384xf32>
    %18 = vector.broadcast %17 : vector<1x384xf32> to vector<8x384xf32>
    %19 = arith.addf %16, %18 : vector<8x384xf32>
    %20 = math.tanh %19 : vector<8x384xf32>
    %21 = vector.extract_strided_slice %20 {offsets = [0, 0], sizes = [8, 128], strides = [1, 1]} : vector<8x384xf32> to vector<8x128xf32>
    %cst_16 = arith.constant 0.176776692 : f32
    %22 = vector.broadcast %cst_16 : f32 to vector<8x128xf32>
    %23 = arith.mulf %21, %22 : vector<8x128xf32>
    %24 = vector.shape_cast %23 : vector<8x128xf32> to vector<1x8x128xf32>
    %25 = arith.truncf %24 : vector<1x8x128xf32> to vector<1x8x128xbf16>
    %c0_17 = arith.constant 0 : index
    %c0_18 = arith.constant 0 : index
    %c0_19 = arith.constant 0 : index
    %26 = vector.load %arg16[%c0_17, %c0_18, %c0_19] : memref<1x8x128xbf16, #tpu.memory_space<vmem>>, vector<1x8x128xbf16>
    tpu.vector_store %arg16[%c0_17, %c0_18, %c0_19], %25 {strides = array<i32>} : memref<1x8x128xbf16, #tpu.memory_space<vmem>>, vector<1x8x128xbf16>,
    %27 = vector.extract_strided_slice %20 {offsets = [0, 128], sizes = [8, 128], strides = [1, 1]} : vector<8x384xf32> to vector<8x128xf32>
    %28 = vector.shape_cast %27 : vector<8x128xf32> to vector<1x8x128xf32>
    %29 = arith.truncf %28 : vector<1x8x128xf32> to vector<1x8x128xbf16>
    %c0_20 = arith.constant 0 : index
    %c0_21 = arith.constant 0 : index
    %c0_22 = arith.constant 0 : index
    %30 = vector.load %arg17[%c0_20, %c0_21, %c0_22] : memref<1x8x128xbf16, #tpu.memory_space<vmem>>, vector<1x8x128xbf16>
    tpu.vector_store %arg17[%c0_20, %c0_21, %c0_22], %29 {strides = array<i32>} : memref<1x8x128xbf16, #tpu.memory_space<vmem>>, vector<1x8x128xbf16>,
    %31 = vector.extract_strided_slice %20 {offsets = [0, 256], sizes = [8, 128], strides = [1, 1]} : vector<8x384xf32> to vector<8x128xf32>
    %32 = vector.shape_cast %31 : vector<8x128xf32> to vector<1x8x128xf32>
    %33 = arith.truncf %32 : vector<1x8x128xf32> to vector<1x8x128xbf16>
    %c0_23 = arith.constant 0 : index
    %c0_24 = arith.constant 0 : index
    %c0_25 = arith.constant 0 : index
    %34 = vector.load %arg18[%c0_23, %c0_24, %c0_25] : memref<1x8x128xbf16, #tpu.memory_space<vmem>>, vector<1x8x128xbf16>
    tpu.vector_store %arg18[%c0_23, %c0_24, %c0_25], %33 {strides = array<i32>} : memref<1x8x128xbf16, #tpu.memory_space<vmem>>, vector<1x8x128xbf16>,
    %35 = tpu.iota {dimensions = array<i32: 0>} : vector<8x8xi32>
    %36 = tpu.iota {dimensions = array<i32: 1>} : vector<8x8xi32>
    %c0_26 = arith.constant 0 : index
    %c0_27 = arith.constant 0 : index
    %c0_28 = arith.constant 0 : index
    %37 = vector.load %arg16[%c0_26, %c0_27, %c0_28] : memref<1x8x128xbf16, #tpu.memory_space<vmem>>, vector<1x8x128xbf16>
    %c0_i32 = arith.constant 0 : i32
    %38 = vector.broadcast %c0_i32 : i32 to vector<8x8xi32>
    %39 = arith.addi %35, %38 : vector<8x8xi32>
    %cst_29 = arith.constant 0.000000e+00 : f32
    %40 = vector.broadcast %cst_29 : f32 to vector<1x8x1xf32>
    %cst_30 = arith.constant 0.000000e+00 : f32
    %41 = vector.broadcast %cst_30 : f32 to vector<1x8x128xf32>
    %c0_i32_31 = arith.constant 0 : i32
    %c8_i32 = arith.constant 8 : i32
    %42 = arith.muli %c0_i32_31, %c8_i32 : i32
    %43 = tpu.assume_multiple %42, 8 : i32
    %c0_32 = arith.constant 0 : index
    %44 = arith.index_cast %43 : i32 to index
    %c0_33 = arith.constant 0 : index
    %45 = vector.load %arg17[%c0_32, %44, %c0_33] : memref<1x8x128xbf16, #tpu.memory_space<vmem>>, vector<1x8x128xbf16>
    %c0_34 = arith.constant 0 : index
    %46 = arith.index_cast %43 : i32 to index
    %c0_35 = arith.constant 0 : index
    %47 = vector.load %arg18[%c0_34, %46, %c0_35] : memref<1x8x128xbf16, #tpu.memory_space<vmem>>, vector<1x8x128xbf16>
    %cst_36 = arith.constant dense<0.000000e+00> : vector<1x8x8xf32>
    %48 = tpu.matmul %37, %45, %cst_36 {dimension_numbers = #tpu.dot_dimension_numbers<[2], [2], [1], [1], [0, 0, 0, 1, 1, 1], [0], [0]>} : vector<1x8x128xbf16>, vector<1x8x128xbf16>, vector<1x8x8xf32> -> vector<1x8x8xf32>
    %49 = vector.broadcast %43 : i32 to vector<8x8xi32>
    %50 = arith.addi %36, %49 : vector<8x8xi32>
    %51 = arith.cmpi sge, %39, %50 : vector<8x8xi32>
    %52 = vector.shape_cast %51 : vector<8x8xi1> to vector<1x8x8xi1>
    %53 = math.exp %48 : vector<1x8x8xf32>
    %cst_37 = arith.constant 0.000000e+00 : f32
    %54 = vector.broadcast %cst_37 : f32 to vector<1x8x8xf32>
    %55 = arith.select %52, %53, %54 : vector<1x8x8xi1>, vector<1x8x8xf32>
    %cst_38 = arith.constant dense<0.000000e+00> : vector<1x8xf32>
    %56 = vector.multi_reduction <add>, %55, %cst_38 [2] : vector<1x8x8xf32> to vector<1x8xf32>
    %57 = vector.shape_cast %56 : vector<1x8xf32> to vector<1x8x1xf32>
    %58 = arith.addf %40, %57 : vector<1x8x1xf32>
    %59 = arith.truncf %55 : vector<1x8x8xf32> to vector<1x8x8xbf16>
    %cst_39 = arith.constant dense<0.000000e+00> : vector<1x8x128xf32>
    %60 = tpu.matmul %59, %47, %cst_39 {dimension_numbers = #tpu.dot_dimension_numbers<[2], [1], [1], [2], [0, 0, 0, 1, 1, 2], [0], [0]>} : vector<1x8x8xbf16>, vector<1x8x128xbf16>, vector<1x8x128xf32> -> vector<1x8x128xf32>
    %61 = arith.addf %41, %60 : vector<1x8x128xf32>
    %c1_i32 = arith.constant 1 : i32
    %62 = tpu.reciprocal %58 {approx = true} : vector<1x8x1xf32> -> vector<1x8x1xf32>
    %63 = vector.broadcast %62 : vector<1x8x1xf32> to vector<1x8x128xf32>
    %64 = arith.mulf %61, %63 : vector<1x8x128xf32>
    %c0_40 = arith.constant 0 : index
    %c0_41 = arith.constant 0 : index
    %c0_42 = arith.constant 0 : index
    %65 = vector.load %arg20[%c0_40, %c0_41, %c0_42] : memref<1x8x128xf32, #tpu.memory_space<vmem>>, vector<1x8x128xf32>
    tpu.vector_store %arg20[%c0_40, %c0_41, %c0_42], %64 {strides = array<i32>} : memref<1x8x128xf32, #tpu.memory_space<vmem>>, vector<1x8x128xf32>,
    %c0_43 = arith.constant 0 : index
    %c0_44 = arith.constant 0 : index
    %c0_45 = arith.constant 0 : index
    %66 = vector.load %arg20[%c0_43, %c0_44, %c0_45] : memref<1x8x128xf32, #tpu.memory_space<vmem>>, vector<1x8x128xf32>
    %67 = vector.shape_cast %66 : vector<1x8x128xf32> to vector<8x128xf32>
    %68 = arith.truncf %67 : vector<8x128xf32> to vector<8x128xbf16>
    %c0_46 = arith.constant 0 : index
    %c0_47 = arith.constant 0 : index
    %69 = vector.load %arg7[%c0_46, %c0_47] : memref<128x128xbf16, #tpu.memory_space<vmem>>, vector<128x128xbf16>
    %cst_48 = arith.constant dense<0.000000e+00> : vector<8x128xf32>
    %70 = tpu.matmul %68, %69, %cst_48 {dimension_numbers = #tpu.dot_dimension_numbers<[1], [0], [0], [1], [0, 0, 1, 1], [], []>} : vector<8x128xbf16>, vector<128x128xbf16>, vector<8x128xf32> -> vector<8x128xf32>
    %c0_49 = arith.constant 0 : index
    %c0_50 = arith.constant 0 : index
    %71 = vector.load %arg8[%c0_49, %c0_50] : memref<1x128xf32, #tpu.memory_space<vmem>>, vector<1x128xf32>
    %72 = vector.broadcast %71 : vector<1x128xf32> to vector<8x128xf32>
    %73 = arith.addf %70, %72 : vector<8x128xf32>
    %74 = math.tanh %73 : vector<8x128xf32>
    %c0_51 = arith.constant 0 : index
    %c0_52 = arith.constant 0 : index
    %c0_53 = arith.constant 0 : index
    %75 = vector.load %arg19[%c0_51, %c0_52, %c0_53] : memref<1x8x128xf32, #tpu.memory_space<vmem>>, vector<1x8x128xf32>
    %76 = vector.shape_cast %75 : vector<1x8x128xf32> to vector<8x128xf32>
    %77 = arith.addf %74, %76 : vector<8x128xf32>
    %c0_54 = arith.constant 0 : index
    %c0_55 = arith.constant 0 : index
    %78 = vector.load %arg9[%c0_54, %c0_55] : memref<1x128xf32, #tpu.memory_space<vmem>>, vector<1x128xf32>
    %c0_56 = arith.constant 0 : index
    %c0_57 = arith.constant 0 : index
    %79 = vector.load %arg10[%c0_56, %c0_57] : memref<1x128xf32, #tpu.memory_space<vmem>>, vector<1x128xf32>
    %cst_58 = arith.constant dense<0.000000e+00> : vector<8xf32>
    %80 = vector.multi_reduction <add>, %77, %cst_58 [1] : vector<8x128xf32> to vector<8xf32>
    %81 = vector.shape_cast %80 : vector<8xf32> to vector<8x1xf32>
    %cst_59 = arith.constant 3.125000e-02 : f32
    %82 = vector.broadcast %cst_59 : f32 to vector<8x1xf32>
    %83 = arith.mulf %81, %82 : vector<8x1xf32>
    %84 = arith.mulf %77, %77 : vector<8x128xf32>
    %cst_60 = arith.constant dense<0.000000e+00> : vector<8xf32>
    %85 = vector.multi_reduction <add>, %84, %cst_60 [1] : vector<8x128xf32> to vector<8xf32>
    %86 = vector.shape_cast %85 : vector<8xf32> to vector<8x1xf32>
    %cst_61 = arith.constant 3.125000e-02 : f32
    %87 = vector.broadcast %cst_61 : f32 to vector<8x1xf32>
    %88 = arith.mulf %86, %87 : vector<8x1xf32>
    %89 = arith.mulf %83, %83 : vector<8x1xf32>
    %90 = arith.subf %88, %89 : vector<8x1xf32>
    %91 = vector.broadcast %83 : vector<8x1xf32> to vector<8x128xf32>
    %92 = arith.subf %77, %91 : vector<8x128xf32>
    %cst_62 = arith.constant 9.99999974E-6 : f32
    %93 = vector.broadcast %cst_62 : f32 to vector<8x1xf32>
    %94 = arith.addf %90, %93 : vector<8x1xf32>
    %95 = math.rsqrt %94 : vector<8x1xf32>
    %96 = vector.broadcast %95 : vector<8x1xf32> to vector<8x128xf32>
    %97 = arith.mulf %92, %96 : vector<8x128xf32>
    %98 = vector.broadcast %78 : vector<1x128xf32> to vector<8x128xf32>
    %99 = arith.mulf %97, %98 : vector<8x128xf32>
    %100 = vector.broadcast %79 : vector<1x128xf32> to vector<8x128xf32>
    %101 = arith.addf %99, %100 : vector<8x128xf32>
    %102 = arith.truncf %101 : vector<8x128xf32> to vector<8x128xbf16>
    %c0_63 = arith.constant 0 : index
    %c0_64 = arith.constant 0 : index
    %103 = vector.load %arg11[%c0_63, %c0_64] : memref<128x128xbf16, #tpu.memory_space<vmem>>, vector<128x128xbf16>
    %cst_65 = arith.constant dense<0.000000e+00> : vector<8x128xf32>
    %104 = tpu.matmul %102, %103, %cst_65 {dimension_numbers = #tpu.dot_dimension_numbers<[1], [0], [0], [1], [0, 0, 1, 1], [], []>} : vector<8x128xbf16>, vector<128x128xbf16>, vector<8x128xf32> -> vector<8x128xf32>
    %c0_66 = arith.constant 0 : index
    %c0_67 = arith.constant 0 : index
    %105 = vector.load %arg12[%c0_66, %c0_67] : memref<1x128xf32, #tpu.memory_space<vmem>>, vector<1x128xf32>
    %106 = vector.broadcast %105 : vector<1x128xf32> to vector<8x128xf32>
    %107 = arith.addf %104, %106 : vector<8x128xf32>
    %108 = math.tanh %107 : vector<8x128xf32>
    %109 = arith.addf %108, %101 : vector<8x128xf32>
    %c0_68 = arith.constant 0 : index
    %c0_69 = arith.constant 0 : index
    %110 = vector.load %arg13[%c0_68, %c0_69] : memref<1x128xf32, #tpu.memory_space<vmem>>, vector<1x128xf32>
    %c0_70 = arith.constant 0 : index
    %c0_71 = arith.constant 0 : index
    %111 = vector.load %arg14[%c0_70, %c0_71] : memref<1x128xf32, #tpu.memory_space<vmem>>, vector<1x128xf32>
    %cst_72 = arith.constant dense<0.000000e+00> : vector<8xf32>
    %112 = vector.multi_reduction <add>, %109, %cst_72 [1] : vector<8x128xf32> to vector<8xf32>
    %113 = vector.shape_cast %112 : vector<8xf32> to vector<8x1xf32>
    %cst_73 = arith.constant 3.125000e-02 : f32
    %114 = vector.broadcast %cst_73 : f32 to vector<8x1xf32>
    %115 = arith.mulf %113, %114 : vector<8x1xf32>
    %116 = arith.mulf %109, %109 : vector<8x128xf32>
    %cst_74 = arith.constant dense<0.000000e+00> : vector<8xf32>
    %117 = vector.multi_reduction <add>, %116, %cst_74 [1] : vector<8x128xf32> to vector<8xf32>
    %118 = vector.shape_cast %117 : vector<8xf32> to vector<8x1xf32>
    %cst_75 = arith.constant 3.125000e-02 : f32
    %119 = vector.broadcast %cst_75 : f32 to vector<8x1xf32>
    %120 = arith.mulf %118, %119 : vector<8x1xf32>
    %121 = arith.mulf %115, %115 : vector<8x1xf32>
    %122 = arith.subf %120, %121 : vector<8x1xf32>
    %123 = vector.broadcast %115 : vector<8x1xf32> to vector<8x128xf32>
    %124 = arith.subf %109, %123 : vector<8x128xf32>
    %cst_76 = arith.constant 9.99999974E-6 : f32
    %125 = vector.broadcast %cst_76 : f32 to vector<8x1xf32>
    %126 = arith.addf %122, %125 : vector<8x1xf32>
    %127 = math.rsqrt %126 : vector<8x1xf32>
    %128 = vector.broadcast %127 : vector<8x1xf32> to vector<8x128xf32>
    %129 = arith.mulf %124, %128 : vector<8x128xf32>
    %130 = vector.broadcast %110 : vector<1x128xf32> to vector<8x128xf32>
    %131 = arith.mulf %129, %130 : vector<8x128xf32>
    %132 = vector.broadcast %111 : vector<1x128xf32> to vector<8x128xf32>
    %133 = arith.addf %131, %132 : vector<8x128xf32>
    %134 = vector.shape_cast %133 : vector<8x128xf32> to vector<1x8x128xf32>
    %c0_77 = arith.constant 0 : index
    %c0_78 = arith.constant 0 : index
    %c0_79 = arith.constant 0 : index
    %135 = vector.load %arg15[%c0_77, %c0_78, %c0_79] : memref<1x8x128xf32, #tpu.memory_space<vmem>>, vector<1x8x128xf32>
    tpu.vector_store %arg15[%c0_77, %c0_78, %c0_79], %134 {strides = array<i32>} : memref<1x8x128xf32, #tpu.memory_space<vmem>>, vector<1x8x128xf32>,
    return
  }
  func.func @transform_0(%arg0: i32) -> (i32, i32, i32) {
    %c0_i32 = arith.constant 0 : i32
    %c0_i32_0 = arith.constant 0 : i32
    %c0_i32_1 = arith.constant 0 : i32
    return %arg0, %c0_i32, %c0_i32_0 : i32, i32, i32
  }
  func.func @transform_1(%arg0: i32) -> (i32, i32) {
    %c0_i32 = arith.constant 0 : i32
    %c0_i32_0 = arith.constant 0 : i32
    %c0_i32_1 = arith.constant 0 : i32
    return %c0_i32, %c0_i32_0 : i32, i32
  }
  func.func @transform_2(%arg0: i32) -> (i32, i32) {
    %c0_i32 = arith.constant 0 : i32
    %c0_i32_0 = arith.constant 0 : i32
    %c0_i32_1 = arith.constant 0 : i32
    return %c0_i32, %c0_i32_0 : i32, i32
  }
  func.func @transform_3(%arg0: i32) -> (i32, i32) {
    %c0_i32 = arith.constant 0 : i32
    %c0_i32_0 = arith.constant 0 : i32
    %c0_i32_1 = arith.constant 0 : i32
    return %c0_i32, %c0_i32_0 : i32, i32
  }
  func.func @transform_4(%arg0: i32) -> (i32, i32) {
    %c0_i32 = arith.constant 0 : i32
    %c0_i32_0 = arith.constant 0 : i32
    %c0_i32_1 = arith.constant 0 : i32
    return %c0_i32, %c0_i32_0 : i32, i32
  }
  func.func @transform_5(%arg0: i32) -> (i32, i32) {
    %c0_i32 = arith.constant 0 : i32
    %c0_i32_0 = arith.constant 0 : i32
    %c0_i32_1 = arith.constant 0 : i32
    return %c0_i32, %c0_i32_0 : i32, i32
  }
  func.func @transform_6(%arg0: i32) -> (i32, i32) {
    %c0_i32 = arith.constant 0 : i32
    %c0_i32_0 = arith.constant 0 : i32
    %c0_i32_1 = arith.constant 0 : i32
    return %c0_i32, %c0_i32_0 : i32, i32
  }
  func.func @transform_7(%arg0: i32) -> (i32, i32) {
    %c0_i32 = arith.constant 0 : i32
    %c0_i32_0 = arith.constant 0 : i32
    %c0_i32_1 = arith.constant 0 : i32
    return %c0_i32, %c0_i32_0 : i32, i32
  }
  func.func @transform_8(%arg0: i32) -> (i32, i32) {
    %c0_i32 = arith.constant 0 : i32
    %c0_i32_0 = arith.constant 0 : i32
    %c0_i32_1 = arith.constant 0 : i32
    return %c0_i32, %c0_i32_0 : i32, i32
  }
  func.func @transform_9(%arg0: i32) -> (i32, i32) {
    %c0_i32 = arith.constant 0 : i32
    %c0_i32_0 = arith.constant 0 : i32
    %c0_i32_1 = arith.constant 0 : i32
    return %c0_i32, %c0_i32_0 : i32, i32
  }
  func.func @transform_10(%arg0: i32) -> (i32, i32) {
    %c0_i32 = arith.constant 0 : i32
    %c0_i32_0 = arith.constant 0 : i32
    %c0_i32_1 = arith.constant 0 : i32
    return %c0_i32, %c0_i32_0 : i32, i32
  }
  func.func @transform_11(%arg0: i32) -> (i32, i32) {
    %c0_i32 = arith.constant 0 : i32
    %c0_i32_0 = arith.constant 0 : i32
    %c0_i32_1 = arith.constant 0 : i32
    return %c0_i32, %c0_i32_0 : i32, i32
  }
  func.func @transform_12(%arg0: i32) -> (i32, i32) {
    %c0_i32 = arith.constant 0 : i32
    %c0_i32_0 = arith.constant 0 : i32
    %c0_i32_1 = arith.constant 0 : i32
    return %c0_i32, %c0_i32_0 : i32, i32
  }
  func.func @transform_13(%arg0: i32) -> (i32, i32) {
    %c0_i32 = arith.constant 0 : i32
    %c0_i32_0 = arith.constant 0 : i32
    %c0_i32_1 = arith.constant 0 : i32
    return %c0_i32, %c0_i32_0 : i32, i32
  }
  func.func @transform_14(%arg0: i32) -> (i32, i32, i32) {
    %c0_i32 = arith.constant 0 : i32
    %c0_i32_0 = arith.constant 0 : i32
    %c0_i32_1 = arith.constant 0 : i32
    return %arg0, %c0_i32, %c0_i32_0 : i32, i32, i32
  }
}

</mosaic_0001>

<llo_original>
// kernel: _forward.1
$region0: #{_forward.1}
  #allocation0 [shape = 'u32[]', space=smem, size = 0x4, offset = 0x4, fixed_abs, tag = 'smem constant byte address 0x4 - core index']
  #allocation1 [shape = 'u32[144,128]{1,0:T(1,128)}', space=vmem, size = 0x12000, scoped, tag = 'internal scratch']
  #allocation2 [shape = 'bf16[1,8,128]{2,1,0:T(8,128)(2,1)}', space=vmem, size = 0x800, scoped, tag = 'scratch operand']
  #allocation3 [shape = 'bf16[1,8,128]{2,1,0:T(8,128)(2,1)}', space=vmem, size = 0x800, scoped, tag = 'scratch operand']
  #allocation4 [shape = 'bf16[1,8,128]{2,1,0:T(8,128)(2,1)}', space=vmem, size = 0x800, scoped, tag = 'scratch operand']
  #allocation5 [shape = 'f32[1,8,128]{2,1,0:T(8,128)}', space=vmem, size = 0x1000, scoped, tag = 'scratch operand']
  #allocation6 [shape = 'f32[1,8,128]{2,1,0:T(8,128)}', space=vmem, size = 0x1000, scoped, tag = 'scratch operand']
  %s0 = inlined_call_operand.vmem [shape: bf16[2,8,16], index: 0, kind: input, shape index: {}]
  %s1 = inlined_call_operand.vmem [shape: bf16[16,128], index: 1, kind: input, shape index: {}]
  %s2 = inlined_call_operand.vmem [shape: f32[1,128], index: 2, kind: input, shape index: {}]
  %s3 = inlined_call_operand.vmem [shape: f32[8,128], index: 3, kind: input, shape index: {}]
  %s4 = inlined_call_operand.hbm [shape: bf16[128,384], index: 4, kind: input, shape index: {}]
  %s5 = inlined_call_operand.vmem [shape: f32[1,384], index: 5, kind: input, shape index: {}]
  %s6 = inlined_call_operand.hbm [shape: bf16[128,128], index: 6, kind: input, shape index: {}]
  %s7 = inlined_call_operand.vmem [shape: f32[1,128], index: 7, kind: input, shape index: {}]
  %s8 = inlined_call_operand.vmem [shape: f32[1,128], index: 8, kind: input, shape index: {}]
  %s9 = inlined_call_operand.vmem [shape: f32[1,128], index: 9, kind: input, shape index: {}]
  %s10 = inlined_call_operand.hbm [shape: bf16[128,128], index: 10, kind: input, shape index: {}]
  %s11 = inlined_call_operand.vmem [shape: f32[1,128], index: 11, kind: input, shape index: {}]
  %s12 = inlined_call_operand.vmem [shape: f32[1,128], index: 12, kind: input, shape index: {}]
  %s13 = inlined_call_operand.vmem [shape: f32[1,128], index: 13, kind: input, shape index: {}]
  %s14 = inlined_call_operand.hbm [shape: f32[2,8,128], index: 14, kind: output, shape index: {}]
  %s15 = sld [smem:[#allocation0]]
  $region101: #{_forward.1} parent=0
    _
  %s17 = ssub.s32 1, %s15
  %s18 = scalar_select 0, %s17, %s15
  $region1: #{_forward.1} parent=0
    #allocation7 [shape = 'u8[98304]{0}', space=vmem, size = 0x18000, scoped, tag = 'input window, operand 4, single buffered']
    #allocation8 [shape = 's32[2]{0}', space=sflag, size = 0x8, scoped, tag = 'scoped memory for _forward.1']
    #allocation9 [shape = 's32[2]{0}', space=sflag, size = 0x8, scoped, tag = 'scoped memory for _forward.1']
    #allocation10 [shape = 'u8[32768]{0}', space=vmem, size = 0x8000, scoped, tag = 'input window, operand 6, single buffered']
    #allocation11 [shape = 's32[1]{0}', space=sflag, size = 0x4, scoped, tag = 'scoped memory for _forward.1']
    #allocation12 [shape = 'u8[32768]{0}', space=vmem, size = 0x8000, scoped, tag = 'input window, operand 10, single buffered']
    #allocation13 [shape = 'u8[8192]{0}', space=vmem, size = 0x2000, scoped, tag = 'output window, operand 0']
    %19 = vsyncpa [#allocation8], 0
    %20 = vsyncpa [#allocation11], 0
    %21 = vsyncpa [#allocation9], 0
    %s22 = scalar_lea.sflag [#allocation9], 1
    %23 = vsyncpa %s22, 0
    loop: start=0, step=1, limit=4
    $region2: #{_forward.1} parent=1 // loop_pre_header
      _
    $region3: #{_forward.1} parent=1 // loop_header
      %s25 = sphi 0, %s29
      %p26 = scmp.ge.s32.totalorder %s25, 4
      %s35 = sphi 0, %s37
      %s38 = sphi 0, %s35
      %s39 = sphi 0, %s38
      %s55 = sphi 0, %s39
      %s59 = sphi 0, %s59
      %s61 = sphi 0, %s59
      %s62 = sphi 0, %s61
      %s76 = sphi 0, %s62
      %s80 = sphi 0, %s80
      %s82 = sphi 0, %s80
      %s83 = sphi 0, %s82
      %s97 = sphi 0, %s83
      %s101 = sphi 0, %s101
      %s103 = sphi 0, %s101
      %s104 = sphi 0, %s103
      %s118 = sphi 0, %s104
      %s122 = sphi 0, %s122
      %s124 = sphi 0, %s122
      %s125 = sphi 0, %s124
      %s139 = sphi 0, %s125
      %s143 = sphi 0, %s143
      %s145 = sphi 0, %s143
      %s146 = sphi 0, %s145
      %s160 = sphi 0, %s146
      %s164 = sphi 0, %s164
      %s166 = sphi 0, %s164
      %s167 = sphi 0, %s166
      %s181 = sphi 0, %s167
      %s185 = sphi 0, %s185
      %s187 = sphi 0, %s185
      %s188 = sphi 0, %s187
      %s202 = sphi 0, %s188
      %s206 = sphi 0, %s206
      %s208 = sphi 0, %s206
      %s209 = sphi 0, %s208
      %s223 = sphi 0, %s209
      %s227 = sphi 0, %s227
      %s229 = sphi 0, %s227
      %s230 = sphi 0, %s229
      %s244 = sphi 0, %s230
      %s248 = sphi 0, %s248
      %s250 = sphi 0, %s248
      %s251 = sphi 0, %s250
      %s265 = sphi 0, %s251
      %s269 = sphi 0, %s269
      %s271 = sphi 0, %s269
      %s272 = sphi 0, %s271
      %s286 = sphi 0, %s272
      %s290 = sphi 0, %s290
      %s292 = sphi 0, %s290
      %s293 = sphi 0, %s292
      %s307 = sphi 0, %s293
      %s311 = sphi 0, %s311
      %s313 = sphi 0, %s311
      %s314 = sphi 0, %s313
      %s328 = sphi 0, %s314
      %s334 = sphi 0, %s336
      %s337 = sphi 0, %s334
      %s338 = sphi 0, %s337
      %s354 = sphi 0, %s338
    $region4: #{_forward.1} parent=1 // loop_header_branch
      %28 = sbr.rel (%p26) target = $region8
    $region5: #{_forward.1} parent=1 // loop_body
      %s30 = ssub.s32 %s25, 1
      %s31 = ssub.s32 %s25, 2
      %s32 = sadd.s32 %s25, 1
      %s33 = ssub.s32 %s25, %s32
      %p34 = scmp.eq.s32.totalorder %s33, 0
      %s36 = sadd.s32 %s35, 1
      %s37 = scalar_select %p34, %s35, %s36
      %p40 = pneg %p34
      %p41 = scmp.eq.s32.totalorder %s25, 1
      %p42 = por %p40, %p41
      %p43 = scmp.ne.s32.totalorder %s35, %s38
      %p44 = scmp.eq.s32.totalorder %s25, 0
      %p45 = por %p43, %p44
      %p46 = scmp.ne.s32.totalorder %s35, %s38
      %p47 = scmp.eq.s32.totalorder %s30, 1
      %p48 = por %p46, %p47
      %p49 = scmp.ne.s32.totalorder %s38, %s39
      %p50 = scmp.eq.s32.totalorder %s30, 0
      %p51 = por %p49, %p50
      %p52 = scmp.ne.s32.totalorder %s38, %s39
      %p53 = scmp.eq.s32.totalorder %s31, 1
      %p54 = por %p52, %p53
      %p56 = scmp.ne.s32.totalorder %s39, %s55
      %p57 = scmp.eq.s32.totalorder %s31, 0
      %p58 = por %p56, %p57
      %s60 = sadd.s32 %s59, 1
      %p63 = scmp.eq.s32.totalorder %s25, 1
      %p64 = scmp.ne.s32.totalorder %s59, %s61
      %p65 = scmp.eq.s32.totalorder %s25, 0
      %p66 = por %p64, %p65
      %p67 = scmp.ne.s32.totalorder %s59, %s61
      %p68 = scmp.eq.s32.totalorder %s30, 1
      %p69 = por %p67, %p68
      %p70 = scmp.ne.s32.totalorder %s61, %s62
      %p71 = scmp.eq.s32.totalorder %s30, 0
      %p72 = por %p70, %p71
      %p73 = scmp.ne.s32.totalorder %s61, %s62
      %p74 = scmp.eq.s32.totalorder %s31, 1
      %p75 = por %p73, %p74
      %p77 = scmp.ne.s32.totalorder %s62, %s76
      %p78 = scmp.eq.s32.totalorder %s31, 0
      %p79 = por %p77, %p78
      %s81 = sadd.s32 %s80, 1
      %p84 = scmp.eq.s32.totalorder %s25, 1
      %p85 = scmp.ne.s32.totalorder %s80, %s82
      %p86 = scmp.eq.s32.totalorder %s25, 0
      %p87 = por %p85, %p86
      %p88 = scmp.ne.s32.totalorder %s80, %s82
      %p89 = scmp.eq.s32.totalorder %s30, 1
      %p90 = por %p88, %p89
      %p91 = scmp.ne.s32.totalorder %s82, %s83
      %p92 = scmp.eq.s32.totalorder %s30, 0
      %p93 = por %p91, %p92
      %p94 = scmp.ne.s32.totalorder %s82, %s83
      %p95 = scmp.eq.s32.totalorder %s31, 1
      %p96 = por %p94, %p95
      %p98 = scmp.ne.s32.totalorder %s83, %s97
      %p99 = scmp.eq.s32.totalorder %s31, 0
      %p100 = por %p98, %p99
      %s102 = sadd.s32 %s101, 1
      %p105 = scmp.eq.s32.totalorder %s25, 1
      %p106 = scmp.ne.s32.totalorder %s101, %s103
      %p107 = scmp.eq.s32.totalorder %s25, 0
      %p108 = por %p106, %p107
      %p109 = scmp.ne.s32.totalorder %s101, %s103
      %p110 = scmp.eq.s32.totalorder %s30, 1
      %p111 = por %p109, %p110
      %p112 = scmp.ne.s32.totalorder %s103, %s104
      %p113 = scmp.eq.s32.totalorder %s30, 0
      %p114 = por %p112, %p113
      %p115 = scmp.ne.s32.totalorder %s103, %s104
      %p116 = scmp.eq.s32.totalorder %s31, 1
      %p117 = por %p115, %p116
      %p119 = scmp.ne.s32.totalorder %s104, %s118
      %p120 = scmp.eq.s32.totalorder %s31, 0
      %p121 = por %p119, %p120
      %s123 = sadd.s32 %s122, 1
      %p126 = scmp.eq.s32.totalorder %s25, 1
      %p127 = scmp.ne.s32.totalorder %s122, %s124
      %p128 = scmp.eq.s32.totalorder %s25, 0
      %p129 = por %p127, %p128
      %p130 = scmp.ne.s32.totalorder %s122, %s124
      %p131 = scmp.eq.s32.totalorder %s30, 1
      %p132 = por %p130, %p131
      %p133 = scmp.ne.s32.totalorder %s124, %s125
      %p134 = scmp.eq.s32.totalorder %s30, 0
      %p135 = por %p133, %p134
      %p136 = scmp.ne.s32.totalorder %s124, %s125
      %p137 = scmp.eq.s32.totalorder %s31, 1
      %p138 = por %p136, %p137
      %p140 = scmp.ne.s32.totalorder %s125, %s139
      %p141 = scmp.eq.s32.totalorder %s31, 0
      %p142 = por %p140, %p141
      %s144 = sadd.s32 %s143, 1
      %p147 = scmp.eq.s32.totalorder %s25, 1
      %p148 = scmp.ne.s32.totalorder %s143, %s145
      %p149 = scmp.eq.s32.totalorder %s25, 0
      %p150 = por %p148, %p149
      %p151 = scmp.ne.s32.totalorder %s143, %s145
      %p152 = scmp.eq.s32.totalorder %s30, 1
      %p153 = por %p151, %p152
      %p154 = scmp.ne.s32.totalorder %s145, %s146
      %p155 = scmp.eq.s32.totalorder %s30, 0
      %p156 = por %p154, %p155
      %p157 = scmp.ne.s32.totalorder %s145, %s146
      %p158 = scmp.eq.s32.totalorder %s31, 1
      %p159 = por %p157, %p158
      %p161 = scmp.ne.s32.totalorder %s146, %s160
      %p162 = scmp.eq.s32.totalorder %s31, 0
      %p163 = por %p161, %p162
      %s165 = sadd.s32 %s164, 1
      %p168 = scmp.eq.s32.totalorder %s25, 1
      %p169 = scmp.ne.s32.totalorder %s164, %s166
      %p170 = scmp.eq.s32.totalorder %s25, 0
      %p171 = por %p169, %p170
      %p172 = scmp.ne.s32.totalorder %s164, %s166
      %p173 = scmp.eq.s32.totalorder %s30, 1
      %p174 = por %p172, %p173
      %p175 = scmp.ne.s32.totalorder %s166, %s167
      %p176 = scmp.eq.s32.totalorder %s30, 0
      %p177 = por %p175, %p176
      %p178 = scmp.ne.s32.totalorder %s166, %s167
      %p179 = scmp.eq.s32.totalorder %s31, 1
      %p180 = por %p178, %p179
      %p182 = scmp.ne.s32.totalorder %s167, %s181
      %p183 = scmp.eq.s32.totalorder %s31, 0
      %p184 = por %p182, %p183
      %s186 = sadd.s32 %s185, 1
      %p189 = scmp.eq.s32.totalorder %s25, 1
      %p190 = scmp.ne.s32.totalorder %s185, %s187
      %p191 = scmp.eq.s32.totalorder %s25, 0
      %p192 = por %p190, %p191
      %p193 = scmp.ne.s32.totalorder %s185, %s187
      %p194 = scmp.eq.s32.totalorder %s30, 1
      %p195 = por %p193, %p194
      %p196 = scmp.ne.s32.totalorder %s187, %s188
      %p197 = scmp.eq.s32.totalorder %s30, 0
      %p198 = por %p196, %p197
      %p199 = scmp.ne.s32.totalorder %s187, %s188
      %p200 = scmp.eq.s32.totalorder %s31, 1
      %p201 = por %p199, %p200
      %p203 = scmp.ne.s32.totalorder %s188, %s202
      %p204 = scmp.eq.s32.totalorder %s31, 0
      %p205 = por %p203, %p204
      %s207 = sadd.s32 %s206, 1
      %p210 = scmp.eq.s32.totalorder %s25, 1
      %p211 = scmp.ne.s32.totalorder %s206, %s208
      %p212 = scmp.eq.s32.totalorder %s25, 0
      %p213 = por %p211, %p212
      %p214 = scmp.ne.s32.totalorder %s206, %s208
      %p215 = scmp.eq.s32.totalorder %s30, 1
      %p216 = por %p214, %p215
      %p217 = scmp.ne.s32.totalorder %s208, %s209
      %p218 = scmp.eq.s32.totalorder %s30, 0
      %p219 = por %p217, %p218
      %p220 = scmp.ne.s32.totalorder %s208, %s209
      %p221 = scmp.eq.s32.totalorder %s31, 1
      %p222 = por %p220, %p221
      %p224 = scmp.ne.s32.totalorder %s209, %s223
      %p225 = scmp.eq.s32.totalorder %s31, 0
      %p226 = por %p224, %p225
      %s228 = sadd.s32 %s227, 1
      %p231 = scmp.eq.s32.totalorder %s25, 1
      %p232 = scmp.ne.s32.totalorder %s227, %s229
      %p233 = scmp.eq.s32.totalorder %s25, 0
      %p234 = por %p232, %p233
      %p235 = scmp.ne.s32.totalorder %s227, %s229
      %p236 = scmp.eq.s32.totalorder %s30, 1
      %p237 = por %p235, %p236
      %p238 = scmp.ne.s32.totalorder %s229, %s230
      %p239 = scmp.eq.s32.totalorder %s30, 0
      %p240 = por %p238, %p239
      %p241 = scmp.ne.s32.totalorder %s229, %s230
      %p242 = scmp.eq.s32.totalorder %s31, 1
      %p243 = por %p241, %p242
      %p245 = scmp.ne.s32.totalorder %s230, %s244
      %p246 = scmp.eq.s32.totalorder %s31, 0
      %p247 = por %p245, %p246
      %s249 = sadd.s32 %s248, 1
      %p252 = scmp.eq.s32.totalorder %s25, 1
      %p253 = scmp.ne.s32.totalorder %s248, %s250
      %p254 = scmp.eq.s32.totalorder %s25, 0
      %p255 = por %p253, %p254
      %p256 = scmp.ne.s32.totalorder %s248, %s250
      %p257 = scmp.eq.s32.totalorder %s30, 1
      %p258 = por %p256, %p257
      %p259 = scmp.ne.s32.totalorder %s250, %s251
      %p260 = scmp.eq.s32.totalorder %s30, 0
      %p261 = por %p259, %p260
      %p262 = scmp.ne.s32.totalorder %s250, %s251
      %p263 = scmp.eq.s32.totalorder %s31, 1
      %p264 = por %p262, %p263
      %p266 = scmp.ne.s32.totalorder %s251, %s265
      %p267 = scmp.eq.s32.totalorder %s31, 0
      %p268 = por %p266, %p267
      %s270 = sadd.s32 %s269, 1
      %p273 = scmp.eq.s32.totalorder %s25, 1
      %p274 = scmp.ne.s32.totalorder %s269, %s271
      %p275 = scmp.eq.s32.totalorder %s25, 0
      %p276 = por %p274, %p275
      %p277 = scmp.ne.s32.totalorder %s269, %s271
      %p278 = scmp.eq.s32.totalorder %s30, 1
      %p279 = por %p277, %p278
      %p280 = scmp.ne.s32.totalorder %s271, %s272
      %p281 = scmp.eq.s32.totalorder %s30, 0
      %p282 = por %p280, %p281
      %p283 = scmp.ne.s32.totalorder %s271, %s272
      %p284 = scmp.eq.s32.totalorder %s31, 1
      %p285 = por %p283, %p284
      %p287 = scmp.ne.s32.totalorder %s272, %s286
      %p288 = scmp.eq.s32.totalorder %s31, 0
      %p289 = por %p287, %p288
      %s291 = sadd.s32 %s290, 1
      %p294 = scmp.eq.s32.totalorder %s25, 1
      %p295 = scmp.ne.s32.totalorder %s290, %s292
      %p296 = scmp.eq.s32.totalorder %s25, 0
      %p297 = por %p295, %p296
      %p298 = scmp.ne.s32.totalorder %s290, %s292
      %p299 = scmp.eq.s32.totalorder %s30, 1
      %p300 = por %p298, %p299
      %p301 = scmp.ne.s32.totalorder %s292, %s293
      %p302 = scmp.eq.s32.totalorder %s30, 0
      %p303 = por %p301, %p302
      %p304 = scmp.ne.s32.totalorder %s292, %s293
      %p305 = scmp.eq.s32.totalorder %s31, 1
      %p306 = por %p304, %p305
      %p308 = scmp.ne.s32.totalorder %s293, %s307
      %p309 = scmp.eq.s32.totalorder %s31, 0
      %p310 = por %p308, %p309
      %s312 = sadd.s32 %s311, 1
      %p315 = scmp.eq.s32.totalorder %s25, 1
      %p316 = scmp.ne.s32.totalorder %s311, %s313
      %p317 = scmp.eq.s32.totalorder %s25, 0
      %p318 = por %p316, %p317
      %p319 = scmp.ne.s32.totalorder %s311, %s313
      %p320 = scmp.eq.s32.totalorder %s30, 1
      %p321 = por %p319, %p320
      %p322 = scmp.ne.s32.totalorder %s313, %s314
      %p323 = scmp.eq.s32.totalorder %s30, 0
      %p324 = por %p322, %p323
      %p325 = scmp.ne.s32.totalorder %s313, %s314
      %p326 = scmp.eq.s32.totalorder %s31, 1
      %p327 = por %p325, %p326
      %p329 = scmp.ne.s32.totalorder %s314, %s328
      %p330 = scmp.eq.s32.totalorder %s31, 0
      %p331 = por %p329, %p330
      %s332 = ssub.s32 %s25, %s32
      %p333 = scmp.eq.s32.totalorder %s332, 0
      %s335 = sadd.s32 %s334, 1
      %s336 = scalar_select %p333, %s334, %s335
      %p339 = pneg %p333
      %p340 = scmp.eq.s32.totalorder %s25, 1
      %p341 = por %p339, %p340
      %p342 = scmp.ne.s32.totalorder %s334, %s337
      %p343 = scmp.eq.s32.totalorder %s25, 0
      %p344 = por %p342, %p343
      %p345 = scmp.ne.s32.totalorder %s334, %s337
      %p346 = scmp.eq.s32.totalorder %s30, 1
      %p347 = por %p345, %p346
      %p348 = scmp.ne.s32.totalorder %s337, %s338
      %p349 = scmp.eq.s32.totalorder %s30, 0
      %p350 = por %p348, %p349
      %p351 = scmp.ne.s32.totalorder %s337, %s338
      %p352 = scmp.eq.s32.totalorder %s31, 1
      %p353 = por %p351, %p352
      %p355 = scmp.ne.s32.totalorder %s338, %s354
      %p356 = scmp.eq.s32.totalorder %s31, 0
      %p357 = por %p355, %p356
      %p358 = scmp.le.s32.totalorder 1, %s25
      %p359 = scmp.lt.s32.totalorder %s25, 3
      %p360 = pnand %p358, %p359
      %p361 = pneg %p360
      // Predicated region
      $region9: #{_forward.1} parent=5 // pred_check
        _
      $region10: #{_forward.1} parent=5 // pred_check_branch
        %363 = sbr.rel (%p360) target = $region12
      $region11: #{_forward.1} parent=5 // pred_region
        %s364 = ssub.s32 %s25, 1
        // Predicated region
        $region13: #{_forward.1} parent=11 // pred_check
          %p365 = pneg %p72
        $region14: #{_forward.1} parent=11 // pred_check_branch
          %367 = sbr.rel (%p365) target = $region16
        $region15: #{_forward.1} parent=11 // pred_region
          _
        $region16: #{_forward.1} parent=11 // pred_fallthru
          _
        // Predicated region
        $region17: #{_forward.1} parent=11 // pred_check
          %p368 = pneg %p93
        $region18: #{_forward.1} parent=11 // pred_check_branch
          %370 = sbr.rel (%p368) target = $region20
        $region19: #{_forward.1} parent=11 // pred_region
          _
        $region20: #{_forward.1} parent=11 // pred_fallthru
          _
        // Predicated region
        $region21: #{_forward.1} parent=11 // pred_check
          %p371 = pneg %p114
        $region22: #{_forward.1} parent=11 // pred_check_branch
          %373 = sbr.rel (%p371) target = $region24
        $region23: #{_forward.1} parent=11 // pred_region
          _
        $region24: #{_forward.1} parent=11 // pred_fallthru
          _
        // Predicated region
        $region25: #{_forward.1} parent=11 // pred_check
          %p374 = pneg %p135
        $region26: #{_forward.1} parent=11 // pred_check_branch
          %376 = sbr.rel (%p374) target = $region28
        $region27: #{_forward.1} parent=11 // pred_region
          %s378 = ssub.s32 3072, 3072
          %379 = vsyncadd [#allocation8], %s378
          %s380 = sshll.u32 [#allocation7], 4
          %s381 = int_to_ptr.vmem [resolvable:$true] %s380
          %386 = dma.hbm_to_vmem [thread:$0]  %s4, 3072, %s381, [#allocation8], 192, 192, 12
        $region28: #{_forward.1} parent=11 // pred_fallthru
          _
        // Predicated region
        $region29: #{_forward.1} parent=11 // pred_check
          %p387 = pneg %p156
        $region30: #{_forward.1} parent=11 // pred_check_branch
          %389 = sbr.rel (%p387) target = $region32
        $region31: #{_forward.1} parent=11 // pred_region
          _
        $region32: #{_forward.1} parent=11 // pred_fallthru
          _
        // Predicated region
        $region33: #{_forward.1} parent=11 // pred_check
          %p390 = pneg %p177
        $region34: #{_forward.1} parent=11 // pred_check_branch
          %392 = sbr.rel (%p390) target = $region36
        $region35: #{_forward.1} parent=11 // pred_region
          %s394 = ssub.s32 1024, 1024
          %395 = vsyncadd [#allocation11], %s394
          %s396 = sshll.u32 [#allocation10], 4
          %s397 = int_to_ptr.vmem [resolvable:$true] %s396
          %402 = dma.hbm_to_vmem [thread:$0]  %s6, 1024, %s397, [#allocation11], 64, 64, 4
        $region36: #{_forward.1} parent=11 // pred_fallthru
          _
        // Predicated region
        $region37: #{_forward.1} parent=11 // pred_check
          %p403 = pneg %p198
        $region38: #{_forward.1} parent=11 // pred_check_branch
          %405 = sbr.rel (%p403) target = $region40
        $region39: #{_forward.1} parent=11 // pred_region
          _
        $region40: #{_forward.1} parent=11 // pred_fallthru
          _
        // Predicated region
        $region41: #{_forward.1} parent=11 // pred_check
          %p406 = pneg %p219
        $region42: #{_forward.1} parent=11 // pred_check_branch
          %408 = sbr.rel (%p406) target = $region44
        $region43: #{_forward.1} parent=11 // pred_region
          _
        $region44: #{_forward.1} parent=11 // pred_fallthru
          _
        // Predicated region
        $region45: #{_forward.1} parent=11 // pred_check
          %p409 = pneg %p240
        $region46: #{_forward.1} parent=11 // pred_check_branch
          %411 = sbr.rel (%p409) target = $region48
        $region47: #{_forward.1} parent=11 // pred_region
          _
        $region48: #{_forward.1} parent=11 // pred_fallthru
          _
        // Predicated region
        $region49: #{_forward.1} parent=11 // pred_check
          %p412 = pneg %p261
        $region50: #{_forward.1} parent=11 // pred_check_branch
          %414 = sbr.rel (%p412) target = $region52
        $region51: #{_forward.1} parent=11 // pred_region
          %s416 = ssub.s32 1024, 1024
          %417 = vsyncadd [#allocation11], %s416
          %s418 = sshll.u32 [#allocation12], 4
          %s419 = int_to_ptr.vmem [resolvable:$true] %s418
          %424 = dma.hbm_to_vmem [thread:$0]  %s10, 1024, %s419, [#allocation11], 64, 64, 4
        $region52: #{_forward.1} parent=11 // pred_fallthru
          _
        // Predicated region
        $region53: #{_forward.1} parent=11 // pred_check
          %p425 = pneg %p282
        $region54: #{_forward.1} parent=11 // pred_check_branch
          %427 = sbr.rel (%p425) target = $region56
        $region55: #{_forward.1} parent=11 // pred_region
          _
        $region56: #{_forward.1} parent=11 // pred_fallthru
          _
        // Predicated region
        $region57: #{_forward.1} parent=11 // pred_check
          %p428 = pneg %p303
        $region58: #{_forward.1} parent=11 // pred_check_branch
          %430 = sbr.rel (%p428) target = $region60
        $region59: #{_forward.1} parent=11 // pred_region
          _
        $region60: #{_forward.1} parent=11 // pred_fallthru
          _
        // Predicated region
        $region61: #{_forward.1} parent=11 // pred_check
          %p431 = pneg %p324
        $region62: #{_forward.1} parent=11 // pred_check_branch
          %433 = sbr.rel (%p431) target = $region64
        $region63: #{_forward.1} parent=11 // pred_region
          _
        $region64: #{_forward.1} parent=11 // pred_fallthru
          _
      $region12: #{_forward.1} parent=5 // pred_fallthru
        _
      %p434 = scmp.lt.s32.totalorder %s25, 2
      // Predicated region
      $region65: #{_forward.1} parent=5 // pred_check
        %p435 = pneg %p434
      $region66: #{_forward.1} parent=5 // pred_check_branch
        %437 = sbr.rel (%p435) target = $region68
      $region67: #{_forward.1} parent=5 // pred_region
        // Predicated region
        $region69: #{_forward.1} parent=67 // pred_check
          %p438 = pneg %p45
        $region70: #{_forward.1} parent=67 // pred_check_branch
          %440 = sbr.rel (%p438) target = $region72
        $region71: #{_forward.1} parent=67 // pred_region
          %p441 = scmp.lt.s32.totalorder %s25, 1
          %s442 = scalar_select %p441, %s25, 1
          %s443 = smul.addr %s442, 4
          %s444 = scalar_lea.vmem %s0, %s443
        $region72: #{_forward.1} parent=67 // pred_fallthru
          _
      $region68: #{_forward.1} parent=5 // pred_fallthru
        _
      %p445 = scmp.le.s32.totalorder 1, %s25
      %p446 = scmp.lt.s32.totalorder %s25, 3
      %p447 = pnand %p445, %p446
      %p448 = pneg %p447
      // Predicated region
      $region73: #{_forward.1} parent=5 // pred_check
        _
      $region74: #{_forward.1} parent=5 // pred_check_branch
        %450 = sbr.rel (%p447) target = $region76
      $region75: #{_forward.1} parent=5 // pred_region
        %s451 = ssub.s32 %s25, 1
        // Predicated region
        $region77: #{_forward.1} parent=75 // pred_check
          %p452 = pneg %p135
        $region78: #{_forward.1} parent=75 // pred_check_branch
          %454 = sbr.rel (%p452) target = $region80
        $region79: #{_forward.1} parent=75 // pred_region
          %455 = dma.done [#allocation8], 3072
        $region80: #{_forward.1} parent=75 // pred_fallthru
          _
        // Predicated region
        $region81: #{_forward.1} parent=75 // pred_check
          %p456 = pneg %p177
        $region82: #{_forward.1} parent=75 // pred_check_branch
          %458 = sbr.rel (%p456) target = $region84
        $region83: #{_forward.1} parent=75 // pred_region
          %459 = dma.done [#allocation11], 1024
        $region84: #{_forward.1} parent=75 // pred_fallthru
          _
        // Predicated region
        $region85: #{_forward.1} parent=75 // pred_check
          %p460 = pneg %p261
        $region86: #{_forward.1} parent=75 // pred_check_branch
          %462 = sbr.rel (%p460) target = $region88
        $region87: #{_forward.1} parent=75 // pred_region
          %463 = dma.done [#allocation11], 1024
        $region88: #{_forward.1} parent=75 // pred_fallthru
          _
        %p464 = scmp.lt.s32.totalorder %s30, 1
        %s465 = scalar_select %p464, %s30, 1
        %s466 = smul.addr %s465, 4
        %s467 = scalar_lea.vmem %s0, %s466
        %p468 = pneg %p51
        %p469 = pneg %p48
        %p470 = pneg %p72
        %p471 = pneg %p69
        %p472 = pneg %p93
        %p473 = pneg %p90
        %p474 = pneg %p114
        %p475 = pneg %p111
        %p476 = pneg %p135
        %p477 = pneg %p132
        %p478 = pneg %p156
        %p479 = pneg %p153
        %p480 = pneg %p177
        %p481 = pneg %p174
        %p482 = pneg %p198
        %p483 = pneg %p195
        %p484 = pneg %p219
        %p485 = pneg %p216
        %p486 = pneg %p240
        %p487 = pneg %p237
        %p488 = pneg %p261
        %p489 = pneg %p258
        %p490 = pneg %p282
        %p491 = pneg %p279
        %p492 = pneg %p303
        %p493 = pneg %p300
        %p494 = pneg %p324
        %p495 = pneg %p321
        %p496 = pneg %p350
        %p497 = pneg %p347
        %s498 = sand.u32 %s337, 1
        %s499 = scalar_lea.sflag [#allocation9], %s498
        %s500 = sand.u32 %s337, 1
        %s501 = smul.addr %s500, 8
        %s502 = scalar_lea.vmem [#allocation13], %s501
        %p503 = scmp.lt.s32.totalorder %s30, 1
        %s504 = scalar_select %p503, %s30, 1
        %s505 = smul.addr %s504, 4
        %s506 = scalar_lea.vmem %s0, %s505
        %v508 = vld [vmem:[%s506] sm:$0xf]
        %v509 = vld [vmem:[%s1] sm:$0xf]
        %v510 = vld [vmem:[%s1 + $0x4] sm:$0xf]
        %v511 = vld [vmem:[%s2] sm:$0x1]
        %v513 = vlaneseq
        %v514 = vshrl.u32 %v513, 7
        %v515 = vsub.s32 0, %v514
        %v516 = vrot.slane %v511, %v515
        %v520 = vunpack.c.l.b16 %v509
        %v521 = vunpack.c.l.b16 %v510
        %v522 = vpack.c.b16 %v521, %v520
        %vm524 = vcmask 130048
        %v526 = vsel %vm524, %v508, 0
        %528 = vmatprep.subr.bf16.mxu0 0
        %529 = vmatpush1.bf16.msra.mxu0 %v522
        %530 = vmatprep.subr.bf16.mxu0 0
        %531 = vmatpush1.bf16.msra.mxu0 0
        %532 = vmatprep.subr.bf16.mxu0 0
        %533 = vmatpush1.bf16.msra.mxu0 0
        %534 = vmatprep.subr.bf16.mxu0 0
        %535 = vmatpush1.bf16.msra.mxu0 0
        %536 = vmatprep.subr.bf16.mxu0 0
        %537 = vmatpush1.bf16.msra.mxu0 0
        %538 = vmatprep.subr.bf16.mxu0 0
        %539 = vmatpush1.bf16.msra.mxu0 0
        %540 = vmatprep.subr.bf16.mxu0 0
        %541 = vmatpush1.bf16.msra.mxu0 0
        %542 = vmatprep.subr.bf16.mxu0 0
        %543 = vmatpush1.bf16.msra.mxu0 0
        %544 = vmatprep.subr.bf16.mxu0 0
        %545 = vmatpush1.bf16.msra.mxu0 0
        %546 = vmatprep.subr.bf16.mxu0 0
        %547 = vmatpush1.bf16.msra.mxu0 0
        %548 = vmatprep.subr.bf16.mxu0 0
        %549 = vmatpush1.bf16.msra.mxu0 0
        %550 = vmatprep.subr.bf16.mxu0 0
        %551 = vmatpush1.bf16.msra.mxu0 0
        %552 = vmatprep.subr.bf16.mxu0 0
        %553 = vmatpush1.bf16.msra.mxu0 0
        %554 = vmatprep.subr.bf16.mxu0 0
        %555 = vmatpush1.bf16.msra.mxu0 0
        %556 = vmatprep.subr.bf16.mxu0 0
        %557 = vmatpush1.bf16.msra.mxu0 0
        %558 = vmatprep.subr.bf16.mxu0 0
        %559 = vmatpush1.bf16.msra.mxu0 0
        %560 = vmatprep.mubr.bf16.mxu0 0
        %561 = vmatmul.mubr.bf16.gmra.mrb[0].mxu0 %v526
        %v562 = vpop.f32.mrb[0].mxu0
        %v563 = vadd.f32 %v516, %v562
        %v564 = vpop.f32.mrb[0].mxu0
        %v565 = vpop.f32.mrb[0].mxu0
        %v566 = vpop.f32.mrb[0].mxu0
        %567 = vdwg.mxu0
        %v568 = vtanh.pop %v563
        %v569 = vld [vmem:[%s3] sm:$0xff]
        %v570 = vadd.f32 %v568, %v569
        %571 = vst [vmem:[#allocation5] sm:$0xff] %v570
        %v572 = vpack.c.bf16 %v570, %v570
        %v573 = vld [vmem:[#allocation7] sm:$0xff]
        %v574 = vld [vmem:[#allocation7 + $0x8] sm:$0xf]
        %v575 = vld [vmem:[#allocation7 + $0xc] sm:$0xff]
        %v576 = vld [vmem:[#allocation7 + $0x14] sm:$0xf]
        %v577 = vld [vmem:[#allocation7 + $0x18] sm:$0xff]
        %v578 = vld [vmem:[#allocation7 + $0x20] sm:$0xf]
        %v579 = vld [vmem:[#allocation7 + $0x24] sm:$0xff]
        %v580 = vld [vmem:[#allocation7 + $0x2c] sm:$0xf]
        %v581 = vld [vmem:[#allocation7 + $0x30] sm:$0xff]
        %v582 = vld [vmem:[#allocation7 + $0x38] sm:$0xf]
        %v583 = vld [vmem:[#allocation7 + $0x3c] sm:$0xff]
        %v584 = vld [vmem:[#allocation7 + $0x44] sm:$0xf]
        %v585 = vld [vmem:[#allocation7 + $0x48] sm:$0xff]
        %v586 = vld [vmem:[#allocation7 + $0x50] sm:$0xf]
        %v587 = vld [vmem:[#allocation7 + $0x54] sm:$0xff]
        %v588 = vld [vmem:[#allocation7 + $0x5c] sm:$0xf]
        %v589 = vld [vmem:[#allocation7 + $0x60] sm:$0xff]
        %v590 = vld [vmem:[#allocation7 + $0x68] sm:$0xf]
        %v591 = vld [vmem:[#allocation7 + $0x6c] sm:$0xff]
        %v592 = vld [vmem:[#allocation7 + $0x74] sm:$0xf]
        %v593 = vld [vmem:[#allocation7 + $0x78] sm:$0xff]
        %v594 = vld [vmem:[#allocation7 + $0x80] sm:$0xf]
        %v595 = vld [vmem:[#allocation7 + $0x84] sm:$0xff]
        %v596 = vld [vmem:[#allocation7 + $0x8c] sm:$0xf]
        %v597 = vld [vmem:[#allocation7 + $0x90] sm:$0xff]
        %v598 = vld [vmem:[#allocation7 + $0x98] sm:$0xf]
        %v599 = vld [vmem:[#allocation7 + $0x9c] sm:$0xff]
        %v600 = vld [vmem:[#allocation7 + $0xa4] sm:$0xf]
        %v601 = vld [vmem:[#allocation7 + $0xa8] sm:$0xff]
        %v602 = vld [vmem:[#allocation7 + $0xb0] sm:$0xf]
        %v603 = vld [vmem:[#allocation7 + $0xb4] sm:$0xff]
        %v604 = vld [vmem:[#allocation7 + $0xbc] sm:$0xf]
        %v605 = vld [vmem:[%s5] sm:$0x7]
        %v607 = vlaneseq
        %v608 = vshrl.u32 %v607, 7
        %v609 = vsub.s32 0, %v608
        %v610 = vrot.slane %v605, %v609
        %v611 = vlaneseq
        %v612 = vshrl.u32 %v611, 7
        %v613 = vsub.s32 1, %v612
        %v614 = vrot.slane %v605, %v613
        %v615 = vlaneseq
        %v616 = vshrl.u32 %v615, 7
        %v617 = vsub.s32 2, %v616
        %v618 = vrot.slane %v605, %v617
        %v654 = vunpack.c.l.b16 %v573
        %v655 = vunpack.c.h.b16 %v573
        %v656 = vunpack.c.l.b16 %v574
        %v657 = vunpack.c.l.b16 %v575
        %v658 = vunpack.c.h.b16 %v575
        %v659 = vunpack.c.l.b16 %v576
        %v660 = vunpack.c.l.b16 %v577
        %v661 = vunpack.c.h.b16 %v577
        %v662 = vunpack.c.l.b16 %v578
        %v663 = vunpack.c.l.b16 %v579
        %v664 = vunpack.c.h.b16 %v579
        %v665 = vunpack.c.l.b16 %v580
        %v666 = vunpack.c.l.b16 %v581
        %v667 = vunpack.c.h.b16 %v581
        %v668 = vunpack.c.l.b16 %v582
        %v669 = vunpack.c.l.b16 %v583
        %v670 = vunpack.c.h.b16 %v583
        %v671 = vunpack.c.l.b16 %v584
        %v672 = vunpack.c.l.b16 %v585
        %v673 = vunpack.c.h.b16 %v585
        %v674 = vunpack.c.l.b16 %v586
        %v675 = vunpack.c.l.b16 %v587
        %v676 = vunpack.c.h.b16 %v587
        %v677 = vunpack.c.l.b16 %v588
        %v678 = vunpack.c.l.b16 %v589
        %v679 = vunpack.c.h.b16 %v589
        %v680 = vunpack.c.l.b16 %v590
        %v681 = vunpack.c.l.b16 %v591
        %v682 = vunpack.c.h.b16 %v591
        %v683 = vunpack.c.l.b16 %v592
        %v684 = vunpack.c.l.b16 %v593
        %v685 = vunpack.c.h.b16 %v593
        %v686 = vunpack.c.l.b16 %v594
        %v687 = vunpack.c.l.b16 %v595
        %v688 = vunpack.c.h.b16 %v595
        %v689 = vunpack.c.l.b16 %v596
        %v690 = vunpack.c.l.b16 %v597
        %v691 = vunpack.c.h.b16 %v597
        %v692 = vunpack.c.l.b16 %v598
        %v693 = vunpack.c.l.b16 %v599
        %v694 = vunpack.c.h.b16 %v599
        %v695 = vunpack.c.l.b16 %v600
        %v696 = vunpack.c.l.b16 %v601
        %v697 = vunpack.c.h.b16 %v601
        %v698 = vunpack.c.l.b16 %v602
        %v699 = vunpack.c.l.b16 %v603
        %v700 = vunpack.c.h.b16 %v603
        %v701 = vunpack.c.l.b16 %v604
        %v702 = vpack.c.b16 %v657, %v654
        %v703 = vpack.c.b16 %v658, %v655
        %v704 = vpack.c.b16 %v659, %v656
        %v705 = vpack.c.b16 %v663, %v660
        %v706 = vpack.c.b16 %v664, %v661
        %v707 = vpack.c.b16 %v665, %v662
        %v708 = vpack.c.b16 %v669, %v666
        %v709 = vpack.c.b16 %v670, %v667
        %v710 = vpack.c.b16 %v671, %v668
        %v711 = vpack.c.b16 %v675, %v672
        %v712 = vpack.c.b16 %v676, %v673
        %v713 = vpack.c.b16 %v677, %v674
        %v714 = vpack.c.b16 %v681, %v678
        %v715 = vpack.c.b16 %v682, %v679
        %v716 = vpack.c.b16 %v683, %v680
        %v717 = vpack.c.b16 %v687, %v684
        %v718 = vpack.c.b16 %v688, %v685
        %v719 = vpack.c.b16 %v689, %v686
        %v720 = vpack.c.b16 %v693, %v690
        %v721 = vpack.c.b16 %v694, %v691
        %v722 = vpack.c.b16 %v695, %v692
        %v723 = vpack.c.b16 %v699, %v696
        %v724 = vpack.c.b16 %v700, %v697
        %v725 = vpack.c.b16 %v701, %v698
        %750 = vmatprep.subr.bf16.mxu0 %v703
        %751 = vmatpush1.bf16.msra.mxu0 %v702
        %752 = vmatprep.subr.bf16.mxu0 %v706
        %753 = vmatpush1.bf16.msra.mxu0 %v705
        %754 = vmatprep.subr.bf16.mxu0 %v709
        %755 = vmatpush1.bf16.msra.mxu0 %v708
        %756 = vmatprep.subr.bf16.mxu0 %v712
        %757 = vmatpush1.bf16.msra.mxu0 %v711
        %758 = vmatprep.subr.bf16.mxu0 %v715
        %759 = vmatpush1.bf16.msra.mxu0 %v714
        %760 = vmatprep.subr.bf16.mxu0 %v718
        %761 = vmatpush1.bf16.msra.mxu0 %v717
        %762 = vmatprep.subr.bf16.mxu0 %v721
        %763 = vmatpush1.bf16.msra.mxu0 %v720
        %764 = vmatprep.subr.bf16.mxu0 %v724
        %765 = vmatpush1.bf16.msra.mxu0 %v723
        %766 = vmatprep.subr.bf16.mxu0 0
        %767 = vmatpush1.bf16.msra.mxu0 0
        %768 = vmatprep.subr.bf16.mxu0 0
        %769 = vmatpush1.bf16.msra.mxu0 0
        %770 = vmatprep.subr.bf16.mxu0 0
        %771 = vmatpush1.bf16.msra.mxu0 0
        %772 = vmatprep.subr.bf16.mxu0 0
        %773 = vmatpush1.bf16.msra.mxu0 0
        %774 = vmatprep.subr.bf16.mxu0 0
        %775 = vmatpush1.bf16.msra.mxu0 0
        %776 = vmatprep.subr.bf16.mxu0 0
        %777 = vmatpush1.bf16.msra.mxu0 0
        %778 = vmatprep.subr.bf16.mxu0 0
        %779 = vmatpush1.bf16.msra.mxu0 0
        %780 = vmatprep.subr.bf16.mxu0 0
        %781 = vmatpush1.bf16.msra.mxu0 0
        %782 = vmatprep.mubr.bf16.mxu0 0
        %783 = vmatmul.mubr.bf16.gmra.mrb[0].mxu0 %v572
        %v784 = vpop.f32.mrb[0].mxu0
        %v785 = vadd.f32 %v610, %v784
        %v786 = vpop.f32.mrb[0].mxu0
        %v787 = vadd.f32 %v614, %v786
        %v788 = vpop.f32.mrb[0].mxu0
        %v789 = vpop.f32.mrb[0].mxu0
        %790 = vdwg.mxu0
        %791 = vmatprep.subr.bf16.mxu0 0
        %792 = vmatpush1.bf16.msra.mxu0 %v704
        %793 = vmatprep.subr.bf16.mxu0 0
        %794 = vmatpush1.bf16.msra.mxu0 %v707
        %795 = vmatprep.subr.bf16.mxu0 0
        %796 = vmatpush1.bf16.msra.mxu0 %v710
        %797 = vmatprep.subr.bf16.mxu0 0
        %798 = vmatpush1.bf16.msra.mxu0 %v713
        %799 = vmatprep.subr.bf16.mxu0 0
        %800 = vmatpush1.bf16.msra.mxu0 %v716
        %801 = vmatprep.subr.bf16.mxu0 0
        %802 = vmatpush1.bf16.msra.mxu0 %v719
        %803 = vmatprep.subr.bf16.mxu0 0
        %804 = vmatpush1.bf16.msra.mxu0 %v722
        %805 = vmatprep.subr.bf16.mxu0 0
        %806 = vmatpush1.bf16.msra.mxu0 %v725
        %807 = vmatprep.subr.bf16.mxu0 0
        %808 = vmatpush1.bf16.msra.mxu0 0
        %809 = vmatprep.subr.bf16.mxu0 0
        %810 = vmatpush1.bf16.msra.mxu0 0
        %811 = vmatprep.subr.bf16.mxu0 0
        %812 = vmatpush1.bf16.msra.mxu0 0
        %813 = vmatprep.subr.bf16.mxu0 0
        %814 = vmatpush1.bf16.msra.mxu0 0
        %815 = vmatprep.subr.bf16.mxu0 0
        %816 = vmatpush1.bf16.msra.mxu0 0
        %817 = vmatprep.subr.bf16.mxu0 0
        %818 = vmatpush1.bf16.msra.mxu0 0
        %819 = vmatprep.subr.bf16.mxu0 0
        %820 = vmatpush1.bf16.msra.mxu0 0
        %821 = vmatprep.subr.bf16.mxu0 0
        %822 = vmatpush1.bf16.msra.mxu0 0
        %823 = vmatprep.mubr.bf16.mxu0 0
        %824 = vmatmul.mubr.bf16.gmra.mrb[0].mxu0 %v572
        %v825 = vpop.f32.mrb[0].mxu0
        %v826 = vadd.f32 %v618, %v825
        %v827 = vpop.f32.mrb[0].mxu0
        %v828 = vpop.f32.mrb[0].mxu0
        %v829 = vpop.f32.mrb[0].mxu0
        %830 = vdwg.mxu0
        %v831 = vtanh.pop %v785
        %v832 = vtanh.pop %v787
        %v833 = vtanh.pop %v826
        %v834 = vmul.f32 %v831, 0.17677669
        %v835 = vpack.c.bf16 %v834, %v834
        %836 = vst [vmem:[#allocation2] sm:$0xf] %v835
        %v837 = vpack.c.bf16 %v832, %v832
        %838 = vst [vmem:[#allocation3] sm:$0xf] %v837
        %v839 = vpack.c.bf16 %v833, %v833
        %840 = vst [vmem:[#allocation4] sm:$0xf] %v839
        %v841 = vlaneseq
        %v842 = vshrl.u32 %v841, 7
        %v843 = vlaneseq
        %v844 = vand.u32 %v843, 127
        %v845 = vld [vmem:[#allocation2] sm:$0xf]
        %v846 = vld [vmem:[#allocation3] sm:$0xf]
        %v847 = vld [vmem:[#allocation4] sm:$0xf]
        %848 = vmatprep.subr.bf16.mxu0 0
        %849 = vmatpush1.bf16.xpose.msra.mxu0 %v846
        %850 = vmatprep.subr.bf16.mxu0 0
        %851 = vmatpush1.bf16.xpose.msra.mxu0 0
        %852 = vmatprep.subr.bf16.mxu0 0
        %853 = vmatpush1.bf16.xpose.msra.mxu0 0
        %854 = vmatprep.subr.bf16.mxu0 0
        %855 = vmatpush1.bf16.xpose.msra.mxu0 0
        %856 = vmatprep.subr.bf16.mxu0 0
        %857 = vmatpush1.bf16.xpose.msra.mxu0 0
        %858 = vmatprep.subr.bf16.mxu0 0
        %859 = vmatpush1.bf16.xpose.msra.mxu0 0
        %860 = vmatprep.subr.bf16.mxu0 0
        %861 = vmatpush1.bf16.xpose.msra.mxu0 0
        %862 = vmatprep.subr.bf16.mxu0 0
        %863 = vmatpush1.bf16.xpose.msra.mxu0 0
        %864 = vmatprep.subr.bf16.mxu0 0
        %865 = vmatpush1.bf16.xpose.msra.mxu0 0
        %866 = vmatprep.subr.bf16.mxu0 0
        %867 = vmatpush1.bf16.xpose.msra.mxu0 0
        %868 = vmatprep.subr.bf16.mxu0 0
        %869 = vmatpush1.bf16.xpose.msra.mxu0 0
        %870 = vmatprep.subr.bf16.mxu0 0
        %871 = vmatpush1.bf16.xpose.msra.mxu0 0
        %872 = vmatprep.subr.bf16.mxu0 0
        %873 = vmatpush1.bf16.xpose.msra.mxu0 0
        %874 = vmatprep.subr.bf16.mxu0 0
        %875 = vmatpush1.bf16.xpose.msra.mxu0 0
        %876 = vmatprep.subr.bf16.mxu0 0
        %877 = vmatpush1.bf16.xpose.msra.mxu0 0
        %878 = vmatprep.subr.bf16.mxu0 0
        %879 = vmatpush1.bf16.xpose.msra.mxu0 0
        %880 = vmatprep.mubr.bf16.mxu0 0
        %881 = vmatmul.mubr.bf16.gmra.mrb[0].mxu0 %v845
        %v882 = vpop.f32.mrb[0].mxu0
        %v883 = vadd.f32 0.0, %v882
        %v884 = vpop.f32.mrb[0].mxu0
        %v885 = vpop.f32.mrb[0].mxu0
        %v886 = vpop.f32.mrb[0].mxu0
        %887 = vdwg.mxu0
        %v888 = vstv 0
        %v889 = vadd.s32 %v844, %v888
        %vm890 = vcmp.ge.s32.totalorder %v842, %v889
        %v891 = vmul.f32 %v883, 1.442695
        %v892 = vpow.pop %v891
        %v893 = vsel %vm890, %v892, 0.0
        %vm894 = vcmask 64512
        %v895 = vsel %vm894, %v893, 0.0
        %896 = vadd.xlane.f32.xlu0 %v895
        %v897 = vpop.xlane.xlu0 %896
        %v898 = vadd.f32 %v897, 0.0
        %v899 = vpack.c.bf16 %v893, %v893
        %v901 = vsel %vm894, %v899, 0
        %vm903 = vcmask 1043456
        %v905 = vsel %vm903, %v847, 0
        %907 = vmatprep.subr.bf16.mxu0 0
        %908 = vmatpush1.bf16.msra.mxu0 %v905
        %909 = vmatprep.subr.bf16.mxu0 0
        %910 = vmatpush1.bf16.msra.mxu0 0
        %911 = vmatprep.subr.bf16.mxu0 0
        %912 = vmatpush1.bf16.msra.mxu0 0
        %913 = vmatprep.subr.bf16.mxu0 0
        %914 = vmatpush1.bf16.msra.mxu0 0
        %915 = vmatprep.subr.bf16.mxu0 0
        %916 = vmatpush1.bf16.msra.mxu0 0
        %917 = vmatprep.subr.bf16.mxu0 0
        %918 = vmatpush1.bf16.msra.mxu0 0
        %919 = vmatprep.subr.bf16.mxu0 0
        %920 = vmatpush1.bf16.msra.mxu0 0
        %921 = vmatprep.subr.bf16.mxu0 0
        %922 = vmatpush1.bf16.msra.mxu0 0
        %923 = vmatprep.subr.bf16.mxu0 0
        %924 = vmatpush1.bf16.msra.mxu0 0
        %925 = vmatprep.subr.bf16.mxu0 0
        %926 = vmatpush1.bf16.msra.mxu0 0
        %927 = vmatprep.subr.bf16.mxu0 0
        %928 = vmatpush1.bf16.msra.mxu0 0
        %929 = vmatprep.subr.bf16.mxu0 0
        %930 = vmatpush1.bf16.msra.mxu0 0
        %931 = vmatprep.subr.bf16.mxu0 0
        %932 = vmatpush1.bf16.msra.mxu0 0
        %933 = vmatprep.subr.bf16.mxu0 0
        %934 = vmatpush1.bf16.msra.mxu0 0
        %935 = vmatprep.subr.bf16.mxu0 0
        %936 = vmatpush1.bf16.msra.mxu0 0
        %937 = vmatprep.subr.bf16.mxu0 0
        %938 = vmatpush1.bf16.msra.mxu0 0
        %939 = vmatprep.mubr.bf16.mxu0 0
        %940 = vmatmul.mubr.bf16.gmra.mrb[0].mxu0 %v901
        %v941 = vpop.f32.mrb[0].mxu0
        %v942 = vadd.f32 0.0, %v941
        %v943 = vpop.f32.mrb[0].mxu0
        %v944 = vpop.f32.mrb[0].mxu0
        %v945 = vpop.f32.mrb[0].mxu0
        %946 = vdwg.mxu0
        %v947 = vrcp.pop %v898
        %v948 = vmul.f32 %v942, %v947
        %949 = vst [vmem:[#allocation6] sm:$0xff] %v948
        %v950 = vld [vmem:[#allocation6] sm:$0xff]
        %v951 = vpack.c.bf16 %v950, %v950
        %v952 = vld [vmem:[#allocation10] sm:$0xf]
        %v953 = vld [vmem:[#allocation10 + $0x4] sm:$0xf]
        %v954 = vld [vmem:[#allocation10 + $0x8] sm:$0xf]
        %v955 = vld [vmem:[#allocation10 + $0xc] sm:$0xf]
        %v956 = vld [vmem:[#allocation10 + $0x10] sm:$0xf]
        %v957 = vld [vmem:[#allocation10 + $0x14] sm:$0xf]
        %v958 = vld [vmem:[#allocation10 + $0x18] sm:$0xf]
        %v959 = vld [vmem:[#allocation10 + $0x1c] sm:$0xf]
        %v960 = vld [vmem:[#allocation10 + $0x20] sm:$0xf]
        %v961 = vld [vmem:[#allocation10 + $0x24] sm:$0xf]
        %v962 = vld [vmem:[#allocation10 + $0x28] sm:$0xf]
        %v963 = vld [vmem:[#allocation10 + $0x2c] sm:$0xf]
        %v964 = vld [vmem:[#allocation10 + $0x30] sm:$0xf]
        %v965 = vld [vmem:[#allocation10 + $0x34] sm:$0xf]
        %v966 = vld [vmem:[#allocation10 + $0x38] sm:$0xf]
        %v967 = vld [vmem:[#allocation10 + $0x3c] sm:$0xf]
        %v968 = vld [vmem:[%s7] sm:$0x1]
        %v970 = vlaneseq
        %v971 = vshrl.u32 %v970, 7
        %v972 = vsub.s32 0, %v971
        %v973 = vrot.slane %v968, %v972
        %v991 = vunpack.c.l.b16 %v952
        %v992 = vunpack.c.l.b16 %v953
        %v993 = vunpack.c.l.b16 %v954
        %v994 = vunpack.c.l.b16 %v955
        %v995 = vunpack.c.l.b16 %v956
        %v996 = vunpack.c.l.b16 %v957
        %v997 = vunpack.c.l.b16 %v958
        %v998 = vunpack.c.l.b16 %v959
        %v999 = vunpack.c.l.b16 %v960
        %v1000 = vunpack.c.l.b16 %v961
        %v1001 = vunpack.c.l.b16 %v962
        %v1002 = vunpack.c.l.b16 %v963
        %v1003 = vunpack.c.l.b16 %v964
        %v1004 = vunpack.c.l.b16 %v965
        %v1005 = vunpack.c.l.b16 %v966
        %v1006 = vunpack.c.l.b16 %v967
        %v1007 = vpack.c.b16 %v992, %v991
        %v1008 = vpack.c.b16 %v994, %v993
        %v1009 = vpack.c.b16 %v996, %v995
        %v1010 = vpack.c.b16 %v998, %v997
        %v1011 = vpack.c.b16 %v1000, %v999
        %v1012 = vpack.c.b16 %v1002, %v1001
        %v1013 = vpack.c.b16 %v1004, %v1003
        %v1014 = vpack.c.b16 %v1006, %v1005
        %1023 = vmatprep.subr.bf16.mxu0 0
        %1024 = vmatpush1.bf16.msra.mxu0 %v1007
        %1025 = vmatprep.subr.bf16.mxu0 0
        %1026 = vmatpush1.bf16.msra.mxu0 %v1008
        %1027 = vmatprep.subr.bf16.mxu0 0
        %1028 = vmatpush1.bf16.msra.mxu0 %v1009
        %1029 = vmatprep.subr.bf16.mxu0 0
        %1030 = vmatpush1.bf16.msra.mxu0 %v1010
        %1031 = vmatprep.subr.bf16.mxu0 0
        %1032 = vmatpush1.bf16.msra.mxu0 %v1011
        %1033 = vmatprep.subr.bf16.mxu0 0
        %1034 = vmatpush1.bf16.msra.mxu0 %v1012
        %1035 = vmatprep.subr.bf16.mxu0 0
        %1036 = vmatpush1.bf16.msra.mxu0 %v1013
        %1037 = vmatprep.subr.bf16.mxu0 0
        %1038 = vmatpush1.bf16.msra.mxu0 %v1014
        %1039 = vmatprep.subr.bf16.mxu0 0
        %1040 = vmatpush1.bf16.msra.mxu0 0
        %1041 = vmatprep.subr.bf16.mxu0 0
        %1042 = vmatpush1.bf16.msra.mxu0 0
        %1043 = vmatprep.subr.bf16.mxu0 0
        %1044 = vmatpush1.bf16.msra.mxu0 0
        %1045 = vmatprep.subr.bf16.mxu0 0
        %1046 = vmatpush1.bf16.msra.mxu0 0
        %1047 = vmatprep.subr.bf16.mxu0 0
        %1048 = vmatpush1.bf16.msra.mxu0 0
        %1049 = vmatprep.subr.bf16.mxu0 0
        %1050 = vmatpush1.bf16.msra.mxu0 0
        %1051 = vmatprep.subr.bf16.mxu0 0
        %1052 = vmatpush1.bf16.msra.mxu0 0
        %1053 = vmatprep.subr.bf16.mxu0 0
        %1054 = vmatpush1.bf16.msra.mxu0 0
        %1055 = vmatprep.mubr.bf16.mxu0 0
        %1056 = vmatmul.mubr.bf16.gmra.mrb[0].mxu0 %v951
        %v1057 = vpop.f32.mrb[0].mxu0
        %v1058 = vadd.f32 %v973, %v1057
        %v1059 = vpop.f32.mrb[0].mxu0
        %v1060 = vpop.f32.mrb[0].mxu0
        %v1061 = vpop.f32.mrb[0].mxu0
        %1062 = vdwg.mxu0
        %v1063 = vtanh.pop %v1058
        %v1064 = vld [vmem:[#allocation5] sm:$0xff]
        %v1065 = vadd.f32 %v1063, %v1064
        %v1066 = vld [vmem:[%s8] sm:$0x1]
        %v1067 = vld [vmem:[%s9] sm:$0x1]
        %1068 = vadd.xlane.f32.xlu0 %v1065
        %v1069 = vpop.xlane.xlu0 %1068
        %v1070 = vmul.f32 %v1069, 0.03125
        %v1071 = vmul.f32 %v1065, %v1065
        %1072 = vadd.xlane.f32.xlu0 %v1071
        %v1073 = vpop.xlane.xlu0 %1072
        %v1074 = vmul.f32 %v1073, 0.03125
        %v1075 = vmul.f32 %v1070, %v1070
        %v1076 = vsub.f32 %v1074, %v1075
        %v1077 = vsub.f32 %v1065, %v1070
        %v1078 = vadd.f32 %v1076, 1e-05
        %v1079 = vrsqrt.pop %v1078
        %v1080 = vmul.f32 %v1077, %v1079
        %v1082 = vlaneseq
        %v1083 = vshrl.u32 %v1082, 7
        %v1084 = vsub.s32 0, %v1083
        %v1085 = vrot.slane %v1066, %v1084
        %v1087 = vmul.f32 %v1080, %v1085
        %v1089 = vlaneseq
        %v1090 = vshrl.u32 %v1089, 7
        %v1091 = vsub.s32 0, %v1090
        %v1092 = vrot.slane %v1067, %v1091
        %v1094 = vadd.f32 %v1087, %v1092
        %v1095 = vpack.c.bf16 %v1094, %v1094
        %v1096 = vld [vmem:[#allocation12] sm:$0xf]
        %v1097 = vld [vmem:[#allocation12 + $0x4] sm:$0xf]
        %v1098 = vld [vmem:[#allocation12 + $0x8] sm:$0xf]
        %v1099 = vld [vmem:[#allocation12 + $0xc] sm:$0xf]
        %v1100 = vld [vmem:[#allocation12 + $0x10] sm:$0xf]
        %v1101 = vld [vmem:[#allocation12 + $0x14] sm:$0xf]
        %v1102 = vld [vmem:[#allocation12 + $0x18] sm:$0xf]
        %v1103 = vld [vmem:[#allocation12 + $0x1c] sm:$0xf]
        %v1104 = vld [vmem:[#allocation12 + $0x20] sm:$0xf]
        %v1105 = vld [vmem:[#allocation12 + $0x24] sm:$0xf]
        %v1106 = vld [vmem:[#allocation12 + $0x28] sm:$0xf]
        %v1107 = vld [vmem:[#allocation12 + $0x2c] sm:$0xf]
        %v1108 = vld [vmem:[#allocation12 + $0x30] sm:$0xf]
        %v1109 = vld [vmem:[#allocation12 + $0x34] sm:$0xf]
        %v1110 = vld [vmem:[#allocation12 + $0x38] sm:$0xf]
        %v1111 = vld [vmem:[#allocation12 + $0x3c] sm:$0xf]
        %v1112 = vld [vmem:[%s11] sm:$0x1]
        %v1114 = vlaneseq
        %v1115 = vshrl.u32 %v1114, 7
        %v1116 = vsub.s32 0, %v1115
        %v1117 = vrot.slane %v1112, %v1116
        %v1135 = vunpack.c.l.b16 %v1096
        %v1136 = vunpack.c.l.b16 %v1097
        %v1137 = vunpack.c.l.b16 %v1098
        %v1138 = vunpack.c.l.b16 %v1099
        %v1139 = vunpack.c.l.b16 %v1100
        %v1140 = vunpack.c.l.b16 %v1101
        %v1141 = vunpack.c.l.b16 %v1102
        %v1142 = vunpack.c.l.b16 %v1103
        %v1143 = vunpack.c.l.b16 %v1104
        %v1144 = vunpack.c.l.b16 %v1105
        %v1145 = vunpack.c.l.b16 %v1106
        %v1146 = vunpack.c.l.b16 %v1107
        %v1147 = vunpack.c.l.b16 %v1108
        %v1148 = vunpack.c.l.b16 %v1109
        %v1149 = vunpack.c.l.b16 %v1110
        %v1150 = vunpack.c.l.b16 %v1111
        %v1151 = vpack.c.b16 %v1136, %v1135
        %v1152 = vpack.c.b16 %v1138, %v1137
        %v1153 = vpack.c.b16 %v1140, %v1139
        %v1154 = vpack.c.b16 %v1142, %v1141
        %v1155 = vpack.c.b16 %v1144, %v1143
        %v1156 = vpack.c.b16 %v1146, %v1145
        %v1157 = vpack.c.b16 %v1148, %v1147
        %v1158 = vpack.c.b16 %v1150, %v1149
        %1167 = vmatprep.subr.bf16.mxu0 0
        %1168 = vmatpush1.bf16.msra.mxu0 %v1151
        %1169 = vmatprep.subr.bf16.mxu0 0
        %1170 = vmatpush1.bf16.msra.mxu0 %v1152
        %1171 = vmatprep.subr.bf16.mxu0 0
        %1172 = vmatpush1.bf16.msra.mxu0 %v1153
        %1173 = vmatprep.subr.bf16.mxu0 0
        %1174 = vmatpush1.bf16.msra.mxu0 %v1154
        %1175 = vmatprep.subr.bf16.mxu0 0
        %1176 = vmatpush1.bf16.msra.mxu0 %v1155
        %1177 = vmatprep.subr.bf16.mxu0 0
        %1178 = vmatpush1.bf16.msra.mxu0 %v1156
        %1179 = vmatprep.subr.bf16.mxu0 0
        %1180 = vmatpush1.bf16.msra.mxu0 %v1157
        %1181 = vmatprep.subr.bf16.mxu0 0
        %1182 = vmatpush1.bf16.msra.mxu0 %v1158
        %1183 = vmatprep.subr.bf16.mxu0 0
        %1184 = vmatpush1.bf16.msra.mxu0 0
        %1185 = vmatprep.subr.bf16.mxu0 0
        %1186 = vmatpush1.bf16.msra.mxu0 0
        %1187 = vmatprep.subr.bf16.mxu0 0
        %1188 = vmatpush1.bf16.msra.mxu0 0
        %1189 = vmatprep.subr.bf16.mxu0 0
        %1190 = vmatpush1.bf16.msra.mxu0 0
        %1191 = vmatprep.subr.bf16.mxu0 0
        %1192 = vmatpush1.bf16.msra.mxu0 0
        %1193 = vmatprep.subr.bf16.mxu0 0
        %1194 = vmatpush1.bf16.msra.mxu0 0
        %1195 = vmatprep.subr.bf16.mxu0 0
        %1196 = vmatpush1.bf16.msra.mxu0 0
        %1197 = vmatprep.subr.bf16.mxu0 0
        %1198 = vmatpush1.bf16.msra.mxu0 0
        %1199 = vmatprep.mubr.bf16.mxu0 0
        %1200 = vmatmul.mubr.bf16.gmra.mrb[0].mxu0 %v1095
        %v1201 = vpop.f32.mrb[0].mxu0
        %v1202 = vadd.f32 %v1117, %v1201
        %v1203 = vpop.f32.mrb[0].mxu0
        %v1204 = vpop.f32.mrb[0].mxu0
        %v1205 = vpop.f32.mrb[0].mxu0
        %1206 = vdwg.mxu0
        %v1207 = vtanh.pop %v1202
        %v1208 = vadd.f32 %v1207, %v1094
        %v1209 = vld [vmem:[%s12] sm:$0x1]
        %v1210 = vld [vmem:[%s13] sm:$0x1]
        %1211 = vadd.xlane.f32.xlu0 %v1208
        %v1212 = vpop.xlane.xlu0 %1211
        %v1213 = vmul.f32 %v1212, 0.03125
        %v1214 = vmul.f32 %v1208, %v1208
        %1215 = vadd.xlane.f32.xlu0 %v1214
        %v1216 = vpop.xlane.xlu0 %1215
        %v1217 = vmul.f32 %v1216, 0.03125
        %v1218 = vmul.f32 %v1213, %v1213
        %v1219 = vsub.f32 %v1217, %v1218
        %v1220 = vsub.f32 %v1208, %v1213
        %v1221 = vadd.f32 %v1219, 1e-05
        %v1222 = vrsqrt.pop %v1221
        %v1223 = vmul.f32 %v1220, %v1222
        %v1225 = vlaneseq
        %v1226 = vshrl.u32 %v1225, 7
        %v1227 = vsub.s32 0, %v1226
        %v1228 = vrot.slane %v1209, %v1227
        %v1230 = vmul.f32 %v1223, %v1228
        %v1232 = vlaneseq
        %v1233 = vshrl.u32 %v1232, 7
        %v1234 = vsub.s32 0, %v1233
        %v1235 = vrot.slane %v1210, %v1234
        %v1237 = vadd.f32 %v1230, %v1235
        %1238 = vst [vmem:[%s502] sm:$0xff] %v1237
        %s1239 = sand.u32 %s337, 1
        %s1240 = scalar_lea.sflag [#allocation9], %s1239
        %s1241 = sand.u32 %s337, 1
        %s1242 = smul.addr %s1241, 8
        %s1243 = scalar_lea.vmem [#allocation13], %s1242
        // Predicated region
        $region89: #{_forward.1} parent=75 // pred_check
          %p1244 = pneg %p347
        $region90: #{_forward.1} parent=75 // pred_check_branch
          %1246 = sbr.rel (%p1244) target = $region92
        $region91: #{_forward.1} parent=75 // pred_region
          %s1248 = ssub.s32 128, 128
          %1249 = vsyncadd %s1240, %s1248
          %s1250 = smul.addr %s30, 128
          %s1251 = scalar_lea.hbm %s14, %s1250
          %s1253 = sshll.u32 %s1243, 4
          %s1254 = int_to_ptr.vmem [resolvable:$true] %s1253
          %1256 = dma.vmem_to_hbm [thread:$0]  %s1254, 128, %s1251, %s1240
        $region92: #{_forward.1} parent=75 // pred_fallthru
          _
      $region76: #{_forward.1} parent=5 // pred_fallthru
        _
      %p1257 = scmp.le.s32.totalorder 2, %s25
      // Predicated region
      $region93: #{_forward.1} parent=5 // pred_check
        %p1258 = pneg %p1257
      $region94: #{_forward.1} parent=5 // pred_check_branch
        %1260 = sbr.rel (%p1258) target = $region96
      $region95: #{_forward.1} parent=5 // pred_region
        %s1261 = ssub.s32 %s25, 2
        // Predicated region
        $region97: #{_forward.1} parent=95 // pred_check
          %p1262 = pneg %p353
        $region98: #{_forward.1} parent=95 // pred_check_branch
          %1264 = sbr.rel (%p1262) target = $region100
        $region99: #{_forward.1} parent=95 // pred_region
          %s1265 = sand.u32 %s338, 1
          %s1266 = scalar_lea.sflag [#allocation9], %s1265
          %s1267 = sand.u32 %s338, 1
          %s1268 = smul.addr %s1267, 8
          %s1269 = scalar_lea.vmem [#allocation13], %s1268
          %1270 = dma.done %s1266, 128
        $region100: #{_forward.1} parent=95 // pred_fallthru
          _
      $region96: #{_forward.1} parent=5 // pred_fallthru
        _
    $region6: #{_forward.1} parent=1 // loop_footer
      %s29 = sadd.s32 1, %s25
    $region7: #{_forward.1} parent=1 // loop_footer_branch
      %24 = sbr.rel target = $region3
    $region8: #{_forward.1} parent=1 // loop_exit
      _
    %1271 = vsyncpa [#allocation8], 1
    %s1272 = scalar_lea.sflag [#allocation8], 1
    %1273 = vsyncpa %s1272, 1
    %1274 = vsyncpa [#allocation11], 1
    %1275 = vsyncpa [#allocation9], 1
    %s1276 = scalar_lea.sflag [#allocation9], 1
    %1277 = vsyncpa %s1276, 1

// kernel: _forward.1
$region0: #{_forward.1}
  #allocation0 [shape = 'u32[]', space=smem, size = 0x4, offset = 0x4, fixed_abs, tag = 'smem constant byte address 0x4 - core index']
  #allocation1 [shape = 'u32[144,128]{1,0:T(1,128)}', space=vmem, size = 0x12000, scoped, tag = 'internal scratch']
  #allocation2 [shape = 'bf16[1,8,128]{2,1,0:T(8,128)(2,1)}', space=vmem, size = 0x800, scoped, tag = 'scratch operand']
  #allocation3 [shape = 'bf16[1,8,128]{2,1,0:T(8,128)(2,1)}', space=vmem, size = 0x800, scoped, tag = 'scratch operand']
  #allocation4 [shape = 'bf16[1,8,128]{2,1,0:T(8,128)(2,1)}', space=vmem, size = 0x800, scoped, tag = 'scratch operand']
  #allocation5 [shape = 'f32[1,8,128]{2,1,0:T(8,128)}', space=vmem, size = 0x1000, scoped, tag = 'scratch operand']
  #allocation6 [shape = 'f32[1,8,128]{2,1,0:T(8,128)}', space=vmem, size = 0x1000, scoped, tag = 'scratch operand']
  %s0 = inlined_call_operand.vmem [shape: bf16[2,8,16], index: 0, kind: input, shape index: {}]
  %s1 = inlined_call_operand.vmem [shape: bf16[16,128], index: 1, kind: input, shape index: {}]
  %s2 = inlined_call_operand.vmem [shape: f32[1,128], index: 2, kind: input, shape index: {}]
  %s3 = inlined_call_operand.vmem [shape: f32[8,128], index: 3, kind: input, shape index: {}]
  %s4 = inlined_call_operand.hbm [shape: bf16[128,384], index: 4, kind: input, shape index: {}]
  %s5 = inlined_call_operand.vmem [shape: f32[1,384], index: 5, kind: input, shape index: {}]
  %s6 = inlined_call_operand.hbm [shape: bf16[128,128], index: 6, kind: input, shape index: {}]
  %s7 = inlined_call_operand.vmem [shape: f32[1,128], index: 7, kind: input, shape index: {}]
  %s8 = inlined_call_operand.vmem [shape: f32[1,128], index: 8, kind: input, shape index: {}]
  %s9 = inlined_call_operand.vmem [shape: f32[1,128], index: 9, kind: input, shape index: {}]
  %s10 = inlined_call_operand.hbm [shape: bf16[128,128], index: 10, kind: input, shape index: {}]
  %s11 = inlined_call_operand.vmem [shape: f32[1,128], index: 11, kind: input, shape index: {}]
  %s12 = inlined_call_operand.vmem [shape: f32[1,128], index: 12, kind: input, shape index: {}]
  %s13 = inlined_call_operand.vmem [shape: f32[1,128], index: 13, kind: input, shape index: {}]
  %s14 = inlined_call_operand.hbm [shape: f32[2,8,128], index: 14, kind: output, shape index: {}]
  %s15 = sld [smem:[#allocation0]]
  $region101: #{_forward.1} parent=0
    _
  %s17 = ssub.s32 1, %s15
  %s18 = scalar_select 0, %s17, %s15
  $region1: #{_forward.1} parent=0
    #allocation7 [shape = 'u8[98304]{0}', space=vmem, size = 0x18000, scoped, tag = 'input window, operand 4, single buffered']
    #allocation8 [shape = 's32[2]{0}', space=sflag, size = 0x8, scoped, tag = 'scoped memory for _forward.1']
    #allocation9 [shape = 's32[2]{0}', space=sflag, size = 0x8, scoped, tag = 'scoped memory for _forward.1']
    #allocation10 [shape = 'u8[32768]{0}', space=vmem, size = 0x8000, scoped, tag = 'input window, operand 6, single buffered']
    #allocation11 [shape = 's32[1]{0}', space=sflag, size = 0x4, scoped, tag = 'scoped memory for _forward.1']
    #allocation12 [shape = 'u8[32768]{0}', space=vmem, size = 0x8000, scoped, tag = 'input window, operand 10, single buffered']
    #allocation13 [shape = 'u8[8192]{0}', space=vmem, size = 0x2000, scoped, tag = 'output window, operand 0']
    %19 = vsyncpa [#allocation8], 0
    %20 = vsyncpa [#allocation11], 0
    %21 = vsyncpa [#allocation9], 0
    %s22 = scalar_lea.sflag [#allocation9], 1
    %23 = vsyncpa %s22, 0
    loop: start=0, step=1, limit=4
    $region2: #{_forward.1} parent=1 // loop_pre_header
      _
    $region3: #{_forward.1} parent=1 // loop_header
      %s25 = sphi 0, %s29
      %p26 = scmp.ge.s32.totalorder %s25, 4
      %s35 = sphi 0, %s37
      %s38 = sphi 0, %s35
      %s39 = sphi 0, %s38
      %s55 = sphi 0, %s39
      %s59 = sphi 0, %s59
      %s61 = sphi 0, %s59
      %s62 = sphi 0, %s61
      %s76 = sphi 0, %s62
      %s80 = sphi 0, %s80
      %s82 = sphi 0, %s80
      %s83 = sphi 0, %s82
      %s97 = sphi 0, %s83
      %s101 = sphi 0, %s101
      %s103 = sphi 0, %s101
      %s104 = sphi 0, %s103
      %s118 = sphi 0, %s104
      %s122 = sphi 0, %s122
      %s124 = sphi 0, %s122
      %s125 = sphi 0, %s124
      %s139 = sphi 0, %s125
      %s143 = sphi 0, %s143
      %s145 = sphi 0, %s143
      %s146 = sphi 0, %s145
      %s160 = sphi 0, %s146
      %s164 = sphi 0, %s164
      %s166 = sphi 0, %s164
      %s167 = sphi 0, %s166
      %s181 = sphi 0, %s167
      %s185 = sphi 0, %s185
      %s187 = sphi 0, %s185
      %s188 = sphi 0, %s187
      %s202 = sphi 0, %s188
      %s206 = sphi 0, %s206
      %s208 = sphi 0, %s206
      %s209 = sphi 0, %s208
      %s223 = sphi 0, %s209
      %s227 = sphi 0, %s227
      %s229 = sphi 0, %s227
      %s230 = sphi 0, %s229
      %s244 = sphi 0, %s230
      %s248 = sphi 0, %s248
      %s250 = sphi 0, %s248
      %s251 = sphi 0, %s250
      %s265 = sphi 0, %s251
      %s269 = sphi 0, %s269
      %s271 = sphi 0, %s269
      %s272 = sphi 0, %s271
      %s286 = sphi 0, %s272
      %s290 = sphi 0, %s290
      %s292 = sphi 0, %s290
      %s293 = sphi 0, %s292
      %s307 = sphi 0, %s293
      %s311 = sphi 0, %s311
      %s313 = sphi 0, %s311
      %s314 = sphi 0, %s313
      %s328 = sphi 0, %s314
      %s334 = sphi 0, %s336
      %s337 = sphi 0, %s334
      %s338 = sphi 0, %s337
      %s354 = sphi 0, %s338
    $region4: #{_forward.1} parent=1 // loop_header_branch
      %28 = sbr.rel (%p26) target = $region8
    $region5: #{_forward.1} parent=1 // loop_body
      %s30 = ssub.s32 %s25, 1
      %s31 = ssub.s32 %s25, 2
      %s32 = sadd.s32 %s25, 1
      %s33 = ssub.s32 %s25, %s32
      %p34 = scmp.eq.s32.totalorder %s33, 0
      %s36 = sadd.s32 %s35, 1
      %s37 = scalar_select %p34, %s35, %s36
      %p40 = pneg %p34
      %p41 = scmp.eq.s32.totalorder %s25, 1
      %p42 = por %p40, %p41
      %p43 = scmp.ne.s32.totalorder %s35, %s38
      %p44 = scmp.eq.s32.totalorder %s25, 0
      %p45 = por %p43, %p44
      %p46 = scmp.ne.s32.totalorder %s35, %s38
      %p47 = scmp.eq.s32.totalorder %s30, 1
      %p48 = por %p46, %p47
      %p49 = scmp.ne.s32.totalorder %s38, %s39
      %p50 = scmp.eq.s32.totalorder %s30, 0
      %p51 = por %p49, %p50
      %p52 = scmp.ne.s32.totalorder %s38, %s39
      %p53 = scmp.eq.s32.totalorder %s31, 1
      %p54 = por %p52, %p53
      %p56 = scmp.ne.s32.totalorder %s39, %s55
      %p57 = scmp.eq.s32.totalorder %s31, 0
      %p58 = por %p56, %p57
      %s60 = sadd.s32 %s59, 1
      %p63 = scmp.eq.s32.totalorder %s25, 1
      %p64 = scmp.ne.s32.totalorder %s59, %s61
      %p65 = scmp.eq.s32.totalorder %s25, 0
      %p66 = por %p64, %p65
      %p67 = scmp.ne.s32.totalorder %s59, %s61
      %p68 = scmp.eq.s32.totalorder %s30, 1
      %p69 = por %p67, %p68
      %p70 = scmp.ne.s32.totalorder %s61, %s62
      %p71 = scmp.eq.s32.totalorder %s30, 0
      %p72 = por %p70, %p71
      %p73 = scmp.ne.s32.totalorder %s61, %s62
      %p74 = scmp.eq.s32.totalorder %s31, 1
      %p75 = por %p73, %p74
      %p77 = scmp.ne.s32.totalorder %s62, %s76
      %p78 = scmp.eq.s32.totalorder %s31, 0
      %p79 = por %p77, %p78
      %s81 = sadd.s32 %s80, 1
      %p84 = scmp.eq.s32.totalorder %s25, 1
      %p85 = scmp.ne.s32.totalorder %s80, %s82
      %p86 = scmp.eq.s32.totalorder %s25, 0
      %p87 = por %p85, %p86
      %p88 = scmp.ne.s32.totalorder %s80, %s82
      %p89 = scmp.eq.s32.totalorder %s30, 1
      %p90 = por %p88, %p89
      %p91 = scmp.ne.s32.totalorder %s82, %s83
      %p92 = scmp.eq.s32.totalorder %s30, 0
      %p93 = por %p91, %p92
      %p94 = scmp.ne.s32.totalorder %s82, %s83
      %p95 = scmp.eq.s32.totalorder %s31, 1
      %p96 = por %p94, %p95
      %p98 = scmp.ne.s32.totalorder %s83, %s97
      %p99 = scmp.eq.s32.totalorder %s31, 0
      %p100 = por %p98, %p99
      %s102 = sadd.s32 %s101, 1
      %p105 = scmp.eq.s32.totalorder %s25, 1
      %p106 = scmp.ne.s32.totalorder %s101, %s103
      %p107 = scmp.eq.s32.totalorder %s25, 0
      %p108 = por %p106, %p107
      %p109 = scmp.ne.s32.totalorder %s101, %s103
      %p110 = scmp.eq.s32.totalorder %s30, 1
      %p111 = por %p109, %p110
      %p112 = scmp.ne.s32.totalorder %s103, %s104
      %p113 = scmp.eq.s32.totalorder %s30, 0
      %p114 = por %p112, %p113
      %p115 = scmp.ne.s32.totalorder %s103, %s104
      %p116 = scmp.eq.s32.totalorder %s31, 1
      %p117 = por %p115, %p116
      %p119 = scmp.ne.s32.totalorder %s104, %s118
      %p120 = scmp.eq.s32.totalorder %s31, 0
      %p121 = por %p119, %p120
      %s123 = sadd.s32 %s122, 1
      %p126 = scmp.eq.s32.totalorder %s25, 1
      %p127 = scmp.ne.s32.totalorder %s122, %s124
      %p128 = scmp.eq.s32.totalorder %s25, 0
      %p129 = por %p127, %p128
      %p130 = scmp.ne.s32.totalorder %s122, %s124
      %p131 = scmp.eq.s32.totalorder %s30, 1
      %p132 = por %p130, %p131
      %p133 = scmp.ne.s32.totalorder %s124, %s125
      %p134 = scmp.eq.s32.totalorder %s30, 0
      %p135 = por %p133, %p134
      %p136 = scmp.ne.s32.totalorder %s124, %s125
      %p137 = scmp.eq.s32.totalorder %s31, 1
      %p138 = por %p136, %p137
      %p140 = scmp.ne.s32.totalorder %s125, %s139
      %p141 = scmp.eq.s32.totalorder %s31, 0
      %p142 = por %p140, %p141
      %s144 = sadd.s32 %s143, 1
      %p147 = scmp.eq.s32.totalorder %s25, 1
      %p148 = scmp.ne.s32.totalorder %s143, %s145
      %p149 = scmp.eq.s32.totalorder %s25, 0
      %p150 = por %p148, %p149
      %p151 = scmp.ne.s32.totalorder %s143, %s145
      %p152 = scmp.eq.s32.totalorder %s30, 1
      %p153 = por %p151, %p152
      %p154 = scmp.ne.s32.totalorder %s145, %s146
      %p155 = scmp.eq.s32.totalorder %s30, 0
      %p156 = por %p154, %p155
      %p157 = scmp.ne.s32.totalorder %s145, %s146
      %p158 = scmp.eq.s32.totalorder %s31, 1
      %p159 = por %p157, %p158
      %p161 = scmp.ne.s32.totalorder %s146, %s160
      %p162 = scmp.eq.s32.totalorder %s31, 0
      %p163 = por %p161, %p162
      %s165 = sadd.s32 %s164, 1
      %p168 = scmp.eq.s32.totalorder %s25, 1
      %p169 = scmp.ne.s32.totalorder %s164, %s166
      %p170 = scmp.eq.s32.totalorder %s25, 0
      %p171 = por %p169, %p170
      %p172 = scmp.ne.s32.totalorder %s164, %s166
      %p173 = scmp.eq.s32.totalorder %s30, 1
      %p174 = por %p172, %p173
      %p175 = scmp.ne.s32.totalorder %s166, %s167
      %p176 = scmp.eq.s32.totalorder %s30, 0
      %p177 = por %p175, %p176
      %p178 = scmp.ne.s32.totalorder %s166, %s167
      %p179 = scmp.eq.s32.totalorder %s31, 1
      %p180 = por %p178, %p179
      %p182 = scmp.ne.s32.totalorder %s167, %s181
      %p183 = scmp.eq.s32.totalorder %s31, 0
      %p184 = por %p182, %p183
      %s186 = sadd.s32 %s185, 1
      %p189 = scmp.eq.s32.totalorder %s25, 1
      %p190 = scmp.ne.s32.totalorder %s185, %s187
      %p191 = scmp.eq.s32.totalorder %s25, 0
      %p192 = por %p190, %p191
      %p193 = scmp.ne.s32.totalorder %s185, %s187
      %p194 = scmp.eq.s32.totalorder %s30, 1
      %p195 = por %p193, %p194
      %p196 = scmp.ne.s32.totalorder %s187, %s188
      %p197 = scmp.eq.s32.totalorder %s30, 0
      %p198 = por %p196, %p197
      %p199 = scmp.ne.s32.totalorder %s187, %s188
      %p200 = scmp.eq.s32.totalorder %s31, 1
      %p201 = por %p199, %p200
      %p203 = scmp.ne.s32.totalorder %s188, %s202
      %p204 = scmp.eq.s32.totalorder %s31, 0
      %p205 = por %p203, %p204
      %s207 = sadd.s32 %s206, 1
      %p210 = scmp.eq.s32.totalorder %s25, 1
      %p211 = scmp.ne.s32.totalorder %s206, %s208
      %p212 = scmp.eq.s32.totalorder %s25, 0
      %p213 = por %p211, %p212
      %p214 = scmp.ne.s32.totalorder %s206, %s208
      %p215 = scmp.eq.s32.totalorder %s30, 1
      %p216 = por %p214, %p215
      %p217 = scmp.ne.s32.totalorder %s208, %s209
      %p218 = scmp.eq.s32.totalorder %s30, 0
      %p219 = por %p217, %p218
      %p220 = scmp.ne.s32.totalorder %s208, %s209
      %p221 = scmp.eq.s32.totalorder %s31, 1
      %p222 = por %p220, %p221
      %p224 = scmp.ne.s32.totalorder %s209, %s223
      %p225 = scmp.eq.s32.totalorder %s31, 0
      %p226 = por %p224, %p225
      %s228 = sadd.s32 %s227, 1
      %p231 = scmp.eq.s32.totalorder %s25, 1
      %p232 = scmp.ne.s32.totalorder %s227, %s229
      %p233 = scmp.eq.s32.totalorder %s25, 0
      %p234 = por %p232, %p233
      %p235 = scmp.ne.s32.totalorder %s227, %s229
      %p236 = scmp.eq.s32.totalorder %s30, 1
      %p237 = por %p235, %p236
      %p238 = scmp.ne.s32.totalorder %s229, %s230
      %p239 = scmp.eq.s32.totalorder %s30, 0
      %p240 = por %p238, %p239
      %p241 = scmp.ne.s32.totalorder %s229, %s230
      %p242 = scmp.eq.s32.totalorder %s31, 1
      %p243 = por %p241, %p242
      %p245 = scmp.ne.s32.totalorder %s230, %s244
      %p246 = scmp.eq.s32.totalorder %s31, 0
      %p247 = por %p245, %p246
      %s249 = sadd.s32 %s248, 1
      %p252 = scmp.eq.s32.totalorder %s25, 1
      %p253 = scmp.ne.s32.totalorder %s248, %s250
      %p254 = scmp.eq.s32.totalorder %s25, 0
      %p255 = por %p253, %p254
      %p256 = scmp.ne.s32.totalorder %s248, %s250
      %p257 = scmp.eq.s32.totalorder %s30, 1
      %p258 = por %p256, %p257
      %p259 = scmp.ne.s32.totalorder %s250, %s251
      %p260 = scmp.eq.s32.totalorder %s30, 0
      %p261 = por %p259, %p260
      %p262 = scmp.ne.s32.totalorder %s250, %s251
      %p263 = scmp.eq.s32.totalorder %s31, 1
      %p264 = por %p262, %p263
      %p266 = scmp.ne.s32.totalorder %s251, %s265
      %p267 = scmp.eq.s32.totalorder %s31, 0
      %p268 = por %p266, %p267
      %s270 = sadd.s32 %s269, 1
      %p273 = scmp.eq.s32.totalorder %s25, 1
      %p274 = scmp.ne.s32.totalorder %s269, %s271
      %p275 = scmp.eq.s32.totalorder %s25, 0
      %p276 = por %p274, %p275
      %p277 = scmp.ne.s32.totalorder %s269, %s271
      %p278 = scmp.eq.s32.totalorder %s30, 1
      %p279 = por %p277, %p278
      %p280 = scmp.ne.s32.totalorder %s271, %s272
      %p281 = scmp.eq.s32.totalorder %s30, 0
      %p282 = por %p280, %p281
      %p283 = scmp.ne.s32.totalorder %s271, %s272
      %p284 = scmp.eq.s32.totalorder %s31, 1
      %p285 = por %p283, %p284
      %p287 = scmp.ne.s32.totalorder %s272, %s286
      %p288 = scmp.eq.s32.totalorder %s31, 0
      %p289 = por %p287, %p288
      %s291 = sadd.s32 %s290, 1
      %p294 = scmp.eq.s32.totalorder %s25, 1
      %p295 = scmp.ne.s32.totalorder %s290, %s292
      %p296 = scmp.eq.s32.totalorder %s25, 0
      %p297 = por %p295, %p296
      %p298 = scmp.ne.s32.totalorder %s290, %s292
      %p299 = scmp.eq.s32.totalorder %s30, 1
      %p300 = por %p298, %p299
      %p301 = scmp.ne.s32.totalorder %s292, %s293
      %p302 = scmp.eq.s32.totalorder %s30, 0
      %p303 = por %p301, %p302
      %p304 = scmp.ne.s32.totalorder %s292, %s293
      %p305 = scmp.eq.s32.totalorder %s31, 1
      %p306 = por %p304, %p305
      %p308 = scmp.ne.s32.totalorder %s293, %s307
      %p309 = scmp.eq.s32.totalorder %s31, 0
      %p310 = por %p308, %p309
      %s312 = sadd.s32 %s311, 1
      %p315 = scmp.eq.s32.totalorder %s25, 1
      %p316 = scmp.ne.s32.totalorder %s311, %s313
      %p317 = scmp.eq.s32.totalorder %s25, 0
      %p318 = por %p316, %p317
      %p319 = scmp.ne.s32.totalorder %s311, %s313
      %p320 = scmp.eq.s32.totalorder %s30, 1
      %p321 = por %p319, %p320
      %p322 = scmp.ne.s32.totalorder %s313, %s314
      %p323 = scmp.eq.s32.totalorder %s30, 0
      %p324 = por %p322, %p323
      %p325 = scmp.ne.s32.totalorder %s313, %s314
      %p326 = scmp.eq.s32.totalorder %s31, 1
      %p327 = por %p325, %p326
      %p329 = scmp.ne.s32.totalorder %s314, %s328
      %p330 = scmp.eq.s32.totalorder %s31, 0
      %p331 = por %p329, %p330
      %s332 = ssub.s32 %s25, %s32
      %p333 = scmp.eq.s32.totalorder %s332, 0
      %s335 = sadd.s32 %s334, 1
      %s336 = scalar_select %p333, %s334, %s335
      %p339 = pneg %p333
      %p340 = scmp.eq.s32.totalorder %s25, 1
      %p341 = por %p339, %p340
      %p342 = scmp.ne.s32.totalorder %s334, %s337
      %p343 = scmp.eq.s32.totalorder %s25, 0
      %p344 = por %p342, %p343
      %p345 = scmp.ne.s32.totalorder %s334, %s337
      %p346 = scmp.eq.s32.totalorder %s30, 1
      %p347 = por %p345, %p346
      %p348 = scmp.ne.s32.totalorder %s337, %s338
      %p349 = scmp.eq.s32.totalorder %s30, 0
      %p350 = por %p348, %p349
      %p351 = scmp.ne.s32.totalorder %s337, %s338
      %p352 = scmp.eq.s32.totalorder %s31, 1
      %p353 = por %p351, %p352
      %p355 = scmp.ne.s32.totalorder %s338, %s354
      %p356 = scmp.eq.s32.totalorder %s31, 0
      %p357 = por %p355, %p356
      %p358 = scmp.le.s32.totalorder 1, %s25
      %p359 = scmp.lt.s32.totalorder %s25, 3
      %p360 = pnand %p358, %p359
      %p361 = pneg %p360
      // Predicated region
      $region9: #{_forward.1} parent=5 // pred_check
        _
      $region10: #{_forward.1} parent=5 // pred_check_branch
        %363 = sbr.rel (%p360) target = $region12
      $region11: #{_forward.1} parent=5 // pred_region
        %s364 = ssub.s32 %s25, 1
        // Predicated region
        $region13: #{_forward.1} parent=11 // pred_check
          %p365 = pneg %p72
        $region14: #{_forward.1} parent=11 // pred_check_branch
          %367 = sbr.rel (%p365) target = $region16
        $region15: #{_forward.1} parent=11 // pred_region
          _
        $region16: #{_forward.1} parent=11 // pred_fallthru
          _
        // Predicated region
        $region17: #{_forward.1} parent=11 // pred_check
          %p368 = pneg %p93
        $region18: #{_forward.1} parent=11 // pred_check_branch
          %370 = sbr.rel (%p368) target = $region20
        $region19: #{_forward.1} parent=11 // pred_region
          _
        $region20: #{_forward.1} parent=11 // pred_fallthru
          _
        // Predicated region
        $region21: #{_forward.1} parent=11 // pred_check
          %p371 = pneg %p114
        $region22: #{_forward.1} parent=11 // pred_check_branch
          %373 = sbr.rel (%p371) target = $region24
        $region23: #{_forward.1} parent=11 // pred_region
          _
        $region24: #{_forward.1} parent=11 // pred_fallthru
          _
        // Predicated region
        $region25: #{_forward.1} parent=11 // pred_check
          %p374 = pneg %p135
        $region26: #{_forward.1} parent=11 // pred_check_branch
          %376 = sbr.rel (%p374) target = $region28
        $region27: #{_forward.1} parent=11 // pred_region
          %s378 = ssub.s32 3072, 3072
          %379 = vsyncadd [#allocation8], %s378
          %s380 = sshll.u32 [#allocation7], 4
          %s381 = int_to_ptr.vmem [resolvable:$true] %s380
          %386 = dma.hbm_to_vmem [thread:$0]  %s4, 3072, %s381, [#allocation8], 192, 192, 12
        $region28: #{_forward.1} parent=11 // pred_fallthru
          _
        // Predicated region
        $region29: #{_forward.1} parent=11 // pred_check
          %p387 = pneg %p156
        $region30: #{_forward.1} parent=11 // pred_check_branch
          %389 = sbr.rel (%p387) target = $region32
        $region31: #{_forward.1} parent=11 // pred_region
          _
        $region32: #{_forward.1} parent=11 // pred_fallthru
          _
        // Predicated region
        $region33: #{_forward.1} parent=11 // pred_check
          %p390 = pneg %p177
        $region34: #{_forward.1} parent=11 // pred_check_branch
          %392 = sbr.rel (%p390) target = $region36
        $region35: #{_forward.1} parent=11 // pred_region
          %s394 = ssub.s32 1024, 1024
          %395 = vsyncadd [#allocation11], %s394
          %s396 = sshll.u32 [#allocation10], 4
          %s397 = int_to_ptr.vmem [resolvable:$true] %s396
          %402 = dma.hbm_to_vmem [thread:$0]  %s6, 1024, %s397, [#allocation11], 64, 64, 4
        $region36: #{_forward.1} parent=11 // pred_fallthru
          _
        // Predicated region
        $region37: #{_forward.1} parent=11 // pred_check
          %p403 = pneg %p198
        $region38: #{_forward.1} parent=11 // pred_check_branch
          %405 = sbr.rel (%p403) target = $region40
        $region39: #{_forward.1} parent=11 // pred_region
          _
        $region40: #{_forward.1} parent=11 // pred_fallthru
          _
        // Predicated region
        $region41: #{_forward.1} parent=11 // pred_check
          %p406 = pneg %p219
        $region42: #{_forward.1} parent=11 // pred_check_branch
          %408 = sbr.rel (%p406) target = $region44
        $region43: #{_forward.1} parent=11 // pred_region
          _
        $region44: #{_forward.1} parent=11 // pred_fallthru
          _
        // Predicated region
        $region45: #{_forward.1} parent=11 // pred_check
          %p409 = pneg %p240
        $region46: #{_forward.1} parent=11 // pred_check_branch
          %411 = sbr.rel (%p409) target = $region48
        $region47: #{_forward.1} parent=11 // pred_region
          _
        $region48: #{_forward.1} parent=11 // pred_fallthru
          _
        // Predicated region
        $region49: #{_forward.1} parent=11 // pred_check
          %p412 = pneg %p261
        $region50: #{_forward.1} parent=11 // pred_check_branch
          %414 = sbr.rel (%p412) target = $region52
        $region51: #{_forward.1} parent=11 // pred_region
          %s416 = ssub.s32 1024, 1024
          %417 = vsyncadd [#allocation11], %s416
          %s418 = sshll.u32 [#allocation12], 4
          %s419 = int_to_ptr.vmem [resolvable:$true] %s418
          %424 = dma.hbm_to_vmem [thread:$0]  %s10, 1024, %s419, [#allocation11], 64, 64, 4
        $region52: #{_forward.1} parent=11 // pred_fallthru
          _
        // Predicated region
        $region53: #{_forward.1} parent=11 // pred_check
          %p425 = pneg %p282
        $region54: #{_forward.1} parent=11 // pred_check_branch
          %427 = sbr.rel (%p425) target = $region56
        $region55: #{_forward.1} parent=11 // pred_region
          _
        $region56: #{_forward.1} parent=11 // pred_fallthru
          _
        // Predicated region
        $region57: #{_forward.1} parent=11 // pred_check
          %p428 = pneg %p303
        $region58: #{_forward.1} parent=11 // pred_check_branch
          %430 = sbr.rel (%p428) target = $region60
        $region59: #{_forward.1} parent=11 // pred_region
          _
        $region60: #{_forward.1} parent=11 // pred_fallthru
          _
        // Predicated region
        $region61: #{_forward.1} parent=11 // pred_check
          %p431 = pneg %p324
        $region62: #{_forward.1} parent=11 // pred_check_branch
          %433 = sbr.rel (%p431) target = $region64
        $region63: #{_forward.1} parent=11 // pred_region
          _
        $region64: #{_forward.1} parent=11 // pred_fallthru
          _
      $region12: #{_forward.1} parent=5 // pred_fallthru
        _
      %p434 = scmp.lt.s32.totalorder %s25, 2
      // Predicated region
      $region65: #{_forward.1} parent=5 // pred_check
        %p435 = pneg %p434
      $region66: #{_forward.1} parent=5 // pred_check_branch
        %437 = sbr.rel (%p435) target = $region68
      $region67: #{_forward.1} parent=5 // pred_region
        // Predicated region
        $region69: #{_forward.1} parent=67 // pred_check
          %p438 = pneg %p45
        $region70: #{_forward.1} parent=67 // pred_check_branch
          %440 = sbr.rel (%p438) target = $region72
        $region71: #{_forward.1} parent=67 // pred_region
          %p441 = scmp.lt.s32.totalorder %s25, 1
          %s442 = scalar_select %p441, %s25, 1
          %s443 = smul.addr %s442, 4
          %s444 = scalar_lea.vmem %s0, %s443
        $region72: #{_forward.1} parent=67 // pred_fallthru
          _
      $region68: #{_forward.1} parent=5 // pred_fallthru
        _
      %p445 = scmp.le.s32.totalorder 1, %s25
      %p446 = scmp.lt.s32.totalorder %s25, 3
      %p447 = pnand %p445, %p446
      %p448 = pneg %p447
      // Predicated region
      $region73: #{_forward.1} parent=5 // pred_check
        _
      $region74: #{_forward.1} parent=5 // pred_check_branch
        %450 = sbr.rel (%p447) target = $region76
      $region75: #{_forward.1} parent=5 // pred_region
        %s451 = ssub.s32 %s25, 1
        // Predicated region
        $region77: #{_forward.1} parent=75 // pred_check
          %p452 = pneg %p135
        $region78: #{_forward.1} parent=75 // pred_check_branch
          %454 = sbr.rel (%p452) target = $region80
        $region79: #{_forward.1} parent=75 // pred_region
          %455 = dma.done [#allocation8], 3072
        $region80: #{_forward.1} parent=75 // pred_fallthru
          _
        // Predicated region
        $region81: #{_forward.1} parent=75 // pred_check
          %p456 = pneg %p177
        $region82: #{_forward.1} parent=75 // pred_check_branch
          %458 = sbr.rel (%p456) target = $region84
        $region83: #{_forward.1} parent=75 // pred_region
          %459 = dma.done [#allocation11], 1024
        $region84: #{_forward.1} parent=75 // pred_fallthru
          _
        // Predicated region
        $region85: #{_forward.1} parent=75 // pred_check
          %p460 = pneg %p261
        $region86: #{_forward.1} parent=75 // pred_check_branch
          %462 = sbr.rel (%p460) target = $region88
        $region87: #{_forward.1} parent=75 // pred_region
          %463 = dma.done [#allocation11], 1024
        $region88: #{_forward.1} parent=75 // pred_fallthru
          _
        %p464 = scmp.lt.s32.totalorder %s30, 1
        %s465 = scalar_select %p464, %s30, 1
        %s466 = smul.addr %s465, 4
        %s467 = scalar_lea.vmem %s0, %s466
        %p468 = pneg %p51
        %p469 = pneg %p48
        %p470 = pneg %p72
        %p471 = pneg %p69
        %p472 = pneg %p93
        %p473 = pneg %p90
        %p474 = pneg %p114
        %p475 = pneg %p111
        %p476 = pneg %p135
        %p477 = pneg %p132
        %p478 = pneg %p156
        %p479 = pneg %p153
        %p480 = pneg %p177
        %p481 = pneg %p174
        %p482 = pneg %p198
        %p483 = pneg %p195
        %p484 = pneg %p219
        %p485 = pneg %p216
        %p486 = pneg %p240
        %p487 = pneg %p237
        %p488 = pneg %p261
        %p489 = pneg %p258
        %p490 = pneg %p282
        %p491 = pneg %p279
        %p492 = pneg %p303
        %p493 = pneg %p300
        %p494 = pneg %p324
        %p495 = pneg %p321
        %p496 = pneg %p350
        %p497 = pneg %p347
        %s498 = sand.u32 %s337, 1
        %s499 = scalar_lea.sflag [#allocation9], %s498
        %s500 = sand.u32 %s337, 1
        %s501 = smul.addr %s500, 8
        %s502 = scalar_lea.vmem [#allocation13], %s501
        %p503 = scmp.lt.s32.totalorder %s30, 1
        %s504 = scalar_select %p503, %s30, 1
        %s505 = smul.addr %s504, 4
        %s506 = scalar_lea.vmem %s0, %s505
        %v508 = vld [vmem:[%s506] sm:$0xf]
        %v509 = vld [vmem:[%s1] sm:$0xf]
        %v510 = vld [vmem:[%s1 + $0x4] sm:$0xf]
        %v511 = vld [vmem:[%s2] sm:$0x1]
        %v513 = vlaneseq
        %v514 = vshrl.u32 %v513, 7
        %v515 = vsub.s32 0, %v514
        %v516 = vrot.slane %v511, %v515
        %v520 = vunpack.c.l.b16 %v509
        %v521 = vunpack.c.l.b16 %v510
        %v522 = vpack.c.b16 %v521, %v520
        %vm524 = vcmask 130048
        %v526 = vsel %vm524, %v508, 0
        %528 = vmatprep.subr.bf16.mxu0 0
        %529 = vmatpush1.bf16.msra.mxu0 %v522
        %530 = vmatprep.subr.bf16.mxu0 0
        %531 = vmatpush1.bf16.msra.mxu0 0
        %532 = vmatprep.subr.bf16.mxu0 0
        %533 = vmatpush1.bf16.msra.mxu0 0
        %534 = vmatprep.subr.bf16.mxu0 0
        %535 = vmatpush1.bf16.msra.mxu0 0
        %536 = vmatprep.subr.bf16.mxu0 0
        %537 = vmatpush1.bf16.msra.mxu0 0
        %538 = vmatprep.subr.bf16.mxu0 0
        %539 = vmatpush1.bf16.msra.mxu0 0
        %540 = vmatprep.subr.bf16.mxu0 0
        %541 = vmatpush1.bf16.msra.mxu0 0
        %542 = vmatprep.subr.bf16.mxu0 0
        %543 = vmatpush1.bf16.msra.mxu0 0
        %544 = vmatprep.subr.bf16.mxu0 0
        %545 = vmatpush1.bf16.msra.mxu0 0
        %546 = vmatprep.subr.bf16.mxu0 0
        %547 = vmatpush1.bf16.msra.mxu0 0
        %548 = vmatprep.subr.bf16.mxu0 0
        %549 = vmatpush1.bf16.msra.mxu0 0
        %550 = vmatprep.subr.bf16.mxu0 0
        %551 = vmatpush1.bf16.msra.mxu0 0
        %552 = vmatprep.subr.bf16.mxu0 0
        %553 = vmatpush1.bf16.msra.mxu0 0
        %554 = vmatprep.subr.bf16.mxu0 0
        %555 = vmatpush1.bf16.msra.mxu0 0
        %556 = vmatprep.subr.bf16.mxu0 0
        %557 = vmatpush1.bf16.msra.mxu0 0
        %558 = vmatprep.subr.bf16.mxu0 0
        %559 = vmatpush1.bf16.msra.mxu0 0
        %560 = vmatprep.mubr.bf16.mxu0 0
        %561 = vmatmul.mubr.bf16.gmra.mrb[0].mxu0 %v526
        %v562 = vpop.f32.mrb[0].mxu0
        %v563 = vadd.f32 %v516, %v562
        %v564 = vpop.f32.mrb[0].mxu0
        %v565 = vpop.f32.mrb[0].mxu0
        %v566 = vpop.f32.mrb[0].mxu0
        %567 = vdwg.mxu0
        %v568 = vtanh.pop %v563
        %v569 = vld [vmem:[%s3] sm:$0xff]
        %v570 = vadd.f32 %v568, %v569
        %571 = vst [vmem:[#allocation5] sm:$0xff] %v570
        %v572 = vpack.c.bf16 %v570, %v570
        %v573 = vld [vmem:[#allocation7] sm:$0xff]
        %v574 = vld [vmem:[#allocation7 + $0x8] sm:$0xf]
        %v575 = vld [vmem:[#allocation7 + $0xc] sm:$0xff]
        %v576 = vld [vmem:[#allocation7 + $0x14] sm:$0xf]
        %v577 = vld [vmem:[#allocation7 + $0x18] sm:$0xff]
        %v578 = vld [vmem:[#allocation7 + $0x20] sm:$0xf]
        %v579 = vld [vmem:[#allocation7 + $0x24] sm:$0xff]
        %v580 = vld [vmem:[#allocation7 + $0x2c] sm:$0xf]
        %v581 = vld [vmem:[#allocation7 + $0x30] sm:$0xff]
        %v582 = vld [vmem:[#allocation7 + $0x38] sm:$0xf]
        %v583 = vld [vmem:[#allocation7 + $0x3c] sm:$0xff]
        %v584 = vld [vmem:[#allocation7 + $0x44] sm:$0xf]
        %v585 = vld [vmem:[#allocation7 + $0x48] sm:$0xff]
        %v586 = vld [vmem:[#allocation7 + $0x50] sm:$0xf]
        %v587 = vld [vmem:[#allocation7 + $0x54] sm:$0xff]
        %v588 = vld [vmem:[#allocation7 + $0x5c] sm:$0xf]
        %v589 = vld [vmem:[#allocation7 + $0x60] sm:$0xff]
        %v590 = vld [vmem:[#allocation7 + $0x68] sm:$0xf]
        %v591 = vld [vmem:[#allocation7 + $0x6c] sm:$0xff]
        %v592 = vld [vmem:[#allocation7 + $0x74] sm:$0xf]
        %v593 = vld [vmem:[#allocation7 + $0x78] sm:$0xff]
        %v594 = vld [vmem:[#allocation7 + $0x80] sm:$0xf]
        %v595 = vld [vmem:[#allocation7 + $0x84] sm:$0xff]
        %v596 = vld [vmem:[#allocation7 + $0x8c] sm:$0xf]
        %v597 = vld [vmem:[#allocation7 + $0x90] sm:$0xff]
        %v598 = vld [vmem:[#allocation7 + $0x98] sm:$0xf]
        %v599 = vld [vmem:[#allocation7 + $0x9c] sm:$0xff]
        %v600 = vld [vmem:[#allocation7 + $0xa4] sm:$0xf]
        %v601 = vld [vmem:[#allocation7 + $0xa8] sm:$0xff]
        %v602 = vld [vmem:[#allocation7 + $0xb0] sm:$0xf]
        %v603 = vld [vmem:[#allocation7 + $0xb4] sm:$0xff]
        %v604 = vld [vmem:[#allocation7 + $0xbc] sm:$0xf]
        %v605 = vld [vmem:[%s5] sm:$0x7]
        %v607 = vlaneseq
        %v608 = vshrl.u32 %v607, 7
        %v609 = vsub.s32 0, %v608
        %v610 = vrot.slane %v605, %v609
        %v611 = vlaneseq
        %v612 = vshrl.u32 %v611, 7
        %v613 = vsub.s32 1, %v612
        %v614 = vrot.slane %v605, %v613
        %v615 = vlaneseq
        %v616 = vshrl.u32 %v615, 7
        %v617 = vsub.s32 2, %v616
        %v618 = vrot.slane %v605, %v617
        %v654 = vunpack.c.l.b16 %v573
        %v655 = vunpack.c.h.b16 %v573
        %v656 = vunpack.c.l.b16 %v574
        %v657 = vunpack.c.l.b16 %v575
        %v658 = vunpack.c.h.b16 %v575
        %v659 = vunpack.c.l.b16 %v576
        %v660 = vunpack.c.l.b16 %v577
        %v661 = vunpack.c.h.b16 %v577
        %v662 = vunpack.c.l.b16 %v578
        %v663 = vunpack.c.l.b16 %v579
        %v664 = vunpack.c.h.b16 %v579
        %v665 = vunpack.c.l.b16 %v580
        %v666 = vunpack.c.l.b16 %v581
        %v667 = vunpack.c.h.b16 %v581
        %v668 = vunpack.c.l.b16 %v582
        %v669 = vunpack.c.l.b16 %v583
        %v670 = vunpack.c.h.b16 %v583
        %v671 = vunpack.c.l.b16 %v584
        %v672 = vunpack.c.l.b16 %v585
        %v673 = vunpack.c.h.b16 %v585
        %v674 = vunpack.c.l.b16 %v586
        %v675 = vunpack.c.l.b16 %v587
        %v676 = vunpack.c.h.b16 %v587
        %v677 = vunpack.c.l.b16 %v588
        %v678 = vunpack.c.l.b16 %v589
        %v679 = vunpack.c.h.b16 %v589
        %v680 = vunpack.c.l.b16 %v590
        %v681 = vunpack.c.l.b16 %v591
        %v682 = vunpack.c.h.b16 %v591
        %v683 = vunpack.c.l.b16 %v592
        %v684 = vunpack.c.l.b16 %v593
        %v685 = vunpack.c.h.b16 %v593
        %v686 = vunpack.c.l.b16 %v594
        %v687 = vunpack.c.l.b16 %v595
        %v688 = vunpack.c.h.b16 %v595
        %v689 = vunpack.c.l.b16 %v596
        %v690 = vunpack.c.l.b16 %v597
        %v691 = vunpack.c.h.b16 %v597
        %v692 = vunpack.c.l.b16 %v598
        %v693 = vunpack.c.l.b16 %v599
        %v694 = vunpack.c.h.b16 %v599
        %v695 = vunpack.c.l.b16 %v600
        %v696 = vunpack.c.l.b16 %v601
        %v697 = vunpack.c.h.b16 %v601
        %v698 = vunpack.c.l.b16 %v602
        %v699 = vunpack.c.l.b16 %v603
        %v700 = vunpack.c.h.b16 %v603
        %v701 = vunpack.c.l.b16 %v604
        %v702 = vpack.c.b16 %v657, %v654
        %v703 = vpack.c.b16 %v658, %v655
        %v704 = vpack.c.b16 %v659, %v656
        %v705 = vpack.c.b16 %v663, %v660
        %v706 = vpack.c.b16 %v664, %v661
        %v707 = vpack.c.b16 %v665, %v662
        %v708 = vpack.c.b16 %v669, %v666
        %v709 = vpack.c.b16 %v670, %v667
        %v710 = vpack.c.b16 %v671, %v668
        %v711 = vpack.c.b16 %v675, %v672
        %v712 = vpack.c.b16 %v676, %v673
        %v713 = vpack.c.b16 %v677, %v674
        %v714 = vpack.c.b16 %v681, %v678
        %v715 = vpack.c.b16 %v682, %v679
        %v716 = vpack.c.b16 %v683, %v680
        %v717 = vpack.c.b16 %v687, %v684
        %v718 = vpack.c.b16 %v688, %v685
        %v719 = vpack.c.b16 %v689, %v686
        %v720 = vpack.c.b16 %v693, %v690
        %v721 = vpack.c.b16 %v694, %v691
        %v722 = vpack.c.b16 %v695, %v692
        %v723 = vpack.c.b16 %v699, %v696
        %v724 = vpack.c.b16 %v700, %v697
        %v725 = vpack.c.b16 %v701, %v698
        %750 = vmatprep.subr.bf16.mxu0 %v703
        %751 = vmatpush1.bf16.msra.mxu0 %v702
        %752 = vmatprep.subr.bf16.mxu0 %v706
        %753 = vmatpush1.bf16.msra.mxu0 %v705
        %754 = vmatprep.subr.bf16.mxu0 %v709
        %755 = vmatpush1.bf16.msra.mxu0 %v708
        %756 = vmatprep.subr.bf16.mxu0 %v712
        %757 = vmatpush1.bf16.msra.mxu0 %v711
        %758 = vmatprep.subr.bf16.mxu0 %v715
        %759 = vmatpush1.bf16.msra.mxu0 %v714
        %760 = vmatprep.subr.bf16.mxu0 %v718
        %761 = vmatpush1.bf16.msra.mxu0 %v717
        %762 = vmatprep.subr.bf16.mxu0 %v721
        %763 = vmatpush1.bf16.msra.mxu0 %v720
        %764 = vmatprep.subr.bf16.mxu0 %v724
        %765 = vmatpush1.bf16.msra.mxu0 %v723
        %766 = vmatprep.subr.bf16.mxu0 0
        %767 = vmatpush1.bf16.msra.mxu0 0
        %768 = vmatprep.subr.bf16.mxu0 0
        %769 = vmatpush1.bf16.msra.mxu0 0
        %770 = vmatprep.subr.bf16.mxu0 0
        %771 = vmatpush1.bf16.msra.mxu0 0
        %772 = vmatprep.subr.bf16.mxu0 0
        %773 = vmatpush1.bf16.msra.mxu0 0
        %774 = vmatprep.subr.bf16.mxu0 0
        %775 = vmatpush1.bf16.msra.mxu0 0
        %776 = vmatprep.subr.bf16.mxu0 0
        %777 = vmatpush1.bf16.msra.mxu0 0
        %778 = vmatprep.subr.bf16.mxu0 0
        %779 = vmatpush1.bf16.msra.mxu0 0
        %780 = vmatprep.subr.bf16.mxu0 0
        %781 = vmatpush1.bf16.msra.mxu0 0
        %782 = vmatprep.mubr.bf16.mxu0 0
        %783 = vmatmul.mubr.bf16.gmra.mrb[0].mxu0 %v572
        %v784 = vpop.f32.mrb[0].mxu0
        %v785 = vadd.f32 %v610, %v784
        %v786 = vpop.f32.mrb[0].mxu0
        %v787 = vadd.f32 %v614, %v786
        %v788 = vpop.f32.mrb[0].mxu0
        %v789 = vpop.f32.mrb[0].mxu0
        %790 = vdwg.mxu0
        %791 = vmatprep.subr.bf16.mxu0 0
        %792 = vmatpush1.bf16.msra.mxu0 %v704
        %793 = vmatprep.subr.bf16.mxu0 0
        %794 = vmatpush1.bf16.msra.mxu0 %v707
        %795 = vmatprep.subr.bf16.mxu0 0
        %796 = vmatpush1.bf16.msra.mxu0 %v710
        %797 = vmatprep.subr.bf16.mxu0 0
        %798 = vmatpush1.bf16.msra.mxu0 %v713
        %799 = vmatprep.subr.bf16.mxu0 0
        %800 = vmatpush1.bf16.msra.mxu0 %v716
        %801 = vmatprep.subr.bf16.mxu0 0
        %802 = vmatpush1.bf16.msra.mxu0 %v719
        %803 = vmatprep.subr.bf16.mxu0 0
        %804 = vmatpush1.bf16.msra.mxu0 %v722
        %805 = vmatprep.subr.bf16.mxu0 0
        %806 = vmatpush1.bf16.msra.mxu0 %v725
        %807 = vmatprep.subr.bf16.mxu0 0
        %808 = vmatpush1.bf16.msra.mxu0 0
        %809 = vmatprep.subr.bf16.mxu0 0
        %810 = vmatpush1.bf16.msra.mxu0 0
        %811 = vmatprep.subr.bf16.mxu0 0
        %812 = vmatpush1.bf16.msra.mxu0 0
        %813 = vmatprep.subr.bf16.mxu0 0
        %814 = vmatpush1.bf16.msra.mxu0 0
        %815 = vmatprep.subr.bf16.mxu0 0
        %816 = vmatpush1.bf16.msra.mxu0 0
        %817 = vmatprep.subr.bf16.mxu0 0
        %818 = vmatpush1.bf16.msra.mxu0 0
        %819 = vmatprep.subr.bf16.mxu0 0
        %820 = vmatpush1.bf16.msra.mxu0 0
        %821 = vmatprep.subr.bf16.mxu0 0
        %822 = vmatpush1.bf16.msra.mxu0 0
        %823 = vmatprep.mubr.bf16.mxu0 0
        %824 = vmatmul.mubr.bf16.gmra.mrb[0].mxu0 %v572
        %v825 = vpop.f32.mrb[0].mxu0
        %v826 = vadd.f32 %v618, %v825
        %v827 = vpop.f32.mrb[0].mxu0
        %v828 = vpop.f32.mrb[0].mxu0
        %v829 = vpop.f32.mrb[0].mxu0
        %830 = vdwg.mxu0
        %v831 = vtanh.pop %v785
        %v832 = vtanh.pop %v787
        %v833 = vtanh.pop %v826
        %v834 = vmul.f32 %v831, 0.17677669
        %v835 = vpack.c.bf16 %v834, %v834
        %836 = vst [vmem:[#allocation2] sm:$0xf] %v835
        %v837 = vpack.c.bf16 %v832, %v832
        %838 = vst [vmem:[#allocation3] sm:$0xf] %v837
        %v839 = vpack.c.bf16 %v833, %v833
        %840 = vst [vmem:[#allocation4] sm:$0xf] %v839
        %v841 = vlaneseq
        %v842 = vshrl.u32 %v841, 7
        %v843 = vlaneseq
        %v844 = vand.u32 %v843, 127
        %v845 = vld [vmem:[#allocation2] sm:$0xf]
        %v846 = vld [vmem:[#allocation3] sm:$0xf]
        %v847 = vld [vmem:[#allocation4] sm:$0xf]
        %848 = vmatprep.subr.bf16.mxu0 0
        %849 = vmatpush1.bf16.xpose.msra.mxu0 %v846
        %850 = vmatprep.subr.bf16.mxu0 0
        %851 = vmatpush1.bf16.xpose.msra.mxu0 0
        %852 = vmatprep.subr.bf16.mxu0 0
        %853 = vmatpush1.bf16.xpose.msra.mxu0 0
        %854 = vmatprep.subr.bf16.mxu0 0
        %855 = vmatpush1.bf16.xpose.msra.mxu0 0
        %856 = vmatprep.subr.bf16.mxu0 0
        %857 = vmatpush1.bf16.xpose.msra.mxu0 0
        %858 = vmatprep.subr.bf16.mxu0 0
        %859 = vmatpush1.bf16.xpose.msra.mxu0 0
        %860 = vmatprep.subr.bf16.mxu0 0
        %861 = vmatpush1.bf16.xpose.msra.mxu0 0
        %862 = vmatprep.subr.bf16.mxu0 0
        %863 = vmatpush1.bf16.xpose.msra.mxu0 0
        %864 = vmatprep.subr.bf16.mxu0 0
        %865 = vmatpush1.bf16.xpose.msra.mxu0 0
        %866 = vmatprep.subr.bf16.mxu0 0
        %867 = vmatpush1.bf16.xpose.msra.mxu0 0
        %868 = vmatprep.subr.bf16.mxu0 0
        %869 = vmatpush1.bf16.xpose.msra.mxu0 0
        %870 = vmatprep.subr.bf16.mxu0 0
        %871 = vmatpush1.bf16.xpose.msra.mxu0 0
        %872 = vmatprep.subr.bf16.mxu0 0
        %873 = vmatpush1.bf16.xpose.msra.mxu0 0
        %874 = vmatprep.subr.bf16.mxu0 0
        %875 = vmatpush1.bf16.xpose.msra.mxu0 0
        %876 = vmatprep.subr.bf16.mxu0 0
        %877 = vmatpush1.bf16.xpose.msra.mxu0 0
        %878 = vmatprep.subr.bf16.mxu0 0
        %879 = vmatpush1.bf16.xpose.msra.mxu0 0
        %880 = vmatprep.mubr.bf16.mxu0 0
        %881 = vmatmul.mubr.bf16.gmra.mrb[0].mxu0 %v845
        %v882 = vpop.f32.mrb[0].mxu0
        %v883 = vadd.f32 0.0, %v882
        %v884 = vpop.f32.mrb[0].mxu0
        %v885 = vpop.f32.mrb[0].mxu0
        %v886 = vpop.f32.mrb[0].mxu0
        %887 = vdwg.mxu0
        %v888 = vstv 0
        %v889 = vadd.s32 %v844, %v888
        %vm890 = vcmp.ge.s32.totalorder %v842, %v889
        %v891 = vmul.f32 %v883, 1.442695
        %v892 = vpow.pop %v891
        %v893 = vsel %vm890, %v892, 0.0
        %vm894 = vcmask 64512
        %v895 = vsel %vm894, %v893, 0.0
        %896 = vadd.xlane.f32.xlu0 %v895
        %v897 = vpop.xlane.xlu0 %896
        %v898 = vadd.f32 %v897, 0.0
        %v899 = vpack.c.bf16 %v893, %v893
        %v901 = vsel %vm894, %v899, 0
        %vm903 = vcmask 1043456
        %v905 = vsel %vm903, %v847, 0
        %907 = vmatprep.subr.bf16.mxu0 0
        %908 = vmatpush1.bf16.msra.mxu0 %v905
        %909 = vmatprep.subr.bf16.mxu0 0
        %910 = vmatpush1.bf16.msra.mxu0 0
        %911 = vmatprep.subr.bf16.mxu0 0
        %912 = vmatpush1.bf16.msra.mxu0 0
        %913 = vmatprep.subr.bf16.mxu0 0
        %914 = vmatpush1.bf16.msra.mxu0 0
        %915 = vmatprep.subr.bf16.mxu0 0
        %916 = vmatpush1.bf16.msra.mxu0 0
        %917 = vmatprep.subr.bf16.mxu0 0
        %918 = vmatpush1.bf16.msra.mxu0 0
        %919 = vmatprep.subr.bf16.mxu0 0
        %920 = vmatpush1.bf16.msra.mxu0 0
        %921 = vmatprep.subr.bf16.mxu0 0
        %922 = vmatpush1.bf16.msra.mxu0 0
        %923 = vmatprep.subr.bf16.mxu0 0
        %924 = vmatpush1.bf16.msra.mxu0 0
        %925 = vmatprep.subr.bf16.mxu0 0
        %926 = vmatpush1.bf16.msra.mxu0 0
        %927 = vmatprep.subr.bf16.mxu0 0
        %928 = vmatpush1.bf16.msra.mxu0 0
        %929 = vmatprep.subr.bf16.mxu0 0
        %930 = vmatpush1.bf16.msra.mxu0 0
        %931 = vmatprep.subr.bf16.mxu0 0
        %932 = vmatpush1.bf16.msra.mxu0 0
        %933 = vmatprep.subr.bf16.mxu0 0
        %934 = vmatpush1.bf16.msra.mxu0 0
        %935 = vmatprep.subr.bf16.mxu0 0
        %936 = vmatpush1.bf16.msra.mxu0 0
        %937 = vmatprep.subr.bf16.mxu0 0
        %938 = vmatpush1.bf16.msra.mxu0 0
        %939 = vmatprep.mubr.bf16.mxu0 0
        %940 = vmatmul.mubr.bf16.gmra.mrb[0].mxu0 %v901
        %v941 = vpop.f32.mrb[0].mxu0
        %v942 = vadd.f32 0.0, %v941
        %v943 = vpop.f32.mrb[0].mxu0
        %v944 = vpop.f32.mrb[0].mxu0
        %v945 = vpop.f32.mrb[0].mxu0
        %946 = vdwg.mxu0
        %v947 = vrcp.pop %v898
        %v948 = vmul.f32 %v942, %v947
        %949 = vst [vmem:[#allocation6] sm:$0xff] %v948
        %v950 = vld [vmem:[#allocation6] sm:$0xff]
        %v951 = vpack.c.bf16 %v950, %v950
        %v952 = vld [vmem:[#allocation10] sm:$0xf]
        %v953 = vld [vmem:[#allocation10 + $0x4] sm:$0xf]
        %v954 = vld [vmem:[#allocation10 + $0x8] sm:$0xf]
        %v955 = vld [vmem:[#allocation10 + $0xc] sm:$0xf]
        %v956 = vld [vmem:[#allocation10 + $0x10] sm:$0xf]
        %v957 = vld [vmem:[#allocation10 + $0x14] sm:$0xf]
        %v958 = vld [vmem:[#allocation10 + $0x18] sm:$0xf]
        %v959 = vld [vmem:[#allocation10 + $0x1c] sm:$0xf]
        %v960 = vld [vmem:[#allocation10 + $0x20] sm:$0xf]
        %v961 = vld [vmem:[#allocation10 + $0x24] sm:$0xf]
        %v962 = vld [vmem:[#allocation10 + $0x28] sm:$0xf]
        %v963 = vld [vmem:[#allocation10 + $0x2c] sm:$0xf]
        %v964 = vld [vmem:[#allocation10 + $0x30] sm:$0xf]
        %v965 = vld [vmem:[#allocation10 + $0x34] sm:$0xf]
        %v966 = vld [vmem:[#allocation10 + $0x38] sm:$0xf]
        %v967 = vld [vmem:[#allocation10 + $0x3c] sm:$0xf]
        %v968 = vld [vmem:[%s7] sm:$0x1]
        %v970 = vlaneseq
        %v971 = vshrl.u32 %v970, 7
        %v972 = vsub.s32 0, %v971
        %v973 = vrot.slane %v968, %v972
        %v991 = vunpack.c.l.b16 %v952
        %v992 = vunpack.c.l.b16 %v953
        %v993 = vunpack.c.l.b16 %v954
        %v994 = vunpack.c.l.b16 %v955
        %v995 = vunpack.c.l.b16 %v956
        %v996 = vunpack.c.l.b16 %v957
        %v997 = vunpack.c.l.b16 %v958
        %v998 = vunpack.c.l.b16 %v959
        %v999 = vunpack.c.l.b16 %v960
        %v1000 = vunpack.c.l.b16 %v961
        %v1001 = vunpack.c.l.b16 %v962
        %v1002 = vunpack.c.l.b16 %v963
        %v1003 = vunpack.c.l.b16 %v964
        %v1004 = vunpack.c.l.b16 %v965
        %v1005 = vunpack.c.l.b16 %v966
        %v1006 = vunpack.c.l.b16 %v967
        %v1007 = vpack.c.b16 %v992, %v991
        %v1008 = vpack.c.b16 %v994, %v993
        %v1009 = vpack.c.b16 %v996, %v995
        %v1010 = vpack.c.b16 %v998, %v997
        %v1011 = vpack.c.b16 %v1000, %v999
        %v1012 = vpack.c.b16 %v1002, %v1001
        %v1013 = vpack.c.b16 %v1004, %v1003
        %v1014 = vpack.c.b16 %v1006, %v1005
        %1023 = vmatprep.subr.bf16.mxu0 0
        %1024 = vmatpush1.bf16.msra.mxu0 %v1007
        %1025 = vmatprep.subr.bf16.mxu0 0
        %1026 = vmatpush1.bf16.msra.mxu0 %v1008
        %1027 = vmatprep.subr.bf16.mxu0 0
        %1028 = vmatpush1.bf16.msra.mxu0 %v1009
        %1029 = vmatprep.subr.bf16.mxu0 0
        %1030 = vmatpush1.bf16.msra.mxu0 %v1010
        %1031 = vmatprep.subr.bf16.mxu0 0
        %1032 = vmatpush1.bf16.msra.mxu0 %v1011
        %1033 = vmatprep.subr.bf16.mxu0 0
        %1034 = vmatpush1.bf16.msra.mxu0 %v1012
        %1035 = vmatprep.subr.bf16.mxu0 0
        %1036 = vmatpush1.bf16.msra.mxu0 %v1013
        %1037 = vmatprep.subr.bf16.mxu0 0
        %1038 = vmatpush1.bf16.msra.mxu0 %v1014
        %1039 = vmatprep.subr.bf16.mxu0 0
        %1040 = vmatpush1.bf16.msra.mxu0 0
        %1041 = vmatprep.subr.bf16.mxu0 0
        %1042 = vmatpush1.bf16.msra.mxu0 0
        %1043 = vmatprep.subr.bf16.mxu0 0
        %1044 = vmatpush1.bf16.msra.mxu0 0
        %1045 = vmatprep.subr.bf16.mxu0 0
        %1046 = vmatpush1.bf16.msra.mxu0 0
        %1047 = vmatprep.subr.bf16.mxu0 0
        %1048 = vmatpush1.bf16.msra.mxu0 0
        %1049 = vmatprep.subr.bf16.mxu0 0
        %1050 = vmatpush1.bf16.msra.mxu0 0
        %1051 = vmatprep.subr.bf16.mxu0 0
        %1052 = vmatpush1.bf16.msra.mxu0 0
        %1053 = vmatprep.subr.bf16.mxu0 0
        %1054 = vmatpush1.bf16.msra.mxu0 0
        %1055 = vmatprep.mubr.bf16.mxu0 0
        %1056 = vmatmul.mubr.bf16.gmra.mrb[0].mxu0 %v951
        %v1057 = vpop.f32.mrb[0].mxu0
        %v1058 = vadd.f32 %v973, %v1057
        %v1059 = vpop.f32.mrb[0].mxu0
        %v1060 = vpop.f32.mrb[0].mxu0
        %v1061 = vpop.f32.mrb[0].mxu0
        %1062 = vdwg.mxu0
        %v1063 = vtanh.pop %v1058
        %v1064 = vld [vmem:[#allocation5] sm:$0xff]
        %v1065 = vadd.f32 %v1063, %v1064
        %v1066 = vld [vmem:[%s8] sm:$0x1]
        %v1067 = vld [vmem:[%s9] sm:$0x1]
        %1068 = vadd.xlane.f32.xlu0 %v1065
        %v1069 = vpop.xlane.xlu0 %1068
        %v1070 = vmul.f32 %v1069, 0.03125
        %v1071 = vmul.f32 %v1065, %v1065
        %1072 = vadd.xlane.f32.xlu0 %v1071
        %v1073 = vpop.xlane.xlu0 %1072
        %v1074 = vmul.f32 %v1073, 0.03125
        %v1075 = vmul.f32 %v1070, %v1070
        %v1076 = vsub.f32 %v1074, %v1075
        %v1077 = vsub.f32 %v1065, %v1070
        %v1078 = vadd.f32 %v1076, 1e-05
        %v1079 = vrsqrt.pop %v1078
        %v1080 = vmul.f32 %v1077, %v1079
        %v1082 = vlaneseq
        %v1083 = vshrl.u32 %v1082, 7
        %v1084 = vsub.s32 0, %v1083
        %v1085 = vrot.slane %v1066, %v1084
        %v1087 = vmul.f32 %v1080, %v1085
        %v1089 = vlaneseq
        %v1090 = vshrl.u32 %v1089, 7
        %v1091 = vsub.s32 0, %v1090
        %v1092 = vrot.slane %v1067, %v1091
        %v1094 = vadd.f32 %v1087, %v1092
        %v1095 = vpack.c.bf16 %v1094, %v1094
        %v1096 = vld [vmem:[#allocation12] sm:$0xf]
        %v1097 = vld [vmem:[#allocation12 + $0x4] sm:$0xf]
        %v1098 = vld [vmem:[#allocation12 + $0x8] sm:$0xf]
        %v1099 = vld [vmem:[#allocation12 + $0xc] sm:$0xf]
        %v1100 = vld [vmem:[#allocation12 + $0x10] sm:$0xf]
        %v1101 = vld [vmem:[#allocation12 + $0x14] sm:$0xf]
        %v1102 = vld [vmem:[#allocation12 + $0x18] sm:$0xf]
        %v1103 = vld [vmem:[#allocation12 + $0x1c] sm:$0xf]
        %v1104 = vld [vmem:[#allocation12 + $0x20] sm:$0xf]
        %v1105 = vld [vmem:[#allocation12 + $0x24] sm:$0xf]
        %v1106 = vld [vmem:[#allocation12 + $0x28] sm:$0xf]
        %v1107 = vld [vmem:[#allocation12 + $0x2c] sm:$0xf]
        %v1108 = vld [vmem:[#allocation12 + $0x30] sm:$0xf]
        %v1109 = vld [vmem:[#allocation12 + $0x34] sm:$0xf]
        %v1110 = vld [vmem:[#allocation12 + $0x38] sm:$0xf]
        %v1111 = vld [vmem:[#allocation12 + $0x3c] sm:$0xf]
        %v1112 = vld [vmem:[%s11] sm:$0x1]
        %v1114 = vlaneseq
        %v1115 = vshrl.u32 %v1114, 7
        %v1116 = vsub.s32 0, %v1115
        %v1117 = vrot.slane %v1112, %v1116
        %v1135 = vunpack.c.l.b16 %v1096
        %v1136 = vunpack.c.l.b16 %v1097
        %v1137 = vunpack.c.l.b16 %v1098
        %v1138 = vunpack.c.l.b16 %v1099
        %v1139 = vunpack.c.l.b16 %v1100
        %v1140 = vunpack.c.l.b16 %v1101
        %v1141 = vunpack.c.l.b16 %v1102
        %v1142 = vunpack.c.l.b16 %v1103
        %v1143 = vunpack.c.l.b16 %v1104
        %v1144 = vunpack.c.l.b16 %v1105
        %v1145 = vunpack.c.l.b16 %v1106
        %v1146 = vunpack.c.l.b16 %v1107
        %v1147 = vunpack.c.l.b16 %v1108
        %v1148 = vunpack.c.l.b16 %v1109
        %v1149 = vunpack.c.l.b16 %v1110
        %v1150 = vunpack.c.l.b16 %v1111
        %v1151 = vpack.c.b16 %v1136, %v1135
        %v1152 = vpack.c.b16 %v1138, %v1137
        %v1153 = vpack.c.b16 %v1140, %v1139
        %v1154 = vpack.c.b16 %v1142, %v1141
        %v1155 = vpack.c.b16 %v1144, %v1143
        %v1156 = vpack.c.b16 %v1146, %v1145
        %v1157 = vpack.c.b16 %v1148, %v1147
        %v1158 = vpack.c.b16 %v1150, %v1149
        %1167 = vmatprep.subr.bf16.mxu0 0
        %1168 = vmatpush1.bf16.msra.mxu0 %v1151
        %1169 = vmatprep.subr.bf16.mxu0 0
        %1170 = vmatpush1.bf16.msra.mxu0 %v1152
        %1171 = vmatprep.subr.bf16.mxu0 0
        %1172 = vmatpush1.bf16.msra.mxu0 %v1153
        %1173 = vmatprep.subr.bf16.mxu0 0
        %1174 = vmatpush1.bf16.msra.mxu0 %v1154
        %1175 = vmatprep.subr.bf16.mxu0 0
        %1176 = vmatpush1.bf16.msra.mxu0 %v1155
        %1177 = vmatprep.subr.bf16.mxu0 0
        %1178 = vmatpush1.bf16.msra.mxu0 %v1156
        %1179 = vmatprep.subr.bf16.mxu0 0
        %1180 = vmatpush1.bf16.msra.mxu0 %v1157
        %1181 = vmatprep.subr.bf16.mxu0 0
        %1182 = vmatpush1.bf16.msra.mxu0 %v1158
        %1183 = vmatprep.subr.bf16.mxu0 0
        %1184 = vmatpush1.bf16.msra.mxu0 0
        %1185 = vmatprep.subr.bf16.mxu0 0
        %1186 = vmatpush1.bf16.msra.mxu0 0
        %1187 = vmatprep.subr.bf16.mxu0 0
        %1188 = vmatpush1.bf16.msra.mxu0 0
        %1189 = vmatprep.subr.bf16.mxu0 0
        %1190 = vmatpush1.bf16.msra.mxu0 0
        %1191 = vmatprep.subr.bf16.mxu0 0
        %1192 = vmatpush1.bf16.msra.mxu0 0
        %1193 = vmatprep.subr.bf16.mxu0 0
        %1194 = vmatpush1.bf16.msra.mxu0 0
        %1195 = vmatprep.subr.bf16.mxu0 0
        %1196 = vmatpush1.bf16.msra.mxu0 0
        %1197 = vmatprep.subr.bf16.mxu0 0
        %1198 = vmatpush1.bf16.msra.mxu0 0
        %1199 = vmatprep.mubr.bf16.mxu0 0
        %1200 = vmatmul.mubr.bf16.gmra.mrb[0].mxu0 %v1095
        %v1201 = vpop.f32.mrb[0].mxu0
        %v1202 = vadd.f32 %v1117, %v1201
        %v1203 = vpop.f32.mrb[0].mxu0
        %v1204 = vpop.f32.mrb[0].mxu0
        %v1205 = vpop.f32.mrb[0].mxu0
        %1206 = vdwg.mxu0
        %v1207 = vtanh.pop %v1202
        %v1208 = vadd.f32 %v1207, %v1094
        %v1209 = vld [vmem:[%s12] sm:$0x1]
        %v1210 = vld [vmem:[%s13] sm:$0x1]
        %1211 = vadd.xlane.f32.xlu0 %v1208
        %v1212 = vpop.xlane.xlu0 %1211
        %v1213 = vmul.f32 %v1212, 0.03125
        %v1214 = vmul.f32 %v1208, %v1208
        %1215 = vadd.xlane.f32.xlu0 %v1214
        %v1216 = vpop.xlane.xlu0 %1215
        %v1217 = vmul.f32 %v1216, 0.03125
        %v1218 = vmul.f32 %v1213, %v1213
        %v1219 = vsub.f32 %v1217, %v1218
        %v1220 = vsub.f32 %v1208, %v1213
        %v1221 = vadd.f32 %v1219, 1e-05
        %v1222 = vrsqrt.pop %v1221
        %v1223 = vmul.f32 %v1220, %v1222
        %v1225 = vlaneseq
        %v1226 = vshrl.u32 %v1225, 7
        %v1227 = vsub.s32 0, %v1226
        %v1228 = vrot.slane %v1209, %v1227
        %v1230 = vmul.f32 %v1223, %v1228
        %v1232 = vlaneseq
        %v1233 = vshrl.u32 %v1232, 7
        %v1234 = vsub.s32 0, %v1233
        %v1235 = vrot.slane %v1210, %v1234
        %v1237 = vadd.f32 %v1230, %v1235
        %1238 = vst [vmem:[%s502] sm:$0xff] %v1237
        %s1239 = sand.u32 %s337, 1
        %s1240 = scalar_lea.sflag [#allocation9], %s1239
        %s1241 = sand.u32 %s337, 1
        %s1242 = smul.addr %s1241, 8
        %s1243 = scalar_lea.vmem [#allocation13], %s1242
        // Predicated region
        $region89: #{_forward.1} parent=75 // pred_check
          %p1244 = pneg %p347
        $region90: #{_forward.1} parent=75 // pred_check_branch
          %1246 = sbr.rel (%p1244) target = $region92
        $region91: #{_forward.1} parent=75 // pred_region
          %s1248 = ssub.s32 128, 128
          %1249 = vsyncadd %s1240, %s1248
          %s1250 = smul.addr %s30, 128
          %s1251 = scalar_lea.hbm %s14, %s1250
          %s1253 = sshll.u32 %s1243, 4
          %s1254 = int_to_ptr.vmem [resolvable:$true] %s1253
          %1256 = dma.vmem_to_hbm [thread:$0]  %s1254, 128, %s1251, %s1240
        $region92: #{_forward.1} parent=75 // pred_fallthru
          _
      $region76: #{_forward.1} parent=5 // pred_fallthru
        _
      %p1257 = scmp.le.s32.totalorder 2, %s25
      // Predicated region
      $region93: #{_forward.1} parent=5 // pred_check
        %p1258 = pneg %p1257
      $region94: #{_forward.1} parent=5 // pred_check_branch
        %1260 = sbr.rel (%p1258) target = $region96
      $region95: #{_forward.1} parent=5 // pred_region
        %s1261 = ssub.s32 %s25, 2
        // Predicated region
        $region97: #{_forward.1} parent=95 // pred_check
          %p1262 = pneg %p353
        $region98: #{_forward.1} parent=95 // pred_check_branch
          %1264 = sbr.rel (%p1262) target = $region100
        $region99: #{_forward.1} parent=95 // pred_region
          %s1265 = sand.u32 %s338, 1
          %s1266 = scalar_lea.sflag [#allocation9], %s1265
          %s1267 = sand.u32 %s338, 1
          %s1268 = smul.addr %s1267, 8
          %s1269 = scalar_lea.vmem [#allocation13], %s1268
          %1270 = dma.done %s1266, 128
        $region100: #{_forward.1} parent=95 // pred_fallthru
          _
      $region96: #{_forward.1} parent=5 // pred_fallthru
        _
    $region6: #{_forward.1} parent=1 // loop_footer
      %s29 = sadd.s32 1, %s25
    $region7: #{_forward.1} parent=1 // loop_footer_branch
      %24 = sbr.rel target = $region3
    $region8: #{_forward.1} parent=1 // loop_exit
      _
    %1271 = vsyncpa [#allocation8], 1
    %s1272 = scalar_lea.sflag [#allocation8], 1
    %1273 = vsyncpa %s1272, 1
    %1274 = vsyncpa [#allocation11], 1
    %1275 = vsyncpa [#allocation9], 1
    %s1276 = scalar_lea.sflag [#allocation9], 1
    %1277 = vsyncpa %s1276, 1

</llo_original>
